<compile_context>
chip_gen: v6e
topology: v6e:2x2x1
jax: 0.10.0
libtpu: 0.0.40
codegen_flags: <defaults>
</compile_context>

<pallas_src>
import jax
import jax.numpy as jnp
from jax.experimental import pallas as pl
from jax.experimental.pallas import tpu as pltpu

NEG_SLOPE = 0.01                      # PyTorch nn.LeakyReLU default negative_slope
_HIDDEN = (256, 64, 20, 64, 256)      # encoder/decoder widths from the module


def _leaky_relu(x):
    return jnp.where(x > 0, x, NEG_SLOPE * x)


def ae_kernel(x_ref,
              w1q, s1, b1, w2, b2, w3, b3,     # encoder (w1q: int8, s1: f32 scale)
              w4, b4, w5, b5, w6q, s6, b6,     # decoder (w6q: int8, s6: f32 scale)
              o_ref):
    """Fused AE forward: 6 MXU matmuls + LeakyReLU / Sigmoid.

    int8 weights are widened to bf16 (lossless) on the VPU; their per-channel
    scale multiplies the f32 matmul result. Middle-layer weights are bf16,
    biases f32. All matmuls accumulate in f32 (preferred_element_type)."""
    bf16, f32 = jnp.bfloat16, jnp.float32
    x = x_ref[...].astype(bf16)
    # encoder
    h = _leaky_relu(
        jnp.dot(x, w1q[...].astype(bf16), preferred_element_type=f32) * s1[...] + b1[...])
    h = _leaky_relu(jnp.dot(h.astype(bf16), w2[...], preferred_element_type=f32) + b2[...])
    z = _leaky_relu(jnp.dot(h.astype(bf16), w3[...], preferred_element_type=f32) + b3[...])
    # decoder
    h = _leaky_relu(jnp.dot(z.astype(bf16), w4[...], preferred_element_type=f32) + b4[...])
    h = _leaky_relu(jnp.dot(h.astype(bf16), w5[...], preferred_element_type=f32) + b5[...])
    logits = (jnp.dot(h.astype(bf16), w6q[...].astype(bf16), preferred_element_type=f32)
              * s6[...] + b6[...])
    o_ref[...] = jax.nn.sigmoid(logits).astype(o_ref.dtype)


def _quantize_int8(w):
    """Symmetric per-output-channel int8 quantization of a (in, out) weight."""
    amax = jnp.max(jnp.abs(w), axis=0, keepdims=True)        # (1, out)
    scale = jnp.where(amax > 0, amax / 127.0, 1.0).astype(jnp.float32)
    q = jnp.clip(jnp.round(w / scale), -127, 127).astype(jnp.int8)
    return q, scale


def prepare_kernel_params(params):
    """[w1,b1,...,w6,b6] (w: (in,out) f32, b: (1,out) f32) -> kernel param list."""
    w1, b1, w2, b2, w3, b3, w4, b4, w5, b5, w6, b6 = params
    w1q, s1 = _quantize_int8(w1)          # big layers: int8 + per-channel scale
    w6q, s6 = _quantize_int8(w6)
    bf = lambda w: w.astype(jnp.bfloat16)  # tiny middle layers: bf16 is plenty
    return [w1q, s1, b1, bf(w2), b2, bf(w3), b3,
            bf(w4), b4, bf(w5), b5, w6q, s6, b6]


def ae_forward(x, kparams, *, out_dtype=jnp.bfloat16):
    """x: (B, in_channels) f32; kparams from prepare_kernel_params."""
    B, D = x.shape
    assert kparams[0].shape[0] == D and kparams[11].shape[1] == D

    # Batch tiling: single tile for small batches; otherwise <=512-row tiles
    # (keeps the MXU M dimension full, output lane-dense, and the worst-case
    # VMEM footprint within v7x's 64 MiB physical VMEM). Weight index_maps are
    # constant, so the ~1.7 MB of quantized weights are DMA'd once and reused
    # for every batch tile.
    if B <= 512:
        tile_m = B                        # block == full array dim -> no (8,128) issue
    else:
        tile_m = next((t for t in (512, 256, 128) if B % t == 0), None)
        if tile_m is None:
            raise ValueError("for B > 512, pad the batch to a multiple of 128")
    grid = (B // tile_m,)

    x_spec = pl.BlockSpec((tile_m, D), lambda i: (i, 0))
    out_spec = pl.BlockSpec((tile_m, D), lambda i: (i, 0))
    # Full-array blocks for every weight/scale/bias; Buffered(1) because the
    # constant index_map means the second pipeline buffer would never be used.
    param_specs = [pl.BlockSpec(p.shape, lambda i: (0, 0),
                                pipeline_mode=pl.Buffered(1))
                   for p in kparams]

    # Advisory cost estimate: lets XLA overlap the (dominant) weight DMA with
    # preceding ops on the repeated small-batch inference path.
    widths = (D,) + _HIDDEN + (D,)
    flops = 2 * B * sum(a * b for a, b in zip(widths[:-1], widths[1:]))
    param_bytes = sum(int(p.size) * p.dtype.itemsize for p in kparams)
    cost = pl.CostEstimate(
        flops=int(flops),
        transcendentals=int(B * D),  # sigmoid
        bytes_accessed=int(x.size * x.dtype.itemsize
                           + B * D * jnp.dtype(out_dtype).itemsize
                           + param_bytes),
    )

    return pl.pallas_call(
        ae_kernel,
        out_shape=jax.ShapeDtypeStruct((B, D), out_dtype),
        grid_spec=pltpu.PrefetchScalarGridSpec(
            num_scalar_prefetch=0,
            grid=grid,
            in_specs=[x_spec] + param_specs,
            out_specs=out_spec,
        ),
        compiler_params=pltpu.CompilerParams(
            # Megacore-split batch tiles only when there is more than one
            # (v7x has 2 TCs); a single-tile batch keeps "arbitrary" so the
            # weights aren't re-DMA'd per core for no gain.
            dimension_semantics=(("parallel",) if grid[0] > 1 else ("arbitrary",)),
            # Worst case at tile_m=512: x f32 2x6.6 MB + out bf16 2x3.3 MB +
            # single-buffered weights ~1.7 MB + in-kernel intermediates ~5 MB
            # ~= 26 MB. 48 MiB leaves headroom and fits v7x's 64 MiB physical
            # VMEM (ample on v5e/v6e's 128 MiB).
            vmem_limit_bytes=48 * 1024 * 1024,
        ),
        cost_estimate=cost,
    )(x, *kparams)


def init_params(key, in_channels):
    """Deterministic init mirroring nn.Linear defaults: U(-1/sqrt(fan_in), +)."""
    dims = [in_channels, *_HIDDEN, in_channels]
    params = []
    for i, (fan_in, fan_out) in enumerate(zip(dims[:-1], dims[1:])):
        kw, kb = jax.random.split(jax.random.fold_in(key, i))
        bound = 1.0 / (fan_in ** 0.5)
        w = jax.random.uniform(kw, (fan_in, fan_out), jnp.float32, -bound, bound)
        b = jax.random.uniform(kb, (1, fan_out), jnp.float32, -bound, bound)
        params += [w, b]
    return params


def ref_forward(x, kparams):
    """Pure-JAX reference matching the kernel's numerics (bf16 matmul inputs,
    f32 accumulation, int8 weights widened, post-matmul per-channel scale)."""
    bf16, f32 = jnp.bfloat16, jnp.float32
    (w1q, s1, b1, w2, b2, w3, b3, w4, b4, w5, b5, w6q, s6, b6) = kparams

    def lin(h, w, scale=None):
        y = h.astype(bf16).astype(f32) @ w.astype(bf16).astype(f32)
        return y * scale if scale is not None else y

    h = _leaky_relu(lin(x, w1q, s1) + b1)
    h = _leaky_relu(lin(h, w2) + b2)
    z = _leaky_relu(lin(h, w3) + b3)
    h = _leaky_relu(lin(z, w4) + b4)
    h = _leaky_relu(lin(h, w5) + b5)
    return jax.nn.sigmoid(lin(h, w6q, s6) + b6)


if __name__ == "__main__":
    key = jax.random.PRNGKey(0)
    in_channels = 200 * 16   # 3200, the module's default
    batch = 2

    params = init_params(key, in_channels)
    kparams = prepare_kernel_params(params)
    x = jax.random.uniform(jax.random.fold_in(key, 1234),
                           (batch, in_channels), jnp.float32)

    out = jax.block_until_ready(ae_forward(x, kparams))
    ref = ref_forward(x, kparams)

    assert out.shape == (batch, in_channels) and out.dtype == jnp.bfloat16
    # Post-sigmoid values are in [0,1]; tolerance covers bf16 output rounding
    # plus f32 summation-order differences. The int8 quantization itself is
    # shared by kernel and reference, so it does not enter the comparison.
    assert jnp.allclose(out.astype(jnp.float32), ref, atol=1e-2, rtol=1e-2), \
        "mismatch vs JAX reference"

    print("KERNEL_OK")
</pallas_src>

<mosaic_0001>
module attributes {stable_mosaic.version = 11 : i64} {
  func.func @ae_kernel(%arg0: i32, %arg1: memref<2x3200xf32, #tpu.memory_space<vmem>>, %arg2: memref<3200x256xi8, #tpu.memory_space<vmem>>, %arg3: memref<1x256xf32, #tpu.memory_space<vmem>>, %arg4: memref<1x256xf32, #tpu.memory_space<vmem>>, %arg5: memref<256x64xbf16, #tpu.memory_space<vmem>>, %arg6: memref<1x64xf32, #tpu.memory_space<vmem>>, %arg7: memref<64x20xbf16, #tpu.memory_space<vmem>>, %arg8: memref<1x20xf32, #tpu.memory_space<vmem>>, %arg9: memref<20x64xbf16, #tpu.memory_space<vmem>>, %arg10: memref<1x64xf32, #tpu.memory_space<vmem>>, %arg11: memref<64x256xbf16, #tpu.memory_space<vmem>>, %arg12: memref<1x256xf32, #tpu.memory_space<vmem>>, %arg13: memref<256x3200xi8, #tpu.memory_space<vmem>>, %arg14: memref<1x3200xf32, #tpu.memory_space<vmem>>, %arg15: memref<1x3200xf32, #tpu.memory_space<vmem>>, %arg16: memref<2x3200xbf16, #tpu.memory_space<vmem>>) attributes {dimension_semantics = [#tpu.dimension_semantics<arbitrary>], iteration_bounds = array<i64: 1>, scalar_prefetch = 0 : i64, scratch_operands = 0 : i64, tpu.core_type = #tpu.core_type<tc>, window_params = [{transform_indices = @transform_0, window_bounds = array<i64: 2, 3200>}, {pipeline_mode = #tpu.pipeline_mode<synchronous>, transform_indices = @transform_1, window_bounds = array<i64: 3200, 256>}, {pipeline_mode = #tpu.pipeline_mode<synchronous>, transform_indices = @transform_2, window_bounds = array<i64: 1, 256>}, {pipeline_mode = #tpu.pipeline_mode<synchronous>, transform_indices = @transform_3, window_bounds = array<i64: 1, 256>}, {pipeline_mode = #tpu.pipeline_mode<synchronous>, transform_indices = @transform_4, window_bounds = array<i64: 256, 64>}, {pipeline_mode = #tpu.pipeline_mode<synchronous>, transform_indices = @transform_5, window_bounds = array<i64: 1, 64>}, {pipeline_mode = #tpu.pipeline_mode<synchronous>, transform_indices = @transform_6, window_bounds = array<i64: 64, 20>}, {pipeline_mode = #tpu.pipeline_mode<synchronous>, transform_indices = @transform_7, window_bounds = array<i64: 1, 20>}, {pipeline_mode = #tpu.pipeline_mode<synchronous>, transform_indices = @transform_8, window_bounds = array<i64: 20, 64>}, {pipeline_mode = #tpu.pipeline_mode<synchronous>, transform_indices = @transform_9, window_bounds = array<i64: 1, 64>}, {pipeline_mode = #tpu.pipeline_mode<synchronous>, transform_indices = @transform_10, window_bounds = array<i64: 64, 256>}, {pipeline_mode = #tpu.pipeline_mode<synchronous>, transform_indices = @transform_11, window_bounds = array<i64: 1, 256>}, {pipeline_mode = #tpu.pipeline_mode<synchronous>, transform_indices = @transform_12, window_bounds = array<i64: 256, 3200>}, {pipeline_mode = #tpu.pipeline_mode<synchronous>, transform_indices = @transform_13, window_bounds = array<i64: 1, 3200>}, {pipeline_mode = #tpu.pipeline_mode<synchronous>, transform_indices = @transform_14, window_bounds = array<i64: 1, 3200>}, {transform_indices = @transform_15, window_bounds = array<i64: 2, 3200>}]} {
    %c0 = arith.constant 0 : index
    %c0_0 = arith.constant 0 : index
    %0 = vector.load %arg1[%c0, %c0_0] : memref<2x3200xf32, #tpu.memory_space<vmem>>, vector<2x3200xf32>
    %1 = arith.truncf %0 : vector<2x3200xf32> to vector<2x3200xbf16>
    %c0_1 = arith.constant 0 : index
    %c0_2 = arith.constant 0 : index
    %2 = vector.load %arg2[%c0_1, %c0_2] : memref<3200x256xi8, #tpu.memory_space<vmem>>, vector<3200x256xi8>
    %3 = arith.sitofp %2 : vector<3200x256xi8> to vector<3200x256xbf16>
    %cst = arith.constant dense<0.000000e+00> : vector<2x256xf32>
    %4 = tpu.matmul %1, %3, %cst {dimension_numbers = #tpu.dot_dimension_numbers<[1], [0], [0], [1], [0, 0, 1, 1], [], []>} : vector<2x3200xbf16>, vector<3200x256xbf16>, vector<2x256xf32> -> vector<2x256xf32>
    %c0_3 = arith.constant 0 : index
    %c0_4 = arith.constant 0 : index
    %5 = vector.load %arg3[%c0_3, %c0_4] : memref<1x256xf32, #tpu.memory_space<vmem>>, vector<1x256xf32>
    %6 = vector.broadcast %5 : vector<1x256xf32> to vector<2x256xf32>
    %7 = arith.mulf %4, %6 : vector<2x256xf32>
    %c0_5 = arith.constant 0 : index
    %c0_6 = arith.constant 0 : index
    %8 = vector.load %arg4[%c0_5, %c0_6] : memref<1x256xf32, #tpu.memory_space<vmem>>, vector<1x256xf32>
    %9 = vector.broadcast %8 : vector<1x256xf32> to vector<2x256xf32>
    %10 = arith.addf %7, %9 : vector<2x256xf32>
    %cst_7 = arith.constant 0.000000e+00 : f32
    %11 = vector.broadcast %cst_7 : f32 to vector<2x256xf32>
    %12 = arith.cmpf ogt, %10, %11 : vector<2x256xf32>
    %cst_8 = arith.constant 0.00999999977 : f32
    %13 = vector.broadcast %cst_8 : f32 to vector<2x256xf32>
    %14 = arith.mulf %13, %10 : vector<2x256xf32>
    %15 = arith.select %12, %10, %14 : vector<2x256xi1>, vector<2x256xf32>
    %16 = arith.truncf %15 : vector<2x256xf32> to vector<2x256xbf16>
    %c0_9 = arith.constant 0 : index
    %c0_10 = arith.constant 0 : index
    %17 = vector.load %arg5[%c0_9, %c0_10] : memref<256x64xbf16, #tpu.memory_space<vmem>>, vector<256x64xbf16>
    %cst_11 = arith.constant dense<0.000000e+00> : vector<2x64xf32>
    %18 = tpu.matmul %16, %17, %cst_11 {dimension_numbers = #tpu.dot_dimension_numbers<[1], [0], [0], [1], [0, 0, 1, 1], [], []>} : vector<2x256xbf16>, vector<256x64xbf16>, vector<2x64xf32> -> vector<2x64xf32>
    %c0_12 = arith.constant 0 : index
    %c0_13 = arith.constant 0 : index
    %19 = vector.load %arg6[%c0_12, %c0_13] : memref<1x64xf32, #tpu.memory_space<vmem>>, vector<1x64xf32>
    %20 = vector.broadcast %19 : vector<1x64xf32> to vector<2x64xf32>
    %21 = arith.addf %18, %20 : vector<2x64xf32>
    %cst_14 = arith.constant 0.000000e+00 : f32
    %22 = vector.broadcast %cst_14 : f32 to vector<2x64xf32>
    %23 = arith.cmpf ogt, %21, %22 : vector<2x64xf32>
    %cst_15 = arith.constant 0.00999999977 : f32
    %24 = vector.broadcast %cst_15 : f32 to vector<2x64xf32>
    %25 = arith.mulf %24, %21 : vector<2x64xf32>
    %26 = arith.select %23, %21, %25 : vector<2x64xi1>, vector<2x64xf32>
    %27 = arith.truncf %26 : vector<2x64xf32> to vector<2x64xbf16>
    %c0_16 = arith.constant 0 : index
    %c0_17 = arith.constant 0 : index
    %28 = vector.load %arg7[%c0_16, %c0_17] : memref<64x20xbf16, #tpu.memory_space<vmem>>, vector<64x20xbf16>
    %cst_18 = arith.constant dense<0.000000e+00> : vector<2x20xf32>
    %29 = tpu.matmul %27, %28, %cst_18 {dimension_numbers = #tpu.dot_dimension_numbers<[1], [0], [0], [1], [0, 0, 1, 1], [], []>} : vector<2x64xbf16>, vector<64x20xbf16>, vector<2x20xf32> -> vector<2x20xf32>
    %c0_19 = arith.constant 0 : index
    %c0_20 = arith.constant 0 : index
    %30 = vector.load %arg8[%c0_19, %c0_20] : memref<1x20xf32, #tpu.memory_space<vmem>>, vector<1x20xf32>
    %31 = vector.broadcast %30 : vector<1x20xf32> to vector<2x20xf32>
    %32 = arith.addf %29, %31 : vector<2x20xf32>
    %cst_21 = arith.constant 0.000000e+00 : f32
    %33 = vector.broadcast %cst_21 : f32 to vector<2x20xf32>
    %34 = arith.cmpf ogt, %32, %33 : vector<2x20xf32>
    %cst_22 = arith.constant 0.00999999977 : f32
    %35 = vector.broadcast %cst_22 : f32 to vector<2x20xf32>
    %36 = arith.mulf %35, %32 : vector<2x20xf32>
    %37 = arith.select %34, %32, %36 : vector<2x20xi1>, vector<2x20xf32>
    %38 = arith.truncf %37 : vector<2x20xf32> to vector<2x20xbf16>
    %c0_23 = arith.constant 0 : index
    %c0_24 = arith.constant 0 : index
    %39 = vector.load %arg9[%c0_23, %c0_24] : memref<20x64xbf16, #tpu.memory_space<vmem>>, vector<20x64xbf16>
    %cst_25 = arith.constant dense<0.000000e+00> : vector<2x64xf32>
    %40 = tpu.matmul %38, %39, %cst_25 {dimension_numbers = #tpu.dot_dimension_numbers<[1], [0], [0], [1], [0, 0, 1, 1], [], []>} : vector<2x20xbf16>, vector<20x64xbf16>, vector<2x64xf32> -> vector<2x64xf32>
    %c0_26 = arith.constant 0 : index
    %c0_27 = arith.constant 0 : index
    %41 = vector.load %arg10[%c0_26, %c0_27] : memref<1x64xf32, #tpu.memory_space<vmem>>, vector<1x64xf32>
    %42 = vector.broadcast %41 : vector<1x64xf32> to vector<2x64xf32>
    %43 = arith.addf %40, %42 : vector<2x64xf32>
    %cst_28 = arith.constant 0.000000e+00 : f32
    %44 = vector.broadcast %cst_28 : f32 to vector<2x64xf32>
    %45 = arith.cmpf ogt, %43, %44 : vector<2x64xf32>
    %cst_29 = arith.constant 0.00999999977 : f32
    %46 = vector.broadcast %cst_29 : f32 to vector<2x64xf32>
    %47 = arith.mulf %46, %43 : vector<2x64xf32>
    %48 = arith.select %45, %43, %47 : vector<2x64xi1>, vector<2x64xf32>
    %49 = arith.truncf %48 : vector<2x64xf32> to vector<2x64xbf16>
    %c0_30 = arith.constant 0 : index
    %c0_31 = arith.constant 0 : index
    %50 = vector.load %arg11[%c0_30, %c0_31] : memref<64x256xbf16, #tpu.memory_space<vmem>>, vector<64x256xbf16>
    %cst_32 = arith.constant dense<0.000000e+00> : vector<2x256xf32>
    %51 = tpu.matmul %49, %50, %cst_32 {dimension_numbers = #tpu.dot_dimension_numbers<[1], [0], [0], [1], [0, 0, 1, 1], [], []>} : vector<2x64xbf16>, vector<64x256xbf16>, vector<2x256xf32> -> vector<2x256xf32>
    %c0_33 = arith.constant 0 : index
    %c0_34 = arith.constant 0 : index
    %52 = vector.load %arg12[%c0_33, %c0_34] : memref<1x256xf32, #tpu.memory_space<vmem>>, vector<1x256xf32>
    %53 = vector.broadcast %52 : vector<1x256xf32> to vector<2x256xf32>
    %54 = arith.addf %51, %53 : vector<2x256xf32>
    %cst_35 = arith.constant 0.000000e+00 : f32
    %55 = vector.broadcast %cst_35 : f32 to vector<2x256xf32>
    %56 = arith.cmpf ogt, %54, %55 : vector<2x256xf32>
    %cst_36 = arith.constant 0.00999999977 : f32
    %57 = vector.broadcast %cst_36 : f32 to vector<2x256xf32>
    %58 = arith.mulf %57, %54 : vector<2x256xf32>
    %59 = arith.select %56, %54, %58 : vector<2x256xi1>, vector<2x256xf32>
    %60 = arith.truncf %59 : vector<2x256xf32> to vector<2x256xbf16>
    %c0_37 = arith.constant 0 : index
    %c0_38 = arith.constant 0 : index
    %61 = vector.load %arg13[%c0_37, %c0_38] : memref<256x3200xi8, #tpu.memory_space<vmem>>, vector<256x3200xi8>
    %62 = arith.sitofp %61 : vector<256x3200xi8> to vector<256x3200xbf16>
    %cst_39 = arith.constant dense<0.000000e+00> : vector<2x3200xf32>
    %63 = tpu.matmul %60, %62, %cst_39 {dimension_numbers = #tpu.dot_dimension_numbers<[1], [0], [0], [1], [0, 0, 1, 1], [], []>} : vector<2x256xbf16>, vector<256x3200xbf16>, vector<2x3200xf32> -> vector<2x3200xf32>
    %c0_40 = arith.constant 0 : index
    %c0_41 = arith.constant 0 : index
    %64 = vector.load %arg14[%c0_40, %c0_41] : memref<1x3200xf32, #tpu.memory_space<vmem>>, vector<1x3200xf32>
    %65 = vector.broadcast %64 : vector<1x3200xf32> to vector<2x3200xf32>
    %66 = arith.mulf %63, %65 : vector<2x3200xf32>
    %c0_42 = arith.constant 0 : index
    %c0_43 = arith.constant 0 : index
    %67 = vector.load %arg15[%c0_42, %c0_43] : memref<1x3200xf32, #tpu.memory_space<vmem>>, vector<1x3200xf32>
    %68 = vector.broadcast %67 : vector<1x3200xf32> to vector<2x3200xf32>
    %69 = arith.addf %66, %68 : vector<2x3200xf32>
    %70 = arith.negf %69 : vector<2x3200xf32>
    %71 = math.exp %70 : vector<2x3200xf32>
    %cst_44 = arith.constant 1.000000e+00 : f32
    %72 = vector.broadcast %cst_44 : f32 to vector<2x3200xf32>
    %73 = arith.addf %72, %71 : vector<2x3200xf32>
    %74 = arith.divf %72, %73 : vector<2x3200xf32>
    %75 = arith.truncf %74 : vector<2x3200xf32> to vector<2x3200xbf16>
    %c0_45 = arith.constant 0 : index
    %c0_46 = arith.constant 0 : index
    %76 = vector.load %arg16[%c0_45, %c0_46] : memref<2x3200xbf16, #tpu.memory_space<vmem>>, vector<2x3200xbf16>
    tpu.vector_store %arg16[%c0_45, %c0_46], %75 {strides = array<i32>} : memref<2x3200xbf16, #tpu.memory_space<vmem>>, vector<2x3200xbf16>,
    return
  }
  func.func @transform_0(%arg0: i32) -> (i32, i32) {
    %c0_i32 = arith.constant 0 : i32
    %c0_i32_0 = arith.constant 0 : i32
    return %arg0, %c0_i32 : i32, i32
  }
  func.func @transform_1(%arg0: i32) -> (i32, i32) {
    %c0_i32 = arith.constant 0 : i32
    %c0_i32_0 = arith.constant 0 : i32
    %c0_i32_1 = arith.constant 0 : i32
    return %c0_i32, %c0_i32_0 : i32, i32
  }
  func.func @transform_2(%arg0: i32) -> (i32, i32) {
    %c0_i32 = arith.constant 0 : i32
    %c0_i32_0 = arith.constant 0 : i32
    %c0_i32_1 = arith.constant 0 : i32
    return %c0_i32, %c0_i32_0 : i32, i32
  }
  func.func @transform_3(%arg0: i32) -> (i32, i32) {
    %c0_i32 = arith.constant 0 : i32
    %c0_i32_0 = arith.constant 0 : i32
    %c0_i32_1 = arith.constant 0 : i32
    return %c0_i32, %c0_i32_0 : i32, i32
  }
  func.func @transform_4(%arg0: i32) -> (i32, i32) {
    %c0_i32 = arith.constant 0 : i32
    %c0_i32_0 = arith.constant 0 : i32
    %c0_i32_1 = arith.constant 0 : i32
    return %c0_i32, %c0_i32_0 : i32, i32
  }
  func.func @transform_5(%arg0: i32) -> (i32, i32) {
    %c0_i32 = arith.constant 0 : i32
    %c0_i32_0 = arith.constant 0 : i32
    %c0_i32_1 = arith.constant 0 : i32
    return %c0_i32, %c0_i32_0 : i32, i32
  }
  func.func @transform_6(%arg0: i32) -> (i32, i32) {
    %c0_i32 = arith.constant 0 : i32
    %c0_i32_0 = arith.constant 0 : i32
    %c0_i32_1 = arith.constant 0 : i32
    return %c0_i32, %c0_i32_0 : i32, i32
  }
  func.func @transform_7(%arg0: i32) -> (i32, i32) {
    %c0_i32 = arith.constant 0 : i32
    %c0_i32_0 = arith.constant 0 : i32
    %c0_i32_1 = arith.constant 0 : i32
    return %c0_i32, %c0_i32_0 : i32, i32
  }
  func.func @transform_8(%arg0: i32) -> (i32, i32) {
    %c0_i32 = arith.constant 0 : i32
    %c0_i32_0 = arith.constant 0 : i32
    %c0_i32_1 = arith.constant 0 : i32
    return %c0_i32, %c0_i32_0 : i32, i32
  }
  func.func @transform_9(%arg0: i32) -> (i32, i32) {
    %c0_i32 = arith.constant 0 : i32
    %c0_i32_0 = arith.constant 0 : i32
    %c0_i32_1 = arith.constant 0 : i32
    return %c0_i32, %c0_i32_0 : i32, i32
  }
  func.func @transform_10(%arg0: i32) -> (i32, i32) {
    %c0_i32 = arith.constant 0 : i32
    %c0_i32_0 = arith.constant 0 : i32
    %c0_i32_1 = arith.constant 0 : i32
    return %c0_i32, %c0_i32_0 : i32, i32
  }
  func.func @transform_11(%arg0: i32) -> (i32, i32) {
    %c0_i32 = arith.constant 0 : i32
    %c0_i32_0 = arith.constant 0 : i32
    %c0_i32_1 = arith.constant 0 : i32
    return %c0_i32, %c0_i32_0 : i32, i32
  }
  func.func @transform_12(%arg0: i32) -> (i32, i32) {
    %c0_i32 = arith.constant 0 : i32
    %c0_i32_0 = arith.constant 0 : i32
    %c0_i32_1 = arith.constant 0 : i32
    return %c0_i32, %c0_i32_0 : i32, i32
  }
  func.func @transform_13(%arg0: i32) -> (i32, i32) {
    %c0_i32 = arith.constant 0 : i32
    %c0_i32_0 = arith.constant 0 : i32
    %c0_i32_1 = arith.constant 0 : i32
    return %c0_i32, %c0_i32_0 : i32, i32
  }
  func.func @transform_14(%arg0: i32) -> (i32, i32) {
    %c0_i32 = arith.constant 0 : i32
    %c0_i32_0 = arith.constant 0 : i32
    %c0_i32_1 = arith.constant 0 : i32
    return %c0_i32, %c0_i32_0 : i32, i32
  }
  func.func @transform_15(%arg0: i32) -> (i32, i32) {
    %c0_i32 = arith.constant 0 : i32
    %c0_i32_0 = arith.constant 0 : i32
    return %arg0, %c0_i32 : i32, i32
  }
}

</mosaic_0001>

<llo_original>
// kernel: tpu_custom_call.1
$region0: #{tpu_custom_call.1}
  #allocation0 [shape = 'u32[]', space=smem, size = 0x4, offset = 0x4, fixed_abs, tag = 'smem constant byte address 0x4 - core index']
  #allocation1 [shape = 'u32[144,128]{1,0:T(1,128)}', space=vmem, size = 0x12000, scoped, tag = 'internal scratch']
  %s0 = inlined_call_operand.vmem [shape: f32[2,3200], index: 0, kind: input, shape index: {}]
  %s1 = inlined_call_operand.hbm [shape: s8[3200,256], index: 1, kind: input, shape index: {}]
  %s2 = inlined_call_operand.vmem [shape: f32[1,256], index: 2, kind: input, shape index: {}]
  %s3 = inlined_call_operand.vmem [shape: f32[1,256], index: 3, kind: input, shape index: {}]
  %s4 = inlined_call_operand.vmem [shape: bf16[256,64], index: 4, kind: input, shape index: {}]
  %s5 = inlined_call_operand.vmem [shape: f32[1,64], index: 5, kind: input, shape index: {}]
  %s6 = inlined_call_operand.vmem [shape: bf16[64,20], index: 6, kind: input, shape index: {}]
  %s7 = inlined_call_operand.vmem [shape: f32[1,20], index: 7, kind: input, shape index: {}]
  %s8 = inlined_call_operand.vmem [shape: bf16[20,64], index: 8, kind: input, shape index: {}]
  %s9 = inlined_call_operand.vmem [shape: f32[1,64], index: 9, kind: input, shape index: {}]
  %s10 = inlined_call_operand.vmem [shape: bf16[64,256], index: 10, kind: input, shape index: {}]
  %s11 = inlined_call_operand.vmem [shape: f32[1,256], index: 11, kind: input, shape index: {}]
  %s12 = inlined_call_operand.hbm [shape: s8[256,3200], index: 12, kind: input, shape index: {}]
  %s13 = inlined_call_operand.vmem [shape: f32[1,3200], index: 13, kind: input, shape index: {}]
  %s14 = inlined_call_operand.vmem [shape: f32[1,3200], index: 14, kind: input, shape index: {}]
  %s15 = inlined_call_operand.hbm [shape: bf16[2,3200], index: 15, kind: output, shape index: {}]
  %s16 = sld [smem:[#allocation0]]
  $region78: #{tpu_custom_call.1} parent=0
    _
  %s18 = ssub.s32 1, %s16
  %s19 = scalar_select 0, %s18, %s16
  $region1: #{tpu_custom_call.1} parent=0
    #allocation2 [shape = 'u8[819200]{0}', space=vmem, size = 0xc8000, scoped, tag = 'input window, operand 1, single buffered']
    #allocation3 [shape = 's32[1]{0}', space=sflag, size = 0x4, scoped, tag = 'scoped memory for tpu_custom_call.1']
    #allocation4 [shape = 's32[1]{0}', space=sflag, size = 0x4, scoped, tag = 'scoped memory for tpu_custom_call.1']
    #allocation5 [shape = 'u8[819200]{0}', space=vmem, size = 0xc8000, scoped, tag = 'input window, operand 12, single buffered']
    #allocation6 [shape = 's32[1]{0}', space=sflag, size = 0x4, scoped, tag = 'scoped memory for tpu_custom_call.1']
    #allocation7 [shape = 'u8[12800]{0}', space=vmem, size = 0x3400, scoped, tag = 'output window, operand 0, single buffered']
    %20 = vsyncpa [#allocation3], 0
    %21 = vsyncpa [#allocation6], 0
    %22 = vsyncpa [#allocation4], 0
    // Predicated region
    $region2: #{tpu_custom_call.1} parent=1 // pred_check
      _
    $region3: #{tpu_custom_call.1} parent=1 // pred_check_branch
      %24 = sbr.rel (0) target = $region5
    $region4: #{tpu_custom_call.1} parent=1 // pred_region
      _
    $region5: #{tpu_custom_call.1} parent=1 // pred_fallthru
      _
    // Predicated region
    $region6: #{tpu_custom_call.1} parent=1 // pred_check
      _
    $region7: #{tpu_custom_call.1} parent=1 // pred_check_branch
      %26 = sbr.rel (0) target = $region9
    $region8: #{tpu_custom_call.1} parent=1 // pred_region
      %s28 = ssub.s32 25600, 25600
      %29 = vsyncadd [#allocation3], %s28
      %s30 = sshll.u32 [#allocation2], 4
      %s31 = int_to_ptr.vmem [resolvable:$true] %s30
      %36 = dma.hbm_to_vmem [thread:$0]  %s1, 25600, %s31, [#allocation3], 256, 256, 16
    $region9: #{tpu_custom_call.1} parent=1 // pred_fallthru
      _
    // Predicated region
    $region10: #{tpu_custom_call.1} parent=1 // pred_check
      _
    $region11: #{tpu_custom_call.1} parent=1 // pred_check_branch
      %38 = sbr.rel (0) target = $region13
    $region12: #{tpu_custom_call.1} parent=1 // pred_region
      _
    $region13: #{tpu_custom_call.1} parent=1 // pred_fallthru
      _
    // Predicated region
    $region14: #{tpu_custom_call.1} parent=1 // pred_check
      _
    $region15: #{tpu_custom_call.1} parent=1 // pred_check_branch
      %40 = sbr.rel (0) target = $region17
    $region16: #{tpu_custom_call.1} parent=1 // pred_region
      _
    $region17: #{tpu_custom_call.1} parent=1 // pred_fallthru
      _
    // Predicated region
    $region18: #{tpu_custom_call.1} parent=1 // pred_check
      _
    $region19: #{tpu_custom_call.1} parent=1 // pred_check_branch
      %42 = sbr.rel (0) target = $region21
    $region20: #{tpu_custom_call.1} parent=1 // pred_region
      _
    $region21: #{tpu_custom_call.1} parent=1 // pred_fallthru
      _
    // Predicated region
    $region22: #{tpu_custom_call.1} parent=1 // pred_check
      _
    $region23: #{tpu_custom_call.1} parent=1 // pred_check_branch
      %44 = sbr.rel (0) target = $region25
    $region24: #{tpu_custom_call.1} parent=1 // pred_region
      _
    $region25: #{tpu_custom_call.1} parent=1 // pred_fallthru
      _
    // Predicated region
    $region26: #{tpu_custom_call.1} parent=1 // pred_check
      _
    $region27: #{tpu_custom_call.1} parent=1 // pred_check_branch
      %46 = sbr.rel (0) target = $region29
    $region28: #{tpu_custom_call.1} parent=1 // pred_region
      _
    $region29: #{tpu_custom_call.1} parent=1 // pred_fallthru
      _
    // Predicated region
    $region30: #{tpu_custom_call.1} parent=1 // pred_check
      _
    $region31: #{tpu_custom_call.1} parent=1 // pred_check_branch
      %48 = sbr.rel (0) target = $region33
    $region32: #{tpu_custom_call.1} parent=1 // pred_region
      _
    $region33: #{tpu_custom_call.1} parent=1 // pred_fallthru
      _
    // Predicated region
    $region34: #{tpu_custom_call.1} parent=1 // pred_check
      _
    $region35: #{tpu_custom_call.1} parent=1 // pred_check_branch
      %50 = sbr.rel (0) target = $region37
    $region36: #{tpu_custom_call.1} parent=1 // pred_region
      _
    $region37: #{tpu_custom_call.1} parent=1 // pred_fallthru
      _
    // Predicated region
    $region38: #{tpu_custom_call.1} parent=1 // pred_check
      _
    $region39: #{tpu_custom_call.1} parent=1 // pred_check_branch
      %52 = sbr.rel (0) target = $region41
    $region40: #{tpu_custom_call.1} parent=1 // pred_region
      _
    $region41: #{tpu_custom_call.1} parent=1 // pred_fallthru
      _
    // Predicated region
    $region42: #{tpu_custom_call.1} parent=1 // pred_check
      _
    $region43: #{tpu_custom_call.1} parent=1 // pred_check_branch
      %54 = sbr.rel (0) target = $region45
    $region44: #{tpu_custom_call.1} parent=1 // pred_region
      _
    $region45: #{tpu_custom_call.1} parent=1 // pred_fallthru
      _
    // Predicated region
    $region46: #{tpu_custom_call.1} parent=1 // pred_check
      _
    $region47: #{tpu_custom_call.1} parent=1 // pred_check_branch
      %56 = sbr.rel (0) target = $region49
    $region48: #{tpu_custom_call.1} parent=1 // pred_region
      _
    $region49: #{tpu_custom_call.1} parent=1 // pred_fallthru
      _
    // Predicated region
    $region50: #{tpu_custom_call.1} parent=1 // pred_check
      _
    $region51: #{tpu_custom_call.1} parent=1 // pred_check_branch
      %58 = sbr.rel (0) target = $region53
    $region52: #{tpu_custom_call.1} parent=1 // pred_region
      %s60 = ssub.s32 25600, 25600
      %61 = vsyncadd [#allocation6], %s60
      %s62 = sshll.u32 [#allocation5], 4
      %s63 = int_to_ptr.vmem [resolvable:$true] %s62
      %68 = dma.hbm_to_vmem [thread:$0]  %s12, 25600, %s63, [#allocation6], 3200, 3200, 200
    $region53: #{tpu_custom_call.1} parent=1 // pred_fallthru
      _
    // Predicated region
    $region54: #{tpu_custom_call.1} parent=1 // pred_check
      _
    $region55: #{tpu_custom_call.1} parent=1 // pred_check_branch
      %70 = sbr.rel (0) target = $region57
    $region56: #{tpu_custom_call.1} parent=1 // pred_region
      _
    $region57: #{tpu_custom_call.1} parent=1 // pred_fallthru
      _
    // Predicated region
    $region58: #{tpu_custom_call.1} parent=1 // pred_check
      _
    $region59: #{tpu_custom_call.1} parent=1 // pred_check_branch
      %72 = sbr.rel (0) target = $region61
    $region60: #{tpu_custom_call.1} parent=1 // pred_region
      _
    $region61: #{tpu_custom_call.1} parent=1 // pred_fallthru
      _
    // Predicated region
    $region62: #{tpu_custom_call.1} parent=1 // pred_check
      _
    $region63: #{tpu_custom_call.1} parent=1 // pred_check_branch
      %74 = sbr.rel (0) target = $region65
    $region64: #{tpu_custom_call.1} parent=1 // pred_region
      %75 = dma.done [#allocation3], 25600
    $region65: #{tpu_custom_call.1} parent=1 // pred_fallthru
      _
    // Predicated region
    $region66: #{tpu_custom_call.1} parent=1 // pred_check
      _
    $region67: #{tpu_custom_call.1} parent=1 // pred_check_branch
      %77 = sbr.rel (0) target = $region69
    $region68: #{tpu_custom_call.1} parent=1 // pred_region
      %78 = dma.done [#allocation6], 25600
    $region69: #{tpu_custom_call.1} parent=1 // pred_fallthru
      _
    %v80 = vld [vmem:[%s0] sm:$0xff]
    %v81 = vld [vmem:[%s0 + $0x8] sm:$0xff]
    %v82 = vld [vmem:[%s0 + $0x10] sm:$0xff]
    %v83 = vld [vmem:[%s0 + $0x18] sm:$0xff]
    %v84 = vld [vmem:[%s0 + $0x20] sm:$0xff]
    %v85 = vld [vmem:[%s0 + $0x28] sm:$0xff]
    %v86 = vld [vmem:[%s0 + $0x30] sm:$0x3]
    %v94 = vcombine.high %v80, %v80
    %v96 = vunpack.c.l.s4 1983009808
    %v97 = vunpack.c.0.s8 %v96
    %v98 = vlaneseq
    %v99 = vshrl.u32 %v98, 7
    %v100 = vsub.s32 %v97, %v99
    %v101 = vrot.slane %v80, %v100
    %v103 = vunpack.c.l.s4 1983009808
    %v104 = vunpack.c.0.s8 %v103
    %v105 = vlaneseq
    %v106 = vshrl.u32 %v105, 7
    %v107 = vsub.s32 %v104, %v106
    %v108 = vrot.slane %v94, %v107
    %v109 = vcombine.high %v101, %v101
    %v110 = vcombine.high %v108, %v108
    %v111 = vcombine.high %v81, %v81
    %v113 = vunpack.c.l.s4 1983009808
    %v114 = vunpack.c.0.s8 %v113
    %v115 = vlaneseq
    %v116 = vshrl.u32 %v115, 7
    %v117 = vsub.s32 %v114, %v116
    %v118 = vrot.slane %v81, %v117
    %v120 = vunpack.c.l.s4 1983009808
    %v121 = vunpack.c.0.s8 %v120
    %v122 = vlaneseq
    %v123 = vshrl.u32 %v122, 7
    %v124 = vsub.s32 %v121, %v123
    %v125 = vrot.slane %v111, %v124
    %v126 = vcombine.high %v118, %v118
    %v127 = vcombine.high %v125, %v125
    %v128 = vcombine.high %v82, %v82
    %v130 = vunpack.c.l.s4 1983009808
    %v131 = vunpack.c.0.s8 %v130
    %v132 = vlaneseq
    %v133 = vshrl.u32 %v132, 7
    %v134 = vsub.s32 %v131, %v133
    %v135 = vrot.slane %v82, %v134
    %v137 = vunpack.c.l.s4 1983009808
    %v138 = vunpack.c.0.s8 %v137
    %v139 = vlaneseq
    %v140 = vshrl.u32 %v139, 7
    %v141 = vsub.s32 %v138, %v140
    %v142 = vrot.slane %v128, %v141
    %v143 = vcombine.high %v135, %v135
    %v144 = vcombine.high %v142, %v142
    %v145 = vcombine.high %v83, %v83
    %v147 = vunpack.c.l.s4 1983009808
    %v148 = vunpack.c.0.s8 %v147
    %v149 = vlaneseq
    %v150 = vshrl.u32 %v149, 7
    %v151 = vsub.s32 %v148, %v150
    %v152 = vrot.slane %v83, %v151
    %v154 = vunpack.c.l.s4 1983009808
    %v155 = vunpack.c.0.s8 %v154
    %v156 = vlaneseq
    %v157 = vshrl.u32 %v156, 7
    %v158 = vsub.s32 %v155, %v157
    %v159 = vrot.slane %v145, %v158
    %v160 = vcombine.high %v152, %v152
    %v161 = vcombine.high %v159, %v159
    %v162 = vcombine.high %v84, %v84
    %v164 = vunpack.c.l.s4 1983009808
    %v165 = vunpack.c.0.s8 %v164
    %v166 = vlaneseq
    %v167 = vshrl.u32 %v166, 7
    %v168 = vsub.s32 %v165, %v167
    %v169 = vrot.slane %v84, %v168
    %v171 = vunpack.c.l.s4 1983009808
    %v172 = vunpack.c.0.s8 %v171
    %v173 = vlaneseq
    %v174 = vshrl.u32 %v173, 7
    %v175 = vsub.s32 %v172, %v174
    %v176 = vrot.slane %v162, %v175
    %v177 = vcombine.high %v169, %v169
    %v178 = vcombine.high %v176, %v176
    %v179 = vcombine.high %v85, %v85
    %v181 = vunpack.c.l.s4 1983009808
    %v182 = vunpack.c.0.s8 %v181
    %v183 = vlaneseq
    %v184 = vshrl.u32 %v183, 7
    %v185 = vsub.s32 %v182, %v184
    %v186 = vrot.slane %v85, %v185
    %v188 = vunpack.c.l.s4 1983009808
    %v189 = vunpack.c.0.s8 %v188
    %v190 = vlaneseq
    %v191 = vshrl.u32 %v190, 7
    %v192 = vsub.s32 %v189, %v191
    %v193 = vrot.slane %v179, %v192
    %v194 = vcombine.high %v186, %v186
    %v195 = vcombine.high %v193, %v193
    %v197 = vunpack.c.l.s4 1983009808
    %v198 = vunpack.c.0.s8 %v197
    %v199 = vlaneseq
    %v200 = vshrl.u32 %v199, 7
    %v201 = vsub.s32 %v198, %v200
    %v202 = vrot.slane %v86, %v201
    %v228 = vpack.c.bf16 %v101, %v101
    %v229 = vpack.c.bf16 %v109, %v109
    %v230 = vpack.c.bf16 %v108, %v108
    %v231 = vpack.c.bf16 %v110, %v110
    %v232 = vpack.c.bf16 %v118, %v118
    %v233 = vpack.c.bf16 %v126, %v126
    %v234 = vpack.c.bf16 %v125, %v125
    %v235 = vpack.c.bf16 %v127, %v127
    %v236 = vpack.c.bf16 %v135, %v135
    %v237 = vpack.c.bf16 %v143, %v143
    %v238 = vpack.c.bf16 %v142, %v142
    %v239 = vpack.c.bf16 %v144, %v144
    %v240 = vpack.c.bf16 %v152, %v152
    %v241 = vpack.c.bf16 %v160, %v160
    %v242 = vpack.c.bf16 %v159, %v159
    %v243 = vpack.c.bf16 %v161, %v161
    %v244 = vpack.c.bf16 %v169, %v169
    %v245 = vpack.c.bf16 %v177, %v177
    %v246 = vpack.c.bf16 %v176, %v176
    %v247 = vpack.c.bf16 %v178, %v178
    %v248 = vpack.c.bf16 %v186, %v186
    %v249 = vpack.c.bf16 %v194, %v194
    %v250 = vpack.c.bf16 %v193, %v193
    %v251 = vpack.c.bf16 %v195, %v195
    %v252 = vpack.c.bf16 %v202, %v202
    %v253 = vld [vmem:[#allocation2] sm:$0xff]
    %v254 = vld [vmem:[#allocation2 + $0x8] sm:$0xff]
    %v255 = vld [vmem:[#allocation2 + $0x10] sm:$0xff]
    %v256 = vld [vmem:[#allocation2 + $0x18] sm:$0xff]
    %v257 = vld [vmem:[#allocation2 + $0x20] sm:$0xff]
    %v258 = vld [vmem:[#allocation2 + $0x28] sm:$0xff]
    %v259 = vld [vmem:[#allocation2 + $0x30] sm:$0xff]
    %v260 = vld [vmem:[#allocation2 + $0x38] sm:$0xff]
    %v261 = vld [vmem:[#allocation2 + $0x40] sm:$0xff]
    %v262 = vld [vmem:[#allocation2 + $0x48] sm:$0xff]
    %v263 = vld [vmem:[#allocation2 + $0x50] sm:$0xff]
    %v264 = vld [vmem:[#allocation2 + $0x58] sm:$0xff]
    %v265 = vld [vmem:[#allocation2 + $0x60] sm:$0xff]
    %v266 = vld [vmem:[#allocation2 + $0x68] sm:$0xff]
    %v267 = vld [vmem:[#allocation2 + $0x70] sm:$0xff]
    %v268 = vld [vmem:[#allocation2 + $0x78] sm:$0xff]
    %v269 = vld [vmem:[#allocation2 + $0x80] sm:$0xff]
    %v270 = vld [vmem:[#allocation2 + $0x88] sm:$0xff]
    %v271 = vld [vmem:[#allocation2 + $0x90] sm:$0xff]
    %v272 = vld [vmem:[#allocation2 + $0x98] sm:$0xff]
    %v273 = vld [vmem:[#allocation2 + $0xa0] sm:$0xff]
    %v274 = vld [vmem:[#allocation2 + $0xa8] sm:$0xff]
    %v275 = vld [vmem:[#allocation2 + $0xb0] sm:$0xff]
    %v276 = vld [vmem:[#allocation2 + $0xb8] sm:$0xff]
    %v277 = vld [vmem:[#allocation2 + $0xc0] sm:$0xff]
    %v278 = vld [vmem:[#allocation2 + $0xc8] sm:$0xff]
    %v279 = vld [vmem:[#allocation2 + $0xd0] sm:$0xff]
    %v280 = vld [vmem:[#allocation2 + $0xd8] sm:$0xff]
    %v281 = vld [vmem:[#allocation2 + $0xe0] sm:$0xff]
    %v282 = vld [vmem:[#allocation2 + $0xe8] sm:$0xff]
    %v283 = vld [vmem:[#allocation2 + $0xf0] sm:$0xff]
    %v284 = vld [vmem:[#allocation2 + $0xf8] sm:$0xff]
    %v285 = vld [vmem:[#allocation2 + $0x100] sm:$0xff]
    %v286 = vld [vmem:[#allocation2 + $0x108] sm:$0xff]
    %v287 = vld [vmem:[#allocation2 + $0x110] sm:$0xff]
    %v288 = vld [vmem:[#allocation2 + $0x118] sm:$0xff]
    %v289 = vld [vmem:[#allocation2 + $0x120] sm:$0xff]
    %v290 = vld [vmem:[#allocation2 + $0x128] sm:$0xff]
    %v291 = vld [vmem:[#allocation2 + $0x130] sm:$0xff]
    %v292 = vld [vmem:[#allocation2 + $0x138] sm:$0xff]
    %v293 = vld [vmem:[#allocation2 + $0x140] sm:$0xff]
    %v294 = vld [vmem:[#allocation2 + $0x148] sm:$0xff]
    %v295 = vld [vmem:[#allocation2 + $0x150] sm:$0xff]
    %v296 = vld [vmem:[#allocation2 + $0x158] sm:$0xff]
    %v297 = vld [vmem:[#allocation2 + $0x160] sm:$0xff]
    %v298 = vld [vmem:[#allocation2 + $0x168] sm:$0xff]
    %v299 = vld [vmem:[#allocation2 + $0x170] sm:$0xff]
    %v300 = vld [vmem:[#allocation2 + $0x178] sm:$0xff]
    %v301 = vld [vmem:[#allocation2 + $0x180] sm:$0xff]
    %v302 = vld [vmem:[#allocation2 + $0x188] sm:$0xff]
    %v303 = vld [vmem:[#allocation2 + $0x190] sm:$0xff]
    %v304 = vld [vmem:[#allocation2 + $0x198] sm:$0xff]
    %v305 = vld [vmem:[#allocation2 + $0x1a0] sm:$0xff]
    %v306 = vld [vmem:[#allocation2 + $0x1a8] sm:$0xff]
    %v307 = vld [vmem:[#allocation2 + $0x1b0] sm:$0xff]
    %v308 = vld [vmem:[#allocation2 + $0x1b8] sm:$0xff]
    %v309 = vld [vmem:[#allocation2 + $0x1c0] sm:$0xff]
    %v310 = vld [vmem:[#allocation2 + $0x1c8] sm:$0xff]
    %v311 = vld [vmem:[#allocation2 + $0x1d0] sm:$0xff]
    %v312 = vld [vmem:[#allocation2 + $0x1d8] sm:$0xff]
    %v313 = vld [vmem:[#allocation2 + $0x1e0] sm:$0xff]
    %v314 = vld [vmem:[#allocation2 + $0x1e8] sm:$0xff]
    %v315 = vld [vmem:[#allocation2 + $0x1f0] sm:$0xff]
    %v316 = vld [vmem:[#allocation2 + $0x1f8] sm:$0xff]
    %v317 = vld [vmem:[#allocation2 + $0x200] sm:$0xff]
    %v318 = vld [vmem:[#allocation2 + $0x208] sm:$0xff]
    %v319 = vld [vmem:[#allocation2 + $0x210] sm:$0xff]
    %v320 = vld [vmem:[#allocation2 + $0x218] sm:$0xff]
    %v321 = vld [vmem:[#allocation2 + $0x220] sm:$0xff]
    %v322 = vld [vmem:[#allocation2 + $0x228] sm:$0xff]
    %v323 = vld [vmem:[#allocation2 + $0x230] sm:$0xff]
    %v324 = vld [vmem:[#allocation2 + $0x238] sm:$0xff]
    %v325 = vld [vmem:[#allocation2 + $0x240] sm:$0xff]
    %v326 = vld [vmem:[#allocation2 + $0x248] sm:$0xff]
    %v327 = vld [vmem:[#allocation2 + $0x250] sm:$0xff]
    %v328 = vld [vmem:[#allocation2 + $0x258] sm:$0xff]
    %v329 = vld [vmem:[#allocation2 + $0x260] sm:$0xff]
    %v330 = vld [vmem:[#allocation2 + $0x268] sm:$0xff]
    %v331 = vld [vmem:[#allocation2 + $0x270] sm:$0xff]
    %v332 = vld [vmem:[#allocation2 + $0x278] sm:$0xff]
    %v333 = vld [vmem:[#allocation2 + $0x280] sm:$0xff]
    %v334 = vld [vmem:[#allocation2 + $0x288] sm:$0xff]
    %v335 = vld [vmem:[#allocation2 + $0x290] sm:$0xff]
    %v336 = vld [vmem:[#allocation2 + $0x298] sm:$0xff]
    %v337 = vld [vmem:[#allocation2 + $0x2a0] sm:$0xff]
    %v338 = vld [vmem:[#allocation2 + $0x2a8] sm:$0xff]
    %v339 = vld [vmem:[#allocation2 + $0x2b0] sm:$0xff]
    %v340 = vld [vmem:[#allocation2 + $0x2b8] sm:$0xff]
    %v341 = vld [vmem:[#allocation2 + $0x2c0] sm:$0xff]
    %v342 = vld [vmem:[#allocation2 + $0x2c8] sm:$0xff]
    %v343 = vld [vmem:[#allocation2 + $0x2d0] sm:$0xff]
    %v344 = vld [vmem:[#allocation2 + $0x2d8] sm:$0xff]
    %v345 = vld [vmem:[#allocation2 + $0x2e0] sm:$0xff]
    %v346 = vld [vmem:[#allocation2 + $0x2e8] sm:$0xff]
    %v347 = vld [vmem:[#allocation2 + $0x2f0] sm:$0xff]
    %v348 = vld [vmem:[#allocation2 + $0x2f8] sm:$0xff]
    %v349 = vld [vmem:[#allocation2 + $0x300] sm:$0xff]
    %v350 = vld [vmem:[#allocation2 + $0x308] sm:$0xff]
    %v351 = vld [vmem:[#allocation2 + $0x310] sm:$0xff]
    %v352 = vld [vmem:[#allocation2 + $0x318] sm:$0xff]
    %v353 = vld [vmem:[#allocation2 + $0x320] sm:$0xff]
    %v354 = vld [vmem:[#allocation2 + $0x328] sm:$0xff]
    %v355 = vld [vmem:[#allocation2 + $0x330] sm:$0xff]
    %v356 = vld [vmem:[#allocation2 + $0x338] sm:$0xff]
    %v357 = vld [vmem:[#allocation2 + $0x340] sm:$0xff]
    %v358 = vld [vmem:[#allocation2 + $0x348] sm:$0xff]
    %v359 = vld [vmem:[#allocation2 + $0x350] sm:$0xff]
    %v360 = vld [vmem:[#allocation2 + $0x358] sm:$0xff]
    %v361 = vld [vmem:[#allocation2 + $0x360] sm:$0xff]
    %v362 = vld [vmem:[#allocation2 + $0x368] sm:$0xff]
    %v363 = vld [vmem:[#allocation2 + $0x370] sm:$0xff]
    %v364 = vld [vmem:[#allocation2 + $0x378] sm:$0xff]
    %v365 = vld [vmem:[#allocation2 + $0x380] sm:$0xff]
    %v366 = vld [vmem:[#allocation2 + $0x388] sm:$0xff]
    %v367 = vld [vmem:[#allocation2 + $0x390] sm:$0xff]
    %v368 = vld [vmem:[#allocation2 + $0x398] sm:$0xff]
    %v369 = vld [vmem:[#allocation2 + $0x3a0] sm:$0xff]
    %v370 = vld [vmem:[#allocation2 + $0x3a8] sm:$0xff]
    %v371 = vld [vmem:[#allocation2 + $0x3b0] sm:$0xff]
    %v372 = vld [vmem:[#allocation2 + $0x3b8] sm:$0xff]
    %v373 = vld [vmem:[#allocation2 + $0x3c0] sm:$0xff]
    %v374 = vld [vmem:[#allocation2 + $0x3c8] sm:$0xff]
    %v375 = vld [vmem:[#allocation2 + $0x3d0] sm:$0xff]
    %v376 = vld [vmem:[#allocation2 + $0x3d8] sm:$0xff]
    %v377 = vld [vmem:[#allocation2 + $0x3e0] sm:$0xff]
    %v378 = vld [vmem:[#allocation2 + $0x3e8] sm:$0xff]
    %v379 = vld [vmem:[#allocation2 + $0x3f0] sm:$0xff]
    %v380 = vld [vmem:[#allocation2 + $0x3f8] sm:$0xff]
    %v381 = vld [vmem:[#allocation2 + $0x400] sm:$0xff]
    %v382 = vld [vmem:[#allocation2 + $0x408] sm:$0xff]
    %v383 = vld [vmem:[#allocation2 + $0x410] sm:$0xff]
    %v384 = vld [vmem:[#allocation2 + $0x418] sm:$0xff]
    %v385 = vld [vmem:[#allocation2 + $0x420] sm:$0xff]
    %v386 = vld [vmem:[#allocation2 + $0x428] sm:$0xff]
    %v387 = vld [vmem:[#allocation2 + $0x430] sm:$0xff]
    %v388 = vld [vmem:[#allocation2 + $0x438] sm:$0xff]
    %v389 = vld [vmem:[#allocation2 + $0x440] sm:$0xff]
    %v390 = vld [vmem:[#allocation2 + $0x448] sm:$0xff]
    %v391 = vld [vmem:[#allocation2 + $0x450] sm:$0xff]
    %v392 = vld [vmem:[#allocation2 + $0x458] sm:$0xff]
    %v393 = vld [vmem:[#allocation2 + $0x460] sm:$0xff]
    %v394 = vld [vmem:[#allocation2 + $0x468] sm:$0xff]
    %v395 = vld [vmem:[#allocation2 + $0x470] sm:$0xff]
    %v396 = vld [vmem:[#allocation2 + $0x478] sm:$0xff]
    %v397 = vld [vmem:[#allocation2 + $0x480] sm:$0xff]
    %v398 = vld [vmem:[#allocation2 + $0x488] sm:$0xff]
    %v399 = vld [vmem:[#allocation2 + $0x490] sm:$0xff]
    %v400 = vld [vmem:[#allocation2 + $0x498] sm:$0xff]
    %v401 = vld [vmem:[#allocation2 + $0x4a0] sm:$0xff]
    %v402 = vld [vmem:[#allocation2 + $0x4a8] sm:$0xff]
    %v403 = vld [vmem:[#allocation2 + $0x4b0] sm:$0xff]
    %v404 = vld [vmem:[#allocation2 + $0x4b8] sm:$0xff]
    %v405 = vld [vmem:[#allocation2 + $0x4c0] sm:$0xff]
    %v406 = vld [vmem:[#allocation2 + $0x4c8] sm:$0xff]
    %v407 = vld [vmem:[#allocation2 + $0x4d0] sm:$0xff]
    %v408 = vld [vmem:[#allocation2 + $0x4d8] sm:$0xff]
    %v409 = vld [vmem:[#allocation2 + $0x4e0] sm:$0xff]
    %v410 = vld [vmem:[#allocation2 + $0x4e8] sm:$0xff]
    %v411 = vld [vmem:[#allocation2 + $0x4f0] sm:$0xff]
    %v412 = vld [vmem:[#allocation2 + $0x4f8] sm:$0xff]
    %v413 = vld [vmem:[#allocation2 + $0x500] sm:$0xff]
    %v414 = vld [vmem:[#allocation2 + $0x508] sm:$0xff]
    %v415 = vld [vmem:[#allocation2 + $0x510] sm:$0xff]
    %v416 = vld [vmem:[#allocation2 + $0x518] sm:$0xff]
    %v417 = vld [vmem:[#allocation2 + $0x520] sm:$0xff]
    %v418 = vld [vmem:[#allocation2 + $0x528] sm:$0xff]
    %v419 = vld [vmem:[#allocation2 + $0x530] sm:$0xff]
    %v420 = vld [vmem:[#allocation2 + $0x538] sm:$0xff]
    %v421 = vld [vmem:[#allocation2 + $0x540] sm:$0xff]
    %v422 = vld [vmem:[#allocation2 + $0x548] sm:$0xff]
    %v423 = vld [vmem:[#allocation2 + $0x550] sm:$0xff]
    %v424 = vld [vmem:[#allocation2 + $0x558] sm:$0xff]
    %v425 = vld [vmem:[#allocation2 + $0x560] sm:$0xff]
    %v426 = vld [vmem:[#allocation2 + $0x568] sm:$0xff]
    %v427 = vld [vmem:[#allocation2 + $0x570] sm:$0xff]
    %v428 = vld [vmem:[#allocation2 + $0x578] sm:$0xff]
    %v429 = vld [vmem:[#allocation2 + $0x580] sm:$0xff]
    %v430 = vld [vmem:[#allocation2 + $0x588] sm:$0xff]
    %v431 = vld [vmem:[#allocation2 + $0x590] sm:$0xff]
    %v432 = vld [vmem:[#allocation2 + $0x598] sm:$0xff]
    %v433 = vld [vmem:[#allocation2 + $0x5a0] sm:$0xff]
    %v434 = vld [vmem:[#allocation2 + $0x5a8] sm:$0xff]
    %v435 = vld [vmem:[#allocation2 + $0x5b0] sm:$0xff]
    %v436 = vld [vmem:[#allocation2 + $0x5b8] sm:$0xff]
    %v437 = vld [vmem:[#allocation2 + $0x5c0] sm:$0xff]
    %v438 = vld [vmem:[#allocation2 + $0x5c8] sm:$0xff]
    %v439 = vld [vmem:[#allocation2 + $0x5d0] sm:$0xff]
    %v440 = vld [vmem:[#allocation2 + $0x5d8] sm:$0xff]
    %v441 = vld [vmem:[#allocation2 + $0x5e0] sm:$0xff]
    %v442 = vld [vmem:[#allocation2 + $0x5e8] sm:$0xff]
    %v443 = vld [vmem:[#allocation2 + $0x5f0] sm:$0xff]
    %v444 = vld [vmem:[#allocation2 + $0x5f8] sm:$0xff]
    %v445 = vld [vmem:[#allocation2 + $0x600] sm:$0xff]
    %v446 = vld [vmem:[#allocation2 + $0x608] sm:$0xff]
    %v447 = vld [vmem:[#allocation2 + $0x610] sm:$0xff]
    %v448 = vld [vmem:[#allocation2 + $0x618] sm:$0xff]
    %v449 = vld [vmem:[#allocation2 + $0x620] sm:$0xff]
    %v450 = vld [vmem:[#allocation2 + $0x628] sm:$0xff]
    %v451 = vld [vmem:[#allocation2 + $0x630] sm:$0xff]
    %v452 = vld [vmem:[#allocation2 + $0x638] sm:$0xff]
    %v453 = vunpack.c.l.s8.bf16 %v253
    %v454 = vunpack.c.l.s8.bf16 %v254
    %v455 = vunpack.c.h.s8.bf16 %v253
    %v456 = vunpack.c.h.s8.bf16 %v254
    %v457 = vunpack.c.l.s8.bf16 %v255
    %v458 = vunpack.c.l.s8.bf16 %v256
    %v459 = vunpack.c.h.s8.bf16 %v255
    %v460 = vunpack.c.h.s8.bf16 %v256
    %v461 = vunpack.c.l.s8.bf16 %v257
    %v462 = vunpack.c.l.s8.bf16 %v258
    %v463 = vunpack.c.h.s8.bf16 %v257
    %v464 = vunpack.c.h.s8.bf16 %v258
    %v465 = vunpack.c.l.s8.bf16 %v259
    %v466 = vunpack.c.l.s8.bf16 %v260
    %v467 = vunpack.c.h.s8.bf16 %v259
    %v468 = vunpack.c.h.s8.bf16 %v260
    %v469 = vunpack.c.l.s8.bf16 %v261
    %v470 = vunpack.c.l.s8.bf16 %v262
    %v471 = vunpack.c.h.s8.bf16 %v261
    %v472 = vunpack.c.h.s8.bf16 %v262
    %v473 = vunpack.c.l.s8.bf16 %v263
    %v474 = vunpack.c.l.s8.bf16 %v264
    %v475 = vunpack.c.h.s8.bf16 %v263
    %v476 = vunpack.c.h.s8.bf16 %v264
    %v477 = vunpack.c.l.s8.bf16 %v265
    %v478 = vunpack.c.l.s8.bf16 %v266
    %v479 = vunpack.c.h.s8.bf16 %v265
    %v480 = vunpack.c.h.s8.bf16 %v266
    %v481 = vunpack.c.l.s8.bf16 %v267
    %v482 = vunpack.c.l.s8.bf16 %v268
    %v483 = vunpack.c.h.s8.bf16 %v267
    %v484 = vunpack.c.h.s8.bf16 %v268
    %v485 = vunpack.c.l.s8.bf16 %v269
    %v486 = vunpack.c.l.s8.bf16 %v270
    %v487 = vunpack.c.h.s8.bf16 %v269
    %v488 = vunpack.c.h.s8.bf16 %v270
    %v489 = vunpack.c.l.s8.bf16 %v271
    %v490 = vunpack.c.l.s8.bf16 %v272
    %v491 = vunpack.c.h.s8.bf16 %v271
    %v492 = vunpack.c.h.s8.bf16 %v272
    %v493 = vunpack.c.l.s8.bf16 %v273
    %v494 = vunpack.c.l.s8.bf16 %v274
    %v495 = vunpack.c.h.s8.bf16 %v273
    %v496 = vunpack.c.h.s8.bf16 %v274
    %v497 = vunpack.c.l.s8.bf16 %v275
    %v498 = vunpack.c.l.s8.bf16 %v276
    %v499 = vunpack.c.h.s8.bf16 %v275
    %v500 = vunpack.c.h.s8.bf16 %v276
    %v501 = vunpack.c.l.s8.bf16 %v277
    %v502 = vunpack.c.l.s8.bf16 %v278
    %v503 = vunpack.c.h.s8.bf16 %v277
    %v504 = vunpack.c.h.s8.bf16 %v278
    %v505 = vunpack.c.l.s8.bf16 %v279
    %v506 = vunpack.c.l.s8.bf16 %v280
    %v507 = vunpack.c.h.s8.bf16 %v279
    %v508 = vunpack.c.h.s8.bf16 %v280
    %v509 = vunpack.c.l.s8.bf16 %v281
    %v510 = vunpack.c.l.s8.bf16 %v282
    %v511 = vunpack.c.h.s8.bf16 %v281
    %v512 = vunpack.c.h.s8.bf16 %v282
    %v513 = vunpack.c.l.s8.bf16 %v283
    %v514 = vunpack.c.l.s8.bf16 %v284
    %v515 = vunpack.c.h.s8.bf16 %v283
    %v516 = vunpack.c.h.s8.bf16 %v284
    %v517 = vunpack.c.l.s8.bf16 %v285
    %v518 = vunpack.c.l.s8.bf16 %v286
    %v519 = vunpack.c.h.s8.bf16 %v285
    %v520 = vunpack.c.h.s8.bf16 %v286
    %v521 = vunpack.c.l.s8.bf16 %v287
    %v522 = vunpack.c.l.s8.bf16 %v288
    %v523 = vunpack.c.h.s8.bf16 %v287
    %v524 = vunpack.c.h.s8.bf16 %v288
    %v525 = vunpack.c.l.s8.bf16 %v289
    %v526 = vunpack.c.l.s8.bf16 %v290
    %v527 = vunpack.c.h.s8.bf16 %v289
    %v528 = vunpack.c.h.s8.bf16 %v290
    %v529 = vunpack.c.l.s8.bf16 %v291
    %v530 = vunpack.c.l.s8.bf16 %v292
    %v531 = vunpack.c.h.s8.bf16 %v291
    %v532 = vunpack.c.h.s8.bf16 %v292
    %v533 = vunpack.c.l.s8.bf16 %v293
    %v534 = vunpack.c.l.s8.bf16 %v294
    %v535 = vunpack.c.h.s8.bf16 %v293
    %v536 = vunpack.c.h.s8.bf16 %v294
    %v537 = vunpack.c.l.s8.bf16 %v295
    %v538 = vunpack.c.l.s8.bf16 %v296
    %v539 = vunpack.c.h.s8.bf16 %v295
    %v540 = vunpack.c.h.s8.bf16 %v296
    %v541 = vunpack.c.l.s8.bf16 %v297
    %v542 = vunpack.c.l.s8.bf16 %v298
    %v543 = vunpack.c.h.s8.bf16 %v297
    %v544 = vunpack.c.h.s8.bf16 %v298
    %v545 = vunpack.c.l.s8.bf16 %v299
    %v546 = vunpack.c.l.s8.bf16 %v300
    %v547 = vunpack.c.h.s8.bf16 %v299
    %v548 = vunpack.c.h.s8.bf16 %v300
    %v549 = vunpack.c.l.s8.bf16 %v301
    %v550 = vunpack.c.l.s8.bf16 %v302
    %v551 = vunpack.c.h.s8.bf16 %v301
    %v552 = vunpack.c.h.s8.bf16 %v302
    %v553 = vunpack.c.l.s8.bf16 %v303
    %v554 = vunpack.c.l.s8.bf16 %v304
    %v555 = vunpack.c.h.s8.bf16 %v303
    %v556 = vunpack.c.h.s8.bf16 %v304
    %v557 = vunpack.c.l.s8.bf16 %v305
    %v558 = vunpack.c.l.s8.bf16 %v306
    %v559 = vunpack.c.h.s8.bf16 %v305
    %v560 = vunpack.c.h.s8.bf16 %v306
    %v561 = vunpack.c.l.s8.bf16 %v307
    %v562 = vunpack.c.l.s8.bf16 %v308
    %v563 = vunpack.c.h.s8.bf16 %v307
    %v564 = vunpack.c.h.s8.bf16 %v308
    %v565 = vunpack.c.l.s8.bf16 %v309
    %v566 = vunpack.c.l.s8.bf16 %v310
    %v567 = vunpack.c.h.s8.bf16 %v309
    %v568 = vunpack.c.h.s8.bf16 %v310
    %v569 = vunpack.c.l.s8.bf16 %v311
    %v570 = vunpack.c.l.s8.bf16 %v312
    %v571 = vunpack.c.h.s8.bf16 %v311
    %v572 = vunpack.c.h.s8.bf16 %v312
    %v573 = vunpack.c.l.s8.bf16 %v313
    %v574 = vunpack.c.l.s8.bf16 %v314
    %v575 = vunpack.c.h.s8.bf16 %v313
    %v576 = vunpack.c.h.s8.bf16 %v314
    %v577 = vunpack.c.l.s8.bf16 %v315
    %v578 = vunpack.c.l.s8.bf16 %v316
    %v579 = vunpack.c.h.s8.bf16 %v315
    %v580 = vunpack.c.h.s8.bf16 %v316
    %v581 = vunpack.c.l.s8.bf16 %v317
    %v582 = vunpack.c.l.s8.bf16 %v318
    %v583 = vunpack.c.h.s8.bf16 %v317
    %v584 = vunpack.c.h.s8.bf16 %v318
    %v585 = vunpack.c.l.s8.bf16 %v319
    %v586 = vunpack.c.l.s8.bf16 %v320
    %v587 = vunpack.c.h.s8.bf16 %v319
    %v588 = vunpack.c.h.s8.bf16 %v320
    %v589 = vunpack.c.l.s8.bf16 %v321
    %v590 = vunpack.c.l.s8.bf16 %v322
    %v591 = vunpack.c.h.s8.bf16 %v321
    %v592 = vunpack.c.h.s8.bf16 %v322
    %v593 = vunpack.c.l.s8.bf16 %v323
    %v594 = vunpack.c.l.s8.bf16 %v324
    %v595 = vunpack.c.h.s8.bf16 %v323
    %v596 = vunpack.c.h.s8.bf16 %v324
    %v597 = vunpack.c.l.s8.bf16 %v325
    %v598 = vunpack.c.l.s8.bf16 %v326
    %v599 = vunpack.c.h.s8.bf16 %v325
    %v600 = vunpack.c.h.s8.bf16 %v326
    %v601 = vunpack.c.l.s8.bf16 %v327
    %v602 = vunpack.c.l.s8.bf16 %v328
    %v603 = vunpack.c.h.s8.bf16 %v327
    %v604 = vunpack.c.h.s8.bf16 %v328
    %v605 = vunpack.c.l.s8.bf16 %v329
    %v606 = vunpack.c.l.s8.bf16 %v330
    %v607 = vunpack.c.h.s8.bf16 %v329
    %v608 = vunpack.c.h.s8.bf16 %v330
    %v609 = vunpack.c.l.s8.bf16 %v331
    %v610 = vunpack.c.l.s8.bf16 %v332
    %v611 = vunpack.c.h.s8.bf16 %v331
    %v612 = vunpack.c.h.s8.bf16 %v332
    %v613 = vunpack.c.l.s8.bf16 %v333
    %v614 = vunpack.c.l.s8.bf16 %v334
    %v615 = vunpack.c.h.s8.bf16 %v333
    %v616 = vunpack.c.h.s8.bf16 %v334
    %v617 = vunpack.c.l.s8.bf16 %v335
    %v618 = vunpack.c.l.s8.bf16 %v336
    %v619 = vunpack.c.h.s8.bf16 %v335
    %v620 = vunpack.c.h.s8.bf16 %v336
    %v621 = vunpack.c.l.s8.bf16 %v337
    %v622 = vunpack.c.l.s8.bf16 %v338
    %v623 = vunpack.c.h.s8.bf16 %v337
    %v624 = vunpack.c.h.s8.bf16 %v338
    %v625 = vunpack.c.l.s8.bf16 %v339
    %v626 = vunpack.c.l.s8.bf16 %v340
    %v627 = vunpack.c.h.s8.bf16 %v339
    %v628 = vunpack.c.h.s8.bf16 %v340
    %v629 = vunpack.c.l.s8.bf16 %v341
    %v630 = vunpack.c.l.s8.bf16 %v342
    %v631 = vunpack.c.h.s8.bf16 %v341
    %v632 = vunpack.c.h.s8.bf16 %v342
    %v633 = vunpack.c.l.s8.bf16 %v343
    %v634 = vunpack.c.l.s8.bf16 %v344
    %v635 = vunpack.c.h.s8.bf16 %v343
    %v636 = vunpack.c.h.s8.bf16 %v344
    %v637 = vunpack.c.l.s8.bf16 %v345
    %v638 = vunpack.c.l.s8.bf16 %v346
    %v639 = vunpack.c.h.s8.bf16 %v345
    %v640 = vunpack.c.h.s8.bf16 %v346
    %v641 = vunpack.c.l.s8.bf16 %v347
    %v642 = vunpack.c.l.s8.bf16 %v348
    %v643 = vunpack.c.h.s8.bf16 %v347
    %v644 = vunpack.c.h.s8.bf16 %v348
    %v645 = vunpack.c.l.s8.bf16 %v349
    %v646 = vunpack.c.l.s8.bf16 %v350
    %v647 = vunpack.c.h.s8.bf16 %v349
    %v648 = vunpack.c.h.s8.bf16 %v350
    %v649 = vunpack.c.l.s8.bf16 %v351
    %v650 = vunpack.c.l.s8.bf16 %v352
    %v651 = vunpack.c.h.s8.bf16 %v351
    %v652 = vunpack.c.h.s8.bf16 %v352
    %v653 = vunpack.c.l.s8.bf16 %v353
    %v654 = vunpack.c.l.s8.bf16 %v354
    %v655 = vunpack.c.h.s8.bf16 %v353
    %v656 = vunpack.c.h.s8.bf16 %v354
    %v657 = vunpack.c.l.s8.bf16 %v355
    %v658 = vunpack.c.l.s8.bf16 %v356
    %v659 = vunpack.c.h.s8.bf16 %v355
    %v660 = vunpack.c.h.s8.bf16 %v356
    %v661 = vunpack.c.l.s8.bf16 %v357
    %v662 = vunpack.c.l.s8.bf16 %v358
    %v663 = vunpack.c.h.s8.bf16 %v357
    %v664 = vunpack.c.h.s8.bf16 %v358
    %v665 = vunpack.c.l.s8.bf16 %v359
    %v666 = vunpack.c.l.s8.bf16 %v360
    %v667 = vunpack.c.h.s8.bf16 %v359
    %v668 = vunpack.c.h.s8.bf16 %v360
    %v669 = vunpack.c.l.s8.bf16 %v361
    %v670 = vunpack.c.l.s8.bf16 %v362
    %v671 = vunpack.c.h.s8.bf16 %v361
    %v672 = vunpack.c.h.s8.bf16 %v362
    %v673 = vunpack.c.l.s8.bf16 %v363
    %v674 = vunpack.c.l.s8.bf16 %v364
    %v675 = vunpack.c.h.s8.bf16 %v363
    %v676 = vunpack.c.h.s8.bf16 %v364
    %v677 = vunpack.c.l.s8.bf16 %v365
    %v678 = vunpack.c.l.s8.bf16 %v366
    %v679 = vunpack.c.h.s8.bf16 %v365
    %v680 = vunpack.c.h.s8.bf16 %v366
    %v681 = vunpack.c.l.s8.bf16 %v367
    %v682 = vunpack.c.l.s8.bf16 %v368
    %v683 = vunpack.c.h.s8.bf16 %v367
    %v684 = vunpack.c.h.s8.bf16 %v368
    %v685 = vunpack.c.l.s8.bf16 %v369
    %v686 = vunpack.c.l.s8.bf16 %v370
    %v687 = vunpack.c.h.s8.bf16 %v369
    %v688 = vunpack.c.h.s8.bf16 %v370
    %v689 = vunpack.c.l.s8.bf16 %v371
    %v690 = vunpack.c.l.s8.bf16 %v372
    %v691 = vunpack.c.h.s8.bf16 %v371
    %v692 = vunpack.c.h.s8.bf16 %v372
    %v693 = vunpack.c.l.s8.bf16 %v373
    %v694 = vunpack.c.l.s8.bf16 %v374
    %v695 = vunpack.c.h.s8.bf16 %v373
    %v696 = vunpack.c.h.s8.bf16 %v374
    %v697 = vunpack.c.l.s8.bf16 %v375
    %v698 = vunpack.c.l.s8.bf16 %v376
    %v699 = vunpack.c.h.s8.bf16 %v375
    %v700 = vunpack.c.h.s8.bf16 %v376
    %v701 = vunpack.c.l.s8.bf16 %v377
    %v702 = vunpack.c.l.s8.bf16 %v378
    %v703 = vunpack.c.h.s8.bf16 %v377
    %v704 = vunpack.c.h.s8.bf16 %v378
    %v705 = vunpack.c.l.s8.bf16 %v379
    %v706 = vunpack.c.l.s8.bf16 %v380
    %v707 = vunpack.c.h.s8.bf16 %v379
    %v708 = vunpack.c.h.s8.bf16 %v380
    %v709 = vunpack.c.l.s8.bf16 %v381
    %v710 = vunpack.c.l.s8.bf16 %v382
    %v711 = vunpack.c.h.s8.bf16 %v381
    %v712 = vunpack.c.h.s8.bf16 %v382
    %v713 = vunpack.c.l.s8.bf16 %v383
    %v714 = vunpack.c.l.s8.bf16 %v384
    %v715 = vunpack.c.h.s8.bf16 %v383
    %v716 = vunpack.c.h.s8.bf16 %v384
    %v717 = vunpack.c.l.s8.bf16 %v385
    %v718 = vunpack.c.l.s8.bf16 %v386
    %v719 = vunpack.c.h.s8.bf16 %v385
    %v720 = vunpack.c.h.s8.bf16 %v386
    %v721 = vunpack.c.l.s8.bf16 %v387
    %v722 = vunpack.c.l.s8.bf16 %v388
    %v723 = vunpack.c.h.s8.bf16 %v387
    %v724 = vunpack.c.h.s8.bf16 %v388
    %v725 = vunpack.c.l.s8.bf16 %v389
    %v726 = vunpack.c.l.s8.bf16 %v390
    %v727 = vunpack.c.h.s8.bf16 %v389
    %v728 = vunpack.c.h.s8.bf16 %v390
    %v729 = vunpack.c.l.s8.bf16 %v391
    %v730 = vunpack.c.l.s8.bf16 %v392
    %v731 = vunpack.c.h.s8.bf16 %v391
    %v732 = vunpack.c.h.s8.bf16 %v392
    %v733 = vunpack.c.l.s8.bf16 %v393
    %v734 = vunpack.c.l.s8.bf16 %v394
    %v735 = vunpack.c.h.s8.bf16 %v393
    %v736 = vunpack.c.h.s8.bf16 %v394
    %v737 = vunpack.c.l.s8.bf16 %v395
    %v738 = vunpack.c.l.s8.bf16 %v396
    %v739 = vunpack.c.h.s8.bf16 %v395
    %v740 = vunpack.c.h.s8.bf16 %v396
    %v741 = vunpack.c.l.s8.bf16 %v397
    %v742 = vunpack.c.l.s8.bf16 %v398
    %v743 = vunpack.c.h.s8.bf16 %v397
    %v744 = vunpack.c.h.s8.bf16 %v398
    %v745 = vunpack.c.l.s8.bf16 %v399
    %v746 = vunpack.c.l.s8.bf16 %v400
    %v747 = vunpack.c.h.s8.bf16 %v399
    %v748 = vunpack.c.h.s8.bf16 %v400
    %v749 = vunpack.c.l.s8.bf16 %v401
    %v750 = vunpack.c.l.s8.bf16 %v402
    %v751 = vunpack.c.h.s8.bf16 %v401
    %v752 = vunpack.c.h.s8.bf16 %v402
    %v753 = vunpack.c.l.s8.bf16 %v403
    %v754 = vunpack.c.l.s8.bf16 %v404
    %v755 = vunpack.c.h.s8.bf16 %v403
    %v756 = vunpack.c.h.s8.bf16 %v404
    %v757 = vunpack.c.l.s8.bf16 %v405
    %v758 = vunpack.c.l.s8.bf16 %v406
    %v759 = vunpack.c.h.s8.bf16 %v405
    %v760 = vunpack.c.h.s8.bf16 %v406
    %v761 = vunpack.c.l.s8.bf16 %v407
    %v762 = vunpack.c.l.s8.bf16 %v408
    %v763 = vunpack.c.h.s8.bf16 %v407
    %v764 = vunpack.c.h.s8.bf16 %v408
    %v765 = vunpack.c.l.s8.bf16 %v409
    %v766 = vunpack.c.l.s8.bf16 %v410
    %v767 = vunpack.c.h.s8.bf16 %v409
    %v768 = vunpack.c.h.s8.bf16 %v410
    %v769 = vunpack.c.l.s8.bf16 %v411
    %v770 = vunpack.c.l.s8.bf16 %v412
    %v771 = vunpack.c.h.s8.bf16 %v411
    %v772 = vunpack.c.h.s8.bf16 %v412
    %v773 = vunpack.c.l.s8.bf16 %v413
    %v774 = vunpack.c.l.s8.bf16 %v414
    %v775 = vunpack.c.h.s8.bf16 %v413
    %v776 = vunpack.c.h.s8.bf16 %v414
    %v777 = vunpack.c.l.s8.bf16 %v415
    %v778 = vunpack.c.l.s8.bf16 %v416
    %v779 = vunpack.c.h.s8.bf16 %v415
    %v780 = vunpack.c.h.s8.bf16 %v416
    %v781 = vunpack.c.l.s8.bf16 %v417
    %v782 = vunpack.c.l.s8.bf16 %v418
    %v783 = vunpack.c.h.s8.bf16 %v417
    %v784 = vunpack.c.h.s8.bf16 %v418
    %v785 = vunpack.c.l.s8.bf16 %v419
    %v786 = vunpack.c.l.s8.bf16 %v420
    %v787 = vunpack.c.h.s8.bf16 %v419
    %v788 = vunpack.c.h.s8.bf16 %v420
    %v789 = vunpack.c.l.s8.bf16 %v421
    %v790 = vunpack.c.l.s8.bf16 %v422
    %v791 = vunpack.c.h.s8.bf16 %v421
    %v792 = vunpack.c.h.s8.bf16 %v422
    %v793 = vunpack.c.l.s8.bf16 %v423
    %v794 = vunpack.c.l.s8.bf16 %v424
    %v795 = vunpack.c.h.s8.bf16 %v423
    %v796 = vunpack.c.h.s8.bf16 %v424
    %v797 = vunpack.c.l.s8.bf16 %v425
    %v798 = vunpack.c.l.s8.bf16 %v426
    %v799 = vunpack.c.h.s8.bf16 %v425
    %v800 = vunpack.c.h.s8.bf16 %v426
    %v801 = vunpack.c.l.s8.bf16 %v427
    %v802 = vunpack.c.l.s8.bf16 %v428
    %v803 = vunpack.c.h.s8.bf16 %v427
    %v804 = vunpack.c.h.s8.bf16 %v428
    %v805 = vunpack.c.l.s8.bf16 %v429
    %v806 = vunpack.c.l.s8.bf16 %v430
    %v807 = vunpack.c.h.s8.bf16 %v429
    %v808 = vunpack.c.h.s8.bf16 %v430
    %v809 = vunpack.c.l.s8.bf16 %v431
    %v810 = vunpack.c.l.s8.bf16 %v432
    %v811 = vunpack.c.h.s8.bf16 %v431
    %v812 = vunpack.c.h.s8.bf16 %v432
    %v813 = vunpack.c.l.s8.bf16 %v433
    %v814 = vunpack.c.l.s8.bf16 %v434
    %v815 = vunpack.c.h.s8.bf16 %v433
    %v816 = vunpack.c.h.s8.bf16 %v434
    %v817 = vunpack.c.l.s8.bf16 %v435
    %v818 = vunpack.c.l.s8.bf16 %v436
    %v819 = vunpack.c.h.s8.bf16 %v435
    %v820 = vunpack.c.h.s8.bf16 %v436
    %v821 = vunpack.c.l.s8.bf16 %v437
    %v822 = vunpack.c.l.s8.bf16 %v438
    %v823 = vunpack.c.h.s8.bf16 %v437
    %v824 = vunpack.c.h.s8.bf16 %v438
    %v825 = vunpack.c.l.s8.bf16 %v439
    %v826 = vunpack.c.l.s8.bf16 %v440
    %v827 = vunpack.c.h.s8.bf16 %v439
    %v828 = vunpack.c.h.s8.bf16 %v440
    %v829 = vunpack.c.l.s8.bf16 %v441
    %v830 = vunpack.c.l.s8.bf16 %v442
    %v831 = vunpack.c.h.s8.bf16 %v441
    %v832 = vunpack.c.h.s8.bf16 %v442
    %v833 = vunpack.c.l.s8.bf16 %v443
    %v834 = vunpack.c.l.s8.bf16 %v444
    %v835 = vunpack.c.h.s8.bf16 %v443
    %v836 = vunpack.c.h.s8.bf16 %v444
    %v837 = vunpack.c.l.s8.bf16 %v445
    %v838 = vunpack.c.l.s8.bf16 %v446
    %v839 = vunpack.c.h.s8.bf16 %v445
    %v840 = vunpack.c.h.s8.bf16 %v446
    %v841 = vunpack.c.l.s8.bf16 %v447
    %v842 = vunpack.c.l.s8.bf16 %v448
    %v843 = vunpack.c.h.s8.bf16 %v447
    %v844 = vunpack.c.h.s8.bf16 %v448
    %v845 = vunpack.c.l.s8.bf16 %v449
    %v846 = vunpack.c.l.s8.bf16 %v450
    %v847 = vunpack.c.h.s8.bf16 %v449
    %v848 = vunpack.c.h.s8.bf16 %v450
    %v849 = vunpack.c.l.s8.bf16 %v451
    %v850 = vunpack.c.l.s8.bf16 %v452
    %v851 = vunpack.c.h.s8.bf16 %v451
    %v852 = vunpack.c.h.s8.bf16 %v452
    %853 = vmatprep.subr.bf16.mxu0 %v468
    %854 = vmatpush1.bf16.msra.mxu0 %v467
    %855 = vmatprep.subr.bf16.mxu0 %v466
    %856 = vmatpush1.bf16.msra.mxu0 %v465
    %857 = vmatprep.subr.bf16.mxu0 %v464
    %858 = vmatpush1.bf16.msra.mxu0 %v463
    %859 = vmatprep.subr.bf16.mxu0 %v462
    %860 = vmatpush1.bf16.msra.mxu0 %v461
    %861 = vmatprep.subr.bf16.mxu0 %v460
    %862 = vmatpush1.bf16.msra.mxu0 %v459
    %863 = vmatprep.subr.bf16.mxu0 %v458
    %864 = vmatpush1.bf16.msra.mxu0 %v457
    %865 = vmatprep.subr.bf16.mxu0 %v456
    %866 = vmatpush1.bf16.msra.mxu0 %v455
    %867 = vmatprep.subr.bf16.mxu0 %v454
    %868 = vmatpush1.bf16.msra.mxu0 %v453
    %869 = vmatprep.subr.bf16.mxu0 %v484
    %870 = vmatpush2.bf16.msra.mxu0 %v483
    %871 = vmatprep.subr.bf16.mxu0 %v482
    %872 = vmatpush2.bf16.msra.mxu0 %v481
    %873 = vmatprep.subr.bf16.mxu0 %v480
    %874 = vmatpush2.bf16.msra.mxu0 %v479
    %875 = vmatprep.subr.bf16.mxu0 %v478
    %876 = vmatpush2.bf16.msra.mxu0 %v477
    %877 = vmatprep.subr.bf16.mxu0 %v476
    %878 = vmatpush2.bf16.msra.mxu0 %v475
    %879 = vmatprep.subr.bf16.mxu0 %v474
    %880 = vmatpush2.bf16.msra.mxu0 %v473
    %881 = vmatprep.subr.bf16.mxu0 %v472
    %882 = vmatpush2.bf16.msra.mxu0 %v471
    %883 = vmatprep.subr.bf16.mxu0 %v470
    %884 = vmatpush2.bf16.msra.mxu0 %v469
    %885 = vmatprep.mubr.bf16.mxu0 %v229
    %886 = vmatmul.mubr.bf16.gmra.mxu0 %v228
    %v887 = vpop.f32.mrf.mxu0
    %v888 = vadd.f32 0.0, %v887
    %v889 = vpop.f32.mrf.mxu0
    %v890 = vadd.f32 0.0, %v889
    %v891 = vpop.f32.mrf.mxu0
    %v892 = vpop.f32.mrf.mxu0
    %893 = vdwg.mxu0
    %894 = vmatprep.subr.bf16.mxu0 %v500
    %895 = vmatpush1.bf16.msra.mxu0 %v499
    %896 = vmatprep.subr.bf16.mxu0 %v498
    %897 = vmatpush1.bf16.msra.mxu0 %v497
    %898 = vmatprep.subr.bf16.mxu0 %v496
    %899 = vmatpush1.bf16.msra.mxu0 %v495
    %900 = vmatprep.subr.bf16.mxu0 %v494
    %901 = vmatpush1.bf16.msra.mxu0 %v493
    %902 = vmatprep.subr.bf16.mxu0 %v492
    %903 = vmatpush1.bf16.msra.mxu0 %v491
    %904 = vmatprep.subr.bf16.mxu0 %v490
    %905 = vmatpush1.bf16.msra.mxu0 %v489
    %906 = vmatprep.subr.bf16.mxu0 %v488
    %907 = vmatpush1.bf16.msra.mxu0 %v487
    %908 = vmatprep.subr.bf16.mxu0 %v486
    %909 = vmatpush1.bf16.msra.mxu0 %v485
    %910 = vmatprep.subr.bf16.mxu0 %v516
    %911 = vmatpush2.bf16.msra.mxu0 %v515
    %912 = vmatprep.subr.bf16.mxu0 %v514
    %913 = vmatpush2.bf16.msra.mxu0 %v513
    %914 = vmatprep.subr.bf16.mxu0 %v512
    %915 = vmatpush2.bf16.msra.mxu0 %v511
    %916 = vmatprep.subr.bf16.mxu0 %v510
    %917 = vmatpush2.bf16.msra.mxu0 %v509
    %918 = vmatprep.subr.bf16.mxu0 %v508
    %919 = vmatpush2.bf16.msra.mxu0 %v507
    %920 = vmatprep.subr.bf16.mxu0 %v506
    %921 = vmatpush2.bf16.msra.mxu0 %v505
    %922 = vmatprep.subr.bf16.mxu0 %v504
    %923 = vmatpush2.bf16.msra.mxu0 %v503
    %924 = vmatprep.subr.bf16.mxu0 %v502
    %925 = vmatpush2.bf16.msra.mxu0 %v501
    %926 = vmatprep.mubr.bf16.mxu0 %v231
    %927 = vmatmul.mubr.bf16.gmra.mxu0 %v230
    %v928 = vpop.f32.mrf.mxu0
    %v929 = vadd.f32 %v888, %v928
    %v930 = vpop.f32.mrf.mxu0
    %v931 = vadd.f32 %v890, %v930
    %v932 = vpop.f32.mrf.mxu0
    %v933 = vpop.f32.mrf.mxu0
    %934 = vdwg.mxu0
    %935 = vmatprep.subr.bf16.mxu0 %v532
    %936 = vmatpush1.bf16.msra.mxu0 %v531
    %937 = vmatprep.subr.bf16.mxu0 %v530
    %938 = vmatpush1.bf16.msra.mxu0 %v529
    %939 = vmatprep.subr.bf16.mxu0 %v528
    %940 = vmatpush1.bf16.msra.mxu0 %v527
    %941 = vmatprep.subr.bf16.mxu0 %v526
    %942 = vmatpush1.bf16.msra.mxu0 %v525
    %943 = vmatprep.subr.bf16.mxu0 %v524
    %944 = vmatpush1.bf16.msra.mxu0 %v523
    %945 = vmatprep.subr.bf16.mxu0 %v522
    %946 = vmatpush1.bf16.msra.mxu0 %v521
    %947 = vmatprep.subr.bf16.mxu0 %v520
    %948 = vmatpush1.bf16.msra.mxu0 %v519
    %949 = vmatprep.subr.bf16.mxu0 %v518
    %950 = vmatpush1.bf16.msra.mxu0 %v517
    %951 = vmatprep.subr.bf16.mxu0 %v548
    %952 = vmatpush2.bf16.msra.mxu0 %v547
    %953 = vmatprep.subr.bf16.mxu0 %v546
    %954 = vmatpush2.bf16.msra.mxu0 %v545
    %955 = vmatprep.subr.bf16.mxu0 %v544
    %956 = vmatpush2.bf16.msra.mxu0 %v543
    %957 = vmatprep.subr.bf16.mxu0 %v542
    %958 = vmatpush2.bf16.msra.mxu0 %v541
    %959 = vmatprep.subr.bf16.mxu0 %v540
    %960 = vmatpush2.bf16.msra.mxu0 %v539
    %961 = vmatprep.subr.bf16.mxu0 %v538
    %962 = vmatpush2.bf16.msra.mxu0 %v537
    %963 = vmatprep.subr.bf16.mxu0 %v536
    %964 = vmatpush2.bf16.msra.mxu0 %v535
    %965 = vmatprep.subr.bf16.mxu0 %v534
    %966 = vmatpush2.bf16.msra.mxu0 %v533
    %967 = vmatprep.mubr.bf16.mxu0 %v233
    %968 = vmatmul.mubr.bf16.gmra.mxu0 %v232
    %v969 = vpop.f32.mrf.mxu0
    %v970 = vadd.f32 %v929, %v969
    %v971 = vpop.f32.mrf.mxu0
    %v972 = vadd.f32 %v931, %v971
    %v973 = vpop.f32.mrf.mxu0
    %v974 = vpop.f32.mrf.mxu0
    %975 = vdwg.mxu0
    %976 = vmatprep.subr.bf16.mxu0 %v564
    %977 = vmatpush1.bf16.msra.mxu0 %v563
    %978 = vmatprep.subr.bf16.mxu0 %v562
    %979 = vmatpush1.bf16.msra.mxu0 %v561
    %980 = vmatprep.subr.bf16.mxu0 %v560
    %981 = vmatpush1.bf16.msra.mxu0 %v559
    %982 = vmatprep.subr.bf16.mxu0 %v558
    %983 = vmatpush1.bf16.msra.mxu0 %v557
    %984 = vmatprep.subr.bf16.mxu0 %v556
    %985 = vmatpush1.bf16.msra.mxu0 %v555
    %986 = vmatprep.subr.bf16.mxu0 %v554
    %987 = vmatpush1.bf16.msra.mxu0 %v553
    %988 = vmatprep.subr.bf16.mxu0 %v552
    %989 = vmatpush1.bf16.msra.mxu0 %v551
    %990 = vmatprep.subr.bf16.mxu0 %v550
    %991 = vmatpush1.bf16.msra.mxu0 %v549
    %992 = vmatprep.subr.bf16.mxu0 %v580
    %993 = vmatpush2.bf16.msra.mxu0 %v579
    %994 = vmatprep.subr.bf16.mxu0 %v578
    %995 = vmatpush2.bf16.msra.mxu0 %v577
    %996 = vmatprep.subr.bf16.mxu0 %v576
    %997 = vmatpush2.bf16.msra.mxu0 %v575
    %998 = vmatprep.subr.bf16.mxu0 %v574
    %999 = vmatpush2.bf16.msra.mxu0 %v573
    %1000 = vmatprep.subr.bf16.mxu0 %v572
    %1001 = vmatpush2.bf16.msra.mxu0 %v571
    %1002 = vmatprep.subr.bf16.mxu0 %v570
    %1003 = vmatpush2.bf16.msra.mxu0 %v569
    %1004 = vmatprep.subr.bf16.mxu0 %v568
    %1005 = vmatpush2.bf16.msra.mxu0 %v567
    %1006 = vmatprep.subr.bf16.mxu0 %v566
    %1007 = vmatpush2.bf16.msra.mxu0 %v565
    %1008 = vmatprep.mubr.bf16.mxu0 %v235
    %1009 = vmatmul.mubr.bf16.gmra.mxu0 %v234
    %v1010 = vpop.f32.mrf.mxu0
    %v1011 = vadd.f32 %v970, %v1010
    %v1012 = vpop.f32.mrf.mxu0
    %v1013 = vadd.f32 %v972, %v1012
    %v1014 = vpop.f32.mrf.mxu0
    %v1015 = vpop.f32.mrf.mxu0
    %1016 = vdwg.mxu0
    %1017 = vmatprep.subr.bf16.mxu0 %v596
    %1018 = vmatpush1.bf16.msra.mxu0 %v595
    %1019 = vmatprep.subr.bf16.mxu0 %v594
    %1020 = vmatpush1.bf16.msra.mxu0 %v593
    %1021 = vmatprep.subr.bf16.mxu0 %v592
    %1022 = vmatpush1.bf16.msra.mxu0 %v591
    %1023 = vmatprep.subr.bf16.mxu0 %v590
    %1024 = vmatpush1.bf16.msra.mxu0 %v589
    %1025 = vmatprep.subr.bf16.mxu0 %v588
    %1026 = vmatpush1.bf16.msra.mxu0 %v587
    %1027 = vmatprep.subr.bf16.mxu0 %v586
    %1028 = vmatpush1.bf16.msra.mxu0 %v585
    %1029 = vmatprep.subr.bf16.mxu0 %v584
    %1030 = vmatpush1.bf16.msra.mxu0 %v583
    %1031 = vmatprep.subr.bf16.mxu0 %v582
    %1032 = vmatpush1.bf16.msra.mxu0 %v581
    %1033 = vmatprep.subr.bf16.mxu0 %v612
    %1034 = vmatpush2.bf16.msra.mxu0 %v611
    %1035 = vmatprep.subr.bf16.mxu0 %v610
    %1036 = vmatpush2.bf16.msra.mxu0 %v609
    %1037 = vmatprep.subr.bf16.mxu0 %v608
    %1038 = vmatpush2.bf16.msra.mxu0 %v607
    %1039 = vmatprep.subr.bf16.mxu0 %v606
    %1040 = vmatpush2.bf16.msra.mxu0 %v605
    %1041 = vmatprep.subr.bf16.mxu0 %v604
    %1042 = vmatpush2.bf16.msra.mxu0 %v603
    %1043 = vmatprep.subr.bf16.mxu0 %v602
    %1044 = vmatpush2.bf16.msra.mxu0 %v601
    %1045 = vmatprep.subr.bf16.mxu0 %v600
    %1046 = vmatpush2.bf16.msra.mxu0 %v599
    %1047 = vmatprep.subr.bf16.mxu0 %v598
    %1048 = vmatpush2.bf16.msra.mxu0 %v597
    %1049 = vmatprep.mubr.bf16.mxu0 %v237
    %1050 = vmatmul.mubr.bf16.gmra.mxu0 %v236
    %v1051 = vpop.f32.mrf.mxu0
    %v1052 = vadd.f32 %v1011, %v1051
    %v1053 = vpop.f32.mrf.mxu0
    %v1054 = vadd.f32 %v1013, %v1053
    %v1055 = vpop.f32.mrf.mxu0
    %v1056 = vpop.f32.mrf.mxu0
    %1057 = vdwg.mxu0
    %1058 = vmatprep.subr.bf16.mxu0 %v628
    %1059 = vmatpush1.bf16.msra.mxu0 %v627
    %1060 = vmatprep.subr.bf16.mxu0 %v626
    %1061 = vmatpush1.bf16.msra.mxu0 %v625
    %1062 = vmatprep.subr.bf16.mxu0 %v624
    %1063 = vmatpush1.bf16.msra.mxu0 %v623
    %1064 = vmatprep.subr.bf16.mxu0 %v622
    %1065 = vmatpush1.bf16.msra.mxu0 %v621
    %1066 = vmatprep.subr.bf16.mxu0 %v620
    %1067 = vmatpush1.bf16.msra.mxu0 %v619
    %1068 = vmatprep.subr.bf16.mxu0 %v618
    %1069 = vmatpush1.bf16.msra.mxu0 %v617
    %1070 = vmatprep.subr.bf16.mxu0 %v616
    %1071 = vmatpush1.bf16.msra.mxu0 %v615
    %1072 = vmatprep.subr.bf16.mxu0 %v614
    %1073 = vmatpush1.bf16.msra.mxu0 %v613
    %1074 = vmatprep.subr.bf16.mxu0 %v644
    %1075 = vmatpush2.bf16.msra.mxu0 %v643
    %1076 = vmatprep.subr.bf16.mxu0 %v642
    %1077 = vmatpush2.bf16.msra.mxu0 %v641
    %1078 = vmatprep.subr.bf16.mxu0 %v640
    %1079 = vmatpush2.bf16.msra.mxu0 %v639
    %1080 = vmatprep.subr.bf16.mxu0 %v638
    %1081 = vmatpush2.bf16.msra.mxu0 %v637
    %1082 = vmatprep.subr.bf16.mxu0 %v636
    %1083 = vmatpush2.bf16.msra.mxu0 %v635
    %1084 = vmatprep.subr.bf16.mxu0 %v634
    %1085 = vmatpush2.bf16.msra.mxu0 %v633
    %1086 = vmatprep.subr.bf16.mxu0 %v632
    %1087 = vmatpush2.bf16.msra.mxu0 %v631
    %1088 = vmatprep.subr.bf16.mxu0 %v630
    %1089 = vmatpush2.bf16.msra.mxu0 %v629
    %1090 = vmatprep.mubr.bf16.mxu0 %v239
    %1091 = vmatmul.mubr.bf16.gmra.mxu0 %v238
    %v1092 = vpop.f32.mrf.mxu0
    %v1093 = vadd.f32 %v1052, %v1092
    %v1094 = vpop.f32.mrf.mxu0
    %v1095 = vadd.f32 %v1054, %v1094
    %v1096 = vpop.f32.mrf.mxu0
    %v1097 = vpop.f32.mrf.mxu0
    %1098 = vdwg.mxu0
    %1099 = vmatprep.subr.bf16.mxu0 %v660
    %1100 = vmatpush1.bf16.msra.mxu0 %v659
    %1101 = vmatprep.subr.bf16.mxu0 %v658
    %1102 = vmatpush1.bf16.msra.mxu0 %v657
    %1103 = vmatprep.subr.bf16.mxu0 %v656
    %1104 = vmatpush1.bf16.msra.mxu0 %v655
    %1105 = vmatprep.subr.bf16.mxu0 %v654
    %1106 = vmatpush1.bf16.msra.mxu0 %v653
    %1107 = vmatprep.subr.bf16.mxu0 %v652
    %1108 = vmatpush1.bf16.msra.mxu0 %v651
    %1109 = vmatprep.subr.bf16.mxu0 %v650
    %1110 = vmatpush1.bf16.msra.mxu0 %v649
    %1111 = vmatprep.subr.bf16.mxu0 %v648
    %1112 = vmatpush1.bf16.msra.mxu0 %v647
    %1113 = vmatprep.subr.bf16.mxu0 %v646
    %1114 = vmatpush1.bf16.msra.mxu0 %v645
    %1115 = vmatprep.subr.bf16.mxu0 %v676
    %1116 = vmatpush2.bf16.msra.mxu0 %v675
    %1117 = vmatprep.subr.bf16.mxu0 %v674
    %1118 = vmatpush2.bf16.msra.mxu0 %v673
    %1119 = vmatprep.subr.bf16.mxu0 %v672
    %1120 = vmatpush2.bf16.msra.mxu0 %v671
    %1121 = vmatprep.subr.bf16.mxu0 %v670
    %1122 = vmatpush2.bf16.msra.mxu0 %v669
    %1123 = vmatprep.subr.bf16.mxu0 %v668
    %1124 = vmatpush2.bf16.msra.mxu0 %v667
    %1125 = vmatprep.subr.bf16.mxu0 %v666
    %1126 = vmatpush2.bf16.msra.mxu0 %v665
    %1127 = vmatprep.subr.bf16.mxu0 %v664
    %1128 = vmatpush2.bf16.msra.mxu0 %v663
    %1129 = vmatprep.subr.bf16.mxu0 %v662
    %1130 = vmatpush2.bf16.msra.mxu0 %v661
    %1131 = vmatprep.mubr.bf16.mxu0 %v241
    %1132 = vmatmul.mubr.bf16.gmra.mxu0 %v240
    %v1133 = vpop.f32.mrf.mxu0
    %v1134 = vadd.f32 %v1093, %v1133
    %v1135 = vpop.f32.mrf.mxu0
    %v1136 = vadd.f32 %v1095, %v1135
    %v1137 = vpop.f32.mrf.mxu0
    %v1138 = vpop.f32.mrf.mxu0
    %1139 = vdwg.mxu0
    %1140 = vmatprep.subr.bf16.mxu0 %v692
    %1141 = vmatpush1.bf16.msra.mxu0 %v691
    %1142 = vmatprep.subr.bf16.mxu0 %v690
    %1143 = vmatpush1.bf16.msra.mxu0 %v689
    %1144 = vmatprep.subr.bf16.mxu0 %v688
    %1145 = vmatpush1.bf16.msra.mxu0 %v687
    %1146 = vmatprep.subr.bf16.mxu0 %v686
    %1147 = vmatpush1.bf16.msra.mxu0 %v685
    %1148 = vmatprep.subr.bf16.mxu0 %v684
    %1149 = vmatpush1.bf16.msra.mxu0 %v683
    %1150 = vmatprep.subr.bf16.mxu0 %v682
    %1151 = vmatpush1.bf16.msra.mxu0 %v681
    %1152 = vmatprep.subr.bf16.mxu0 %v680
    %1153 = vmatpush1.bf16.msra.mxu0 %v679
    %1154 = vmatprep.subr.bf16.mxu0 %v678
    %1155 = vmatpush1.bf16.msra.mxu0 %v677
    %1156 = vmatprep.subr.bf16.mxu0 %v708
    %1157 = vmatpush2.bf16.msra.mxu0 %v707
    %1158 = vmatprep.subr.bf16.mxu0 %v706
    %1159 = vmatpush2.bf16.msra.mxu0 %v705
    %1160 = vmatprep.subr.bf16.mxu0 %v704
    %1161 = vmatpush2.bf16.msra.mxu0 %v703
    %1162 = vmatprep.subr.bf16.mxu0 %v702
    %1163 = vmatpush2.bf16.msra.mxu0 %v701
    %1164 = vmatprep.subr.bf16.mxu0 %v700
    %1165 = vmatpush2.bf16.msra.mxu0 %v699
    %1166 = vmatprep.subr.bf16.mxu0 %v698
    %1167 = vmatpush2.bf16.msra.mxu0 %v697
    %1168 = vmatprep.subr.bf16.mxu0 %v696
    %1169 = vmatpush2.bf16.msra.mxu0 %v695
    %1170 = vmatprep.subr.bf16.mxu0 %v694
    %1171 = vmatpush2.bf16.msra.mxu0 %v693
    %1172 = vmatprep.mubr.bf16.mxu0 %v243
    %1173 = vmatmul.mubr.bf16.gmra.mxu0 %v242
    %v1174 = vpop.f32.mrf.mxu0
    %v1175 = vadd.f32 %v1134, %v1174
    %v1176 = vpop.f32.mrf.mxu0
    %v1177 = vadd.f32 %v1136, %v1176
    %v1178 = vpop.f32.mrf.mxu0
    %v1179 = vpop.f32.mrf.mxu0
    %1180 = vdwg.mxu0
    %1181 = vmatprep.subr.bf16.mxu0 %v724
    %1182 = vmatpush1.bf16.msra.mxu0 %v723
    %1183 = vmatprep.subr.bf16.mxu0 %v722
    %1184 = vmatpush1.bf16.msra.mxu0 %v721
    %1185 = vmatprep.subr.bf16.mxu0 %v720
    %1186 = vmatpush1.bf16.msra.mxu0 %v719
    %1187 = vmatprep.subr.bf16.mxu0 %v718
    %1188 = vmatpush1.bf16.msra.mxu0 %v717
    %1189 = vmatprep.subr.bf16.mxu0 %v716
    %1190 = vmatpush1.bf16.msra.mxu0 %v715
    %1191 = vmatprep.subr.bf16.mxu0 %v714
    %1192 = vmatpush1.bf16.msra.mxu0 %v713
    %1193 = vmatprep.subr.bf16.mxu0 %v712
    %1194 = vmatpush1.bf16.msra.mxu0 %v711
    %1195 = vmatprep.subr.bf16.mxu0 %v710
    %1196 = vmatpush1.bf16.msra.mxu0 %v709
    %1197 = vmatprep.subr.bf16.mxu0 %v740
    %1198 = vmatpush2.bf16.msra.mxu0 %v739
    %1199 = vmatprep.subr.bf16.mxu0 %v738
    %1200 = vmatpush2.bf16.msra.mxu0 %v737
    %1201 = vmatprep.subr.bf16.mxu0 %v736
    %1202 = vmatpush2.bf16.msra.mxu0 %v735
    %1203 = vmatprep.subr.bf16.mxu0 %v734
    %1204 = vmatpush2.bf16.msra.mxu0 %v733
    %1205 = vmatprep.subr.bf16.mxu0 %v732
    %1206 = vmatpush2.bf16.msra.mxu0 %v731
    %1207 = vmatprep.subr.bf16.mxu0 %v730
    %1208 = vmatpush2.bf16.msra.mxu0 %v729
    %1209 = vmatprep.subr.bf16.mxu0 %v728
    %1210 = vmatpush2.bf16.msra.mxu0 %v727
    %1211 = vmatprep.subr.bf16.mxu0 %v726
    %1212 = vmatpush2.bf16.msra.mxu0 %v725
    %1213 = vmatprep.mubr.bf16.mxu0 %v245
    %1214 = vmatmul.mubr.bf16.gmra.mxu0 %v244
    %v1215 = vpop.f32.mrf.mxu0
    %v1216 = vadd.f32 %v1175, %v1215
    %v1217 = vpop.f32.mrf.mxu0
    %v1218 = vadd.f32 %v1177, %v1217
    %v1219 = vpop.f32.mrf.mxu0
    %v1220 = vpop.f32.mrf.mxu0
    %1221 = vdwg.mxu0
    %1222 = vmatprep.subr.bf16.mxu0 %v756
    %1223 = vmatpush1.bf16.msra.mxu0 %v755
    %1224 = vmatprep.subr.bf16.mxu0 %v754
    %1225 = vmatpush1.bf16.msra.mxu0 %v753
    %1226 = vmatprep.subr.bf16.mxu0 %v752
    %1227 = vmatpush1.bf16.msra.mxu0 %v751
    %1228 = vmatprep.subr.bf16.mxu0 %v750
    %1229 = vmatpush1.bf16.msra.mxu0 %v749
    %1230 = vmatprep.subr.bf16.mxu0 %v748
    %1231 = vmatpush1.bf16.msra.mxu0 %v747
    %1232 = vmatprep.subr.bf16.mxu0 %v746
    %1233 = vmatpush1.bf16.msra.mxu0 %v745
    %1234 = vmatprep.subr.bf16.mxu0 %v744
    %1235 = vmatpush1.bf16.msra.mxu0 %v743
    %1236 = vmatprep.subr.bf16.mxu0 %v742
    %1237 = vmatpush1.bf16.msra.mxu0 %v741
    %1238 = vmatprep.subr.bf16.mxu0 %v772
    %1239 = vmatpush2.bf16.msra.mxu0 %v771
    %1240 = vmatprep.subr.bf16.mxu0 %v770
    %1241 = vmatpush2.bf16.msra.mxu0 %v769
    %1242 = vmatprep.subr.bf16.mxu0 %v768
    %1243 = vmatpush2.bf16.msra.mxu0 %v767
    %1244 = vmatprep.subr.bf16.mxu0 %v766
    %1245 = vmatpush2.bf16.msra.mxu0 %v765
    %1246 = vmatprep.subr.bf16.mxu0 %v764
    %1247 = vmatpush2.bf16.msra.mxu0 %v763
    %1248 = vmatprep.subr.bf16.mxu0 %v762
    %1249 = vmatpush2.bf16.msra.mxu0 %v761
    %1250 = vmatprep.subr.bf16.mxu0 %v760
    %1251 = vmatpush2.bf16.msra.mxu0 %v759
    %1252 = vmatprep.subr.bf16.mxu0 %v758
    %1253 = vmatpush2.bf16.msra.mxu0 %v757
    %1254 = vmatprep.mubr.bf16.mxu0 %v247
    %1255 = vmatmul.mubr.bf16.gmra.mxu0 %v246
    %v1256 = vpop.f32.mrf.mxu0
    %v1257 = vadd.f32 %v1216, %v1256
    %v1258 = vpop.f32.mrf.mxu0
    %v1259 = vadd.f32 %v1218, %v1258
    %v1260 = vpop.f32.mrf.mxu0
    %v1261 = vpop.f32.mrf.mxu0
    %1262 = vdwg.mxu0
    %1263 = vmatprep.subr.bf16.mxu0 %v788
    %1264 = vmatpush1.bf16.msra.mxu0 %v787
    %1265 = vmatprep.subr.bf16.mxu0 %v786
    %1266 = vmatpush1.bf16.msra.mxu0 %v785
    %1267 = vmatprep.subr.bf16.mxu0 %v784
    %1268 = vmatpush1.bf16.msra.mxu0 %v783
    %1269 = vmatprep.subr.bf16.mxu0 %v782
    %1270 = vmatpush1.bf16.msra.mxu0 %v781
    %1271 = vmatprep.subr.bf16.mxu0 %v780
    %1272 = vmatpush1.bf16.msra.mxu0 %v779
    %1273 = vmatprep.subr.bf16.mxu0 %v778
    %1274 = vmatpush1.bf16.msra.mxu0 %v777
    %1275 = vmatprep.subr.bf16.mxu0 %v776
    %1276 = vmatpush1.bf16.msra.mxu0 %v775
    %1277 = vmatprep.subr.bf16.mxu0 %v774
    %1278 = vmatpush1.bf16.msra.mxu0 %v773
    %1279 = vmatprep.subr.bf16.mxu0 %v804
    %1280 = vmatpush2.bf16.msra.mxu0 %v803
    %1281 = vmatprep.subr.bf16.mxu0 %v802
    %1282 = vmatpush2.bf16.msra.mxu0 %v801
    %1283 = vmatprep.subr.bf16.mxu0 %v800
    %1284 = vmatpush2.bf16.msra.mxu0 %v799
    %1285 = vmatprep.subr.bf16.mxu0 %v798
    %1286 = vmatpush2.bf16.msra.mxu0 %v797
    %1287 = vmatprep.subr.bf16.mxu0 %v796
    %1288 = vmatpush2.bf16.msra.mxu0 %v795
    %1289 = vmatprep.subr.bf16.mxu0 %v794
    %1290 = vmatpush2.bf16.msra.mxu0 %v793
    %1291 = vmatprep.subr.bf16.mxu0 %v792
    %1292 = vmatpush2.bf16.msra.mxu0 %v791
    %1293 = vmatprep.subr.bf16.mxu0 %v790
    %1294 = vmatpush2.bf16.msra.mxu0 %v789
    %1295 = vmatprep.mubr.bf16.mxu0 %v249
    %1296 = vmatmul.mubr.bf16.gmra.mxu0 %v248
    %v1297 = vpop.f32.mrf.mxu0
    %v1298 = vadd.f32 %v1257, %v1297
    %v1299 = vpop.f32.mrf.mxu0
    %v1300 = vadd.f32 %v1259, %v1299
    %v1301 = vpop.f32.mrf.mxu0
    %v1302 = vpop.f32.mrf.mxu0
    %1303 = vdwg.mxu0
    %1304 = vmatprep.subr.bf16.mxu0 %v820
    %1305 = vmatpush1.bf16.msra.mxu0 %v819
    %1306 = vmatprep.subr.bf16.mxu0 %v818
    %1307 = vmatpush1.bf16.msra.mxu0 %v817
    %1308 = vmatprep.subr.bf16.mxu0 %v816
    %1309 = vmatpush1.bf16.msra.mxu0 %v815
    %1310 = vmatprep.subr.bf16.mxu0 %v814
    %1311 = vmatpush1.bf16.msra.mxu0 %v813
    %1312 = vmatprep.subr.bf16.mxu0 %v812
    %1313 = vmatpush1.bf16.msra.mxu0 %v811
    %1314 = vmatprep.subr.bf16.mxu0 %v810
    %1315 = vmatpush1.bf16.msra.mxu0 %v809
    %1316 = vmatprep.subr.bf16.mxu0 %v808
    %1317 = vmatpush1.bf16.msra.mxu0 %v807
    %1318 = vmatprep.subr.bf16.mxu0 %v806
    %1319 = vmatpush1.bf16.msra.mxu0 %v805
    %1320 = vmatprep.subr.bf16.mxu0 %v836
    %1321 = vmatpush2.bf16.msra.mxu0 %v835
    %1322 = vmatprep.subr.bf16.mxu0 %v834
    %1323 = vmatpush2.bf16.msra.mxu0 %v833
    %1324 = vmatprep.subr.bf16.mxu0 %v832
    %1325 = vmatpush2.bf16.msra.mxu0 %v831
    %1326 = vmatprep.subr.bf16.mxu0 %v830
    %1327 = vmatpush2.bf16.msra.mxu0 %v829
    %1328 = vmatprep.subr.bf16.mxu0 %v828
    %1329 = vmatpush2.bf16.msra.mxu0 %v827
    %1330 = vmatprep.subr.bf16.mxu0 %v826
    %1331 = vmatpush2.bf16.msra.mxu0 %v825
    %1332 = vmatprep.subr.bf16.mxu0 %v824
    %1333 = vmatpush2.bf16.msra.mxu0 %v823
    %1334 = vmatprep.subr.bf16.mxu0 %v822
    %1335 = vmatpush2.bf16.msra.mxu0 %v821
    %1336 = vmatprep.mubr.bf16.mxu0 %v251
    %1337 = vmatmul.mubr.bf16.gmra.mxu0 %v250
    %v1338 = vpop.f32.mrf.mxu0
    %v1339 = vadd.f32 %v1298, %v1338
    %v1340 = vpop.f32.mrf.mxu0
    %v1341 = vadd.f32 %v1300, %v1340
    %v1342 = vpop.f32.mrf.mxu0
    %v1343 = vpop.f32.mrf.mxu0
    %1344 = vdwg.mxu0
    %1345 = vmatprep.subr.bf16.mxu0 %v852
    %1346 = vmatpush1.bf16.msra.mxu0 %v851
    %1347 = vmatprep.subr.bf16.mxu0 %v850
    %1348 = vmatpush1.bf16.msra.mxu0 %v849
    %1349 = vmatprep.subr.bf16.mxu0 %v848
    %1350 = vmatpush1.bf16.msra.mxu0 %v847
    %1351 = vmatprep.subr.bf16.mxu0 %v846
    %1352 = vmatpush1.bf16.msra.mxu0 %v845
    %1353 = vmatprep.subr.bf16.mxu0 %v844
    %1354 = vmatpush1.bf16.msra.mxu0 %v843
    %1355 = vmatprep.subr.bf16.mxu0 %v842
    %1356 = vmatpush1.bf16.msra.mxu0 %v841
    %1357 = vmatprep.subr.bf16.mxu0 %v840
    %1358 = vmatpush1.bf16.msra.mxu0 %v839
    %1359 = vmatprep.subr.bf16.mxu0 %v838
    %1360 = vmatpush1.bf16.msra.mxu0 %v837
    %1361 = vmatprep.subr.bf16.mxu0 0
    %1362 = vmatpush2.bf16.msra.mxu0 0
    %1363 = vmatprep.subr.bf16.mxu0 0
    %1364 = vmatpush2.bf16.msra.mxu0 0
    %1365 = vmatprep.subr.bf16.mxu0 0
    %1366 = vmatpush2.bf16.msra.mxu0 0
    %1367 = vmatprep.subr.bf16.mxu0 0
    %1368 = vmatpush2.bf16.msra.mxu0 0
    %1369 = vmatprep.subr.bf16.mxu0 0
    %1370 = vmatpush2.bf16.msra.mxu0 0
    %1371 = vmatprep.subr.bf16.mxu0 0
    %1372 = vmatpush2.bf16.msra.mxu0 0
    %1373 = vmatprep.subr.bf16.mxu0 0
    %1374 = vmatpush2.bf16.msra.mxu0 0
    %1375 = vmatprep.subr.bf16.mxu0 0
    %1376 = vmatpush2.bf16.msra.mxu0 0
    %1377 = vmatprep.mubr.bf16.mxu0 0
    %1378 = vmatmul.mubr.bf16.gmra.mxu0 %v252
    %v1379 = vpop.f32.mrf.mxu0
    %v1380 = vadd.f32 %v1339, %v1379
    %v1381 = vpop.f32.mrf.mxu0
    %v1382 = vadd.f32 %v1341, %v1381
    %v1383 = vpop.f32.mrf.mxu0
    %v1384 = vpop.f32.mrf.mxu0
    %1385 = vdwg.mxu0
    %v1386 = vld [vmem:[%s2] sm:$0x3]
    %v1388 = vlaneseq
    %v1389 = vshrl.u32 %v1388, 7
    %v1390 = vsub.s32 0, %v1389
    %v1391 = vrot.slane %v1386, %v1390
    %v1392 = vlaneseq
    %v1393 = vshrl.u32 %v1392, 7
    %v1394 = vsub.s32 1, %v1393
    %v1395 = vrot.slane %v1386, %v1394
    %v1398 = vmul.f32 %v1380, %v1391
    %v1399 = vmul.f32 %v1382, %v1395
    %v1400 = vld [vmem:[%s3] sm:$0x3]
    %v1402 = vlaneseq
    %v1403 = vshrl.u32 %v1402, 7
    %v1404 = vsub.s32 0, %v1403
    %v1405 = vrot.slane %v1400, %v1404
    %v1406 = vlaneseq
    %v1407 = vshrl.u32 %v1406, 7
    %v1408 = vsub.s32 1, %v1407
    %v1409 = vrot.slane %v1400, %v1408
    %v1412 = vadd.f32 %v1398, %v1405
    %v1413 = vadd.f32 %v1399, %v1409
    %vm1414 = vcmp.gt.f32.partialorder %v1412, 0.0
    %vm1415 = vcmp.gt.f32.partialorder %v1413, 0.0
    %v1416 = vmul.f32 %v1412, 0.01
    %v1417 = vmul.f32 %v1413, 0.01
    %v1418 = vsel %vm1414, %v1412, %v1416
    %v1419 = vsel %vm1415, %v1413, %v1417
    %v1420 = vpack.c.bf16 %v1418, %v1418
    %v1421 = vpack.c.bf16 %v1419, %v1419
    %v1422 = vld [vmem:[%s4] sm:$0xf]
    %v1423 = vld [vmem:[%s4 + $0x4] sm:$0xf]
    %v1424 = vld [vmem:[%s4 + $0x8] sm:$0xf]
    %v1425 = vld [vmem:[%s4 + $0xc] sm:$0xf]
    %v1426 = vld [vmem:[%s4 + $0x10] sm:$0xf]
    %v1427 = vld [vmem:[%s4 + $0x14] sm:$0xf]
    %v1428 = vld [vmem:[%s4 + $0x18] sm:$0xf]
    %v1429 = vld [vmem:[%s4 + $0x1c] sm:$0xf]
    %v1430 = vld [vmem:[%s4 + $0x20] sm:$0xf]
    %v1431 = vld [vmem:[%s4 + $0x24] sm:$0xf]
    %v1432 = vld [vmem:[%s4 + $0x28] sm:$0xf]
    %v1433 = vld [vmem:[%s4 + $0x2c] sm:$0xf]
    %v1434 = vld [vmem:[%s4 + $0x30] sm:$0xf]
    %v1435 = vld [vmem:[%s4 + $0x34] sm:$0xf]
    %v1436 = vld [vmem:[%s4 + $0x38] sm:$0xf]
    %v1437 = vld [vmem:[%s4 + $0x3c] sm:$0xf]
    %v1438 = vld [vmem:[%s4 + $0x40] sm:$0xf]
    %v1439 = vld [vmem:[%s4 + $0x44] sm:$0xf]
    %v1440 = vld [vmem:[%s4 + $0x48] sm:$0xf]
    %v1441 = vld [vmem:[%s4 + $0x4c] sm:$0xf]
    %v1442 = vld [vmem:[%s4 + $0x50] sm:$0xf]
    %v1443 = vld [vmem:[%s4 + $0x54] sm:$0xf]
    %v1444 = vld [vmem:[%s4 + $0x58] sm:$0xf]
    %v1445 = vld [vmem:[%s4 + $0x5c] sm:$0xf]
    %v1446 = vld [vmem:[%s4 + $0x60] sm:$0xf]
    %v1447 = vld [vmem:[%s4 + $0x64] sm:$0xf]
    %v1448 = vld [vmem:[%s4 + $0x68] sm:$0xf]
    %v1449 = vld [vmem:[%s4 + $0x6c] sm:$0xf]
    %v1450 = vld [vmem:[%s4 + $0x70] sm:$0xf]
    %v1451 = vld [vmem:[%s4 + $0x74] sm:$0xf]
    %v1452 = vld [vmem:[%s4 + $0x78] sm:$0xf]
    %v1453 = vld [vmem:[%s4 + $0x7c] sm:$0xf]
    %v1454 = vld [vmem:[%s5] sm:$0x1]
    %v1456 = vlaneseq
    %v1457 = vshrl.u32 %v1456, 7
    %v1458 = vsub.s32 0, %v1457
    %v1459 = vrot.slane %v1454, %v1458
    %v1493 = vunpack.c.l.b16 %v1422
    %v1494 = vunpack.c.l.b16 %v1423
    %v1495 = vunpack.c.l.b16 %v1424
    %v1496 = vunpack.c.l.b16 %v1425
    %v1497 = vunpack.c.l.b16 %v1426
    %v1498 = vunpack.c.l.b16 %v1427
    %v1499 = vunpack.c.l.b16 %v1428
    %v1500 = vunpack.c.l.b16 %v1429
    %v1501 = vunpack.c.l.b16 %v1430
    %v1502 = vunpack.c.l.b16 %v1431
    %v1503 = vunpack.c.l.b16 %v1432
    %v1504 = vunpack.c.l.b16 %v1433
    %v1505 = vunpack.c.l.b16 %v1434
    %v1506 = vunpack.c.l.b16 %v1435
    %v1507 = vunpack.c.l.b16 %v1436
    %v1508 = vunpack.c.l.b16 %v1437
    %v1509 = vunpack.c.l.b16 %v1438
    %v1510 = vunpack.c.l.b16 %v1439
    %v1511 = vunpack.c.l.b16 %v1440
    %v1512 = vunpack.c.l.b16 %v1441
    %v1513 = vunpack.c.l.b16 %v1442
    %v1514 = vunpack.c.l.b16 %v1443
    %v1515 = vunpack.c.l.b16 %v1444
    %v1516 = vunpack.c.l.b16 %v1445
    %v1517 = vunpack.c.l.b16 %v1446
    %v1518 = vunpack.c.l.b16 %v1447
    %v1519 = vunpack.c.l.b16 %v1448
    %v1520 = vunpack.c.l.b16 %v1449
    %v1521 = vunpack.c.l.b16 %v1450
    %v1522 = vunpack.c.l.b16 %v1451
    %v1523 = vunpack.c.l.b16 %v1452
    %v1524 = vunpack.c.l.b16 %v1453
    %v1525 = vpack.c.b16 %v1494, %v1493
    %v1526 = vpack.c.b16 %v1496, %v1495
    %v1527 = vpack.c.b16 %v1498, %v1497
    %v1528 = vpack.c.b16 %v1500, %v1499
    %v1529 = vpack.c.b16 %v1502, %v1501
    %v1530 = vpack.c.b16 %v1504, %v1503
    %v1531 = vpack.c.b16 %v1506, %v1505
    %v1532 = vpack.c.b16 %v1508, %v1507
    %v1533 = vpack.c.b16 %v1510, %v1509
    %v1534 = vpack.c.b16 %v1512, %v1511
    %v1535 = vpack.c.b16 %v1514, %v1513
    %v1536 = vpack.c.b16 %v1516, %v1515
    %v1537 = vpack.c.b16 %v1518, %v1517
    %v1538 = vpack.c.b16 %v1520, %v1519
    %v1539 = vpack.c.b16 %v1522, %v1521
    %v1540 = vpack.c.b16 %v1524, %v1523
    %1557 = vmatprep.subr.bf16.mxu0 0
    %1558 = vmatpush1.bf16.msra.mxu0 %v1532
    %1559 = vmatprep.subr.bf16.mxu0 0
    %1560 = vmatpush1.bf16.msra.mxu0 %v1531
    %1561 = vmatprep.subr.bf16.mxu0 0
    %1562 = vmatpush1.bf16.msra.mxu0 %v1530
    %1563 = vmatprep.subr.bf16.mxu0 0
    %1564 = vmatpush1.bf16.msra.mxu0 %v1529
    %1565 = vmatprep.subr.bf16.mxu0 0
    %1566 = vmatpush1.bf16.msra.mxu0 %v1528
    %1567 = vmatprep.subr.bf16.mxu0 0
    %1568 = vmatpush1.bf16.msra.mxu0 %v1527
    %1569 = vmatprep.subr.bf16.mxu0 0
    %1570 = vmatpush1.bf16.msra.mxu0 %v1526
    %1571 = vmatprep.subr.bf16.mxu0 0
    %1572 = vmatpush1.bf16.msra.mxu0 %v1525
    %1573 = vmatprep.subr.bf16.mxu0 0
    %1574 = vmatpush2.bf16.msra.mxu0 %v1540
    %1575 = vmatprep.subr.bf16.mxu0 0
    %1576 = vmatpush2.bf16.msra.mxu0 %v1539
    %1577 = vmatprep.subr.bf16.mxu0 0
    %1578 = vmatpush2.bf16.msra.mxu0 %v1538
    %1579 = vmatprep.subr.bf16.mxu0 0
    %1580 = vmatpush2.bf16.msra.mxu0 %v1537
    %1581 = vmatprep.subr.bf16.mxu0 0
    %1582 = vmatpush2.bf16.msra.mxu0 %v1536
    %1583 = vmatprep.subr.bf16.mxu0 0
    %1584 = vmatpush2.bf16.msra.mxu0 %v1535
    %1585 = vmatprep.subr.bf16.mxu0 0
    %1586 = vmatpush2.bf16.msra.mxu0 %v1534
    %1587 = vmatprep.subr.bf16.mxu0 0
    %1588 = vmatpush2.bf16.msra.mxu0 %v1533
    %1589 = vmatprep.mubr.bf16.mxu0 %v1421
    %1590 = vmatmul.mubr.bf16.gmra.mxu0 %v1420
    %v1591 = vpop.f32.mrf.mxu0
    %v1592 = vadd.f32 %v1459, %v1591
    %v1593 = vpop.f32.mrf.mxu0
    %v1594 = vpop.f32.mrf.mxu0
    %v1595 = vpop.f32.mrf.mxu0
    %1596 = vdwg.mxu0
    %vm1597 = vcmp.gt.f32.partialorder %v1592, 0.0
    %v1598 = vmul.f32 %v1592, 0.01
    %v1599 = vsel %vm1597, %v1592, %v1598
    %v1600 = vpack.c.bf16 %v1599, %v1599
    %v1601 = vld [vmem:[%s6] sm:$0xf]
    %v1602 = vld [vmem:[%s6 + $0x4] sm:$0xf]
    %v1603 = vld [vmem:[%s6 + $0x8] sm:$0xf]
    %v1604 = vld [vmem:[%s6 + $0xc] sm:$0xf]
    %v1605 = vld [vmem:[%s6 + $0x10] sm:$0xf]
    %v1606 = vld [vmem:[%s6 + $0x14] sm:$0xf]
    %v1607 = vld [vmem:[%s6 + $0x18] sm:$0xf]
    %v1608 = vld [vmem:[%s6 + $0x1c] sm:$0xf]
    %v1609 = vld [vmem:[%s7] sm:$0x1]
    %v1611 = vlaneseq
    %v1612 = vshrl.u32 %v1611, 7
    %v1613 = vsub.s32 0, %v1612
    %v1614 = vrot.slane %v1609, %v1613
    %v1624 = vunpack.c.l.b16 %v1601
    %v1625 = vunpack.c.l.b16 %v1602
    %v1626 = vunpack.c.l.b16 %v1603
    %v1627 = vunpack.c.l.b16 %v1604
    %v1628 = vunpack.c.l.b16 %v1605
    %v1629 = vunpack.c.l.b16 %v1606
    %v1630 = vunpack.c.l.b16 %v1607
    %v1631 = vunpack.c.l.b16 %v1608
    %v1632 = vpack.c.b16 %v1625, %v1624
    %v1633 = vpack.c.b16 %v1627, %v1626
    %v1634 = vpack.c.b16 %v1629, %v1628
    %v1635 = vpack.c.b16 %v1631, %v1630
    %vm1640 = vcmask 523264
    %v1642 = vsel %vm1640, %v1600, 0
    %1644 = vmatprep.subr.bf16.mxu0 0
    %1645 = vmatpush1.bf16.msra.mxu0 0
    %1646 = vmatprep.subr.bf16.mxu0 0
    %1647 = vmatpush1.bf16.msra.mxu0 0
    %1648 = vmatprep.subr.bf16.mxu0 0
    %1649 = vmatpush1.bf16.msra.mxu0 0
    %1650 = vmatprep.subr.bf16.mxu0 0
    %1651 = vmatpush1.bf16.msra.mxu0 0
    %1652 = vmatprep.subr.bf16.mxu0 0
    %1653 = vmatpush1.bf16.msra.mxu0 %v1635
    %1654 = vmatprep.subr.bf16.mxu0 0
    %1655 = vmatpush1.bf16.msra.mxu0 %v1634
    %1656 = vmatprep.subr.bf16.mxu0 0
    %1657 = vmatpush1.bf16.msra.mxu0 %v1633
    %1658 = vmatprep.subr.bf16.mxu0 0
    %1659 = vmatpush1.bf16.msra.mxu0 %v1632
    %1660 = vmatprep.subr.bf16.mxu0 0
    %1661 = vmatpush2.bf16.msra.mxu0 0
    %1662 = vmatprep.subr.bf16.mxu0 0
    %1663 = vmatpush2.bf16.msra.mxu0 0
    %1664 = vmatprep.subr.bf16.mxu0 0
    %1665 = vmatpush2.bf16.msra.mxu0 0
    %1666 = vmatprep.subr.bf16.mxu0 0
    %1667 = vmatpush2.bf16.msra.mxu0 0
    %1668 = vmatprep.subr.bf16.mxu0 0
    %1669 = vmatpush2.bf16.msra.mxu0 0
    %1670 = vmatprep.subr.bf16.mxu0 0
    %1671 = vmatpush2.bf16.msra.mxu0 0
    %1672 = vmatprep.subr.bf16.mxu0 0
    %1673 = vmatpush2.bf16.msra.mxu0 0
    %1674 = vmatprep.subr.bf16.mxu0 0
    %1675 = vmatpush2.bf16.msra.mxu0 0
    %1676 = vmatprep.mubr.bf16.mxu0 0
    %1677 = vmatmul.mubr.bf16.gmra.mxu0 %v1642
    %v1678 = vpop.f32.mrf.mxu0
    %v1679 = vadd.f32 %v1614, %v1678
    %v1680 = vpop.f32.mrf.mxu0
    %v1681 = vpop.f32.mrf.mxu0
    %v1682 = vpop.f32.mrf.mxu0
    %1683 = vdwg.mxu0
    %vm1684 = vcmp.gt.f32.partialorder %v1679, 0.0
    %v1685 = vmul.f32 %v1679, 0.01
    %v1686 = vsel %vm1684, %v1679, %v1685
    %v1687 = vpack.c.bf16 %v1686, %v1686
    %v1688 = vld [vmem:[%s8] sm:$0xf]
    %v1689 = vld [vmem:[%s8 + $0x4] sm:$0xf]
    %v1690 = vld [vmem:[%s8 + $0x8] sm:$0x3]
    %v1691 = vld [vmem:[%s9] sm:$0x1]
    %v1693 = vlaneseq
    %v1694 = vshrl.u32 %v1693, 7
    %v1695 = vsub.s32 0, %v1694
    %v1696 = vrot.slane %v1691, %v1695
    %v1701 = vunpack.c.l.b16 %v1688
    %v1702 = vunpack.c.l.b16 %v1689
    %v1703 = vunpack.c.l.b16 %v1690
    %v1704 = vpack.c.b16 %v1702, %v1701
    %v1705 = vpack.c.b16 %v1703, %v1703
    %vm1707 = vcmask 162816
    %v1709 = vsel %vm1707, %v1687, 0
    %vm1711 = vcmask 1041408
    %v1713 = vsel %vm1711, %v1705, 0
    %1715 = vmatprep.subr.bf16.mxu0 0
    %1716 = vmatpush1.bf16.msra.mxu0 0
    %1717 = vmatprep.subr.bf16.mxu0 0
    %1718 = vmatpush1.bf16.msra.mxu0 0
    %1719 = vmatprep.subr.bf16.mxu0 0
    %1720 = vmatpush1.bf16.msra.mxu0 0
    %1721 = vmatprep.subr.bf16.mxu0 0
    %1722 = vmatpush1.bf16.msra.mxu0 0
    %1723 = vmatprep.subr.bf16.mxu0 0
    %1724 = vmatpush1.bf16.msra.mxu0 0
    %1725 = vmatprep.subr.bf16.mxu0 0
    %1726 = vmatpush1.bf16.msra.mxu0 0
    %1727 = vmatprep.subr.bf16.mxu0 0
    %1728 = vmatpush1.bf16.msra.mxu0 %v1713
    %1729 = vmatprep.subr.bf16.mxu0 0
    %1730 = vmatpush1.bf16.msra.mxu0 %v1704
    %1731 = vmatprep.subr.bf16.mxu0 0
    %1732 = vmatpush2.bf16.msra.mxu0 0
    %1733 = vmatprep.subr.bf16.mxu0 0
    %1734 = vmatpush2.bf16.msra.mxu0 0
    %1735 = vmatprep.subr.bf16.mxu0 0
    %1736 = vmatpush2.bf16.msra.mxu0 0
    %1737 = vmatprep.subr.bf16.mxu0 0
    %1738 = vmatpush2.bf16.msra.mxu0 0
    %1739 = vmatprep.subr.bf16.mxu0 0
    %1740 = vmatpush2.bf16.msra.mxu0 0
    %1741 = vmatprep.subr.bf16.mxu0 0
    %1742 = vmatpush2.bf16.msra.mxu0 0
    %1743 = vmatprep.subr.bf16.mxu0 0
    %1744 = vmatpush2.bf16.msra.mxu0 0
    %1745 = vmatprep.subr.bf16.mxu0 0
    %1746 = vmatpush2.bf16.msra.mxu0 0
    %1747 = vmatprep.mubr.bf16.mxu0 0
    %1748 = vmatmul.mubr.bf16.gmra.mxu0 %v1709
    %v1749 = vpop.f32.mrf.mxu0
    %v1750 = vadd.f32 %v1696, %v1749
    %v1751 = vpop.f32.mrf.mxu0
    %v1752 = vpop.f32.mrf.mxu0
    %v1753 = vpop.f32.mrf.mxu0
    %1754 = vdwg.mxu0
    %vm1755 = vcmp.gt.f32.partialorder %v1750, 0.0
    %v1756 = vmul.f32 %v1750, 0.01
    %v1757 = vsel %vm1755, %v1750, %v1756
    %v1758 = vpack.c.bf16 %v1757, %v1757
    %v1759 = vld [vmem:[%s10] sm:$0xff]
    %v1760 = vld [vmem:[%s10 + $0x8] sm:$0xff]
    %v1761 = vld [vmem:[%s10 + $0x10] sm:$0xff]
    %v1762 = vld [vmem:[%s10 + $0x18] sm:$0xff]
    %v1763 = vld [vmem:[%s10 + $0x20] sm:$0xff]
    %v1764 = vld [vmem:[%s10 + $0x28] sm:$0xff]
    %v1765 = vld [vmem:[%s10 + $0x30] sm:$0xff]
    %v1766 = vld [vmem:[%s10 + $0x38] sm:$0xff]
    %v1767 = vld [vmem:[%s11] sm:$0x3]
    %v1769 = vlaneseq
    %v1770 = vshrl.u32 %v1769, 7
    %v1771 = vsub.s32 0, %v1770
    %v1772 = vrot.slane %v1767, %v1771
    %v1773 = vlaneseq
    %v1774 = vshrl.u32 %v1773, 7
    %v1775 = vsub.s32 1, %v1774
    %v1776 = vrot.slane %v1767, %v1775
    %v1787 = vunpack.c.l.b16 %v1759
    %v1788 = vunpack.c.h.b16 %v1759
    %v1789 = vunpack.c.l.b16 %v1760
    %v1790 = vunpack.c.h.b16 %v1760
    %v1791 = vunpack.c.l.b16 %v1761
    %v1792 = vunpack.c.h.b16 %v1761
    %v1793 = vunpack.c.l.b16 %v1762
    %v1794 = vunpack.c.h.b16 %v1762
    %v1795 = vunpack.c.l.b16 %v1763
    %v1796 = vunpack.c.h.b16 %v1763
    %v1797 = vunpack.c.l.b16 %v1764
    %v1798 = vunpack.c.h.b16 %v1764
    %v1799 = vunpack.c.l.b16 %v1765
    %v1800 = vunpack.c.h.b16 %v1765
    %v1801 = vunpack.c.l.b16 %v1766
    %v1802 = vunpack.c.h.b16 %v1766
    %v1803 = vpack.c.b16 %v1789, %v1787
    %v1804 = vpack.c.b16 %v1790, %v1788
    %v1805 = vpack.c.b16 %v1793, %v1791
    %v1806 = vpack.c.b16 %v1794, %v1792
    %v1807 = vpack.c.b16 %v1797, %v1795
    %v1808 = vpack.c.b16 %v1798, %v1796
    %v1809 = vpack.c.b16 %v1801, %v1799
    %v1810 = vpack.c.b16 %v1802, %v1800
    %v1820 = vsel %vm1640, %v1758, 0
    %1822 = vmatprep.subr.bf16.mxu0 0
    %1823 = vmatpush1.bf16.msra.mxu0 0
    %1824 = vmatprep.subr.bf16.mxu0 0
    %1825 = vmatpush1.bf16.msra.mxu0 0
    %1826 = vmatprep.subr.bf16.mxu0 0
    %1827 = vmatpush1.bf16.msra.mxu0 0
    %1828 = vmatprep.subr.bf16.mxu0 0
    %1829 = vmatpush1.bf16.msra.mxu0 0
    %1830 = vmatprep.subr.bf16.mxu0 %v1810
    %1831 = vmatpush1.bf16.msra.mxu0 %v1809
    %1832 = vmatprep.subr.bf16.mxu0 %v1808
    %1833 = vmatpush1.bf16.msra.mxu0 %v1807
    %1834 = vmatprep.subr.bf16.mxu0 %v1806
    %1835 = vmatpush1.bf16.msra.mxu0 %v1805
    %1836 = vmatprep.subr.bf16.mxu0 %v1804
    %1837 = vmatpush1.bf16.msra.mxu0 %v1803
    %1838 = vmatprep.subr.bf16.mxu0 0
    %1839 = vmatpush2.bf16.msra.mxu0 0
    %1840 = vmatprep.subr.bf16.mxu0 0
    %1841 = vmatpush2.bf16.msra.mxu0 0
    %1842 = vmatprep.subr.bf16.mxu0 0
    %1843 = vmatpush2.bf16.msra.mxu0 0
    %1844 = vmatprep.subr.bf16.mxu0 0
    %1845 = vmatpush2.bf16.msra.mxu0 0
    %1846 = vmatprep.subr.bf16.mxu0 0
    %1847 = vmatpush2.bf16.msra.mxu0 0
    %1848 = vmatprep.subr.bf16.mxu0 0
    %1849 = vmatpush2.bf16.msra.mxu0 0
    %1850 = vmatprep.subr.bf16.mxu0 0
    %1851 = vmatpush2.bf16.msra.mxu0 0
    %1852 = vmatprep.subr.bf16.mxu0 0
    %1853 = vmatpush2.bf16.msra.mxu0 0
    %1854 = vmatprep.mubr.bf16.mxu0 0
    %1855 = vmatmul.mubr.bf16.gmra.mxu0 %v1820
    %v1856 = vpop.f32.mrf.mxu0
    %v1857 = vadd.f32 %v1772, %v1856
    %v1858 = vpop.f32.mrf.mxu0
    %v1859 = vadd.f32 %v1776, %v1858
    %v1860 = vpop.f32.mrf.mxu0
    %v1861 = vpop.f32.mrf.mxu0
    %1862 = vdwg.mxu0
    %vm1863 = vcmp.gt.f32.partialorder %v1857, 0.0
    %vm1864 = vcmp.gt.f32.partialorder %v1859, 0.0
    %v1865 = vmul.f32 %v1857, 0.01
    %v1866 = vmul.f32 %v1859, 0.01
    %v1867 = vsel %vm1863, %v1857, %v1865
    %v1868 = vsel %vm1864, %v1859, %v1866
    %v1869 = vpack.c.bf16 %v1867, %v1867
    %v1870 = vpack.c.bf16 %v1868, %v1868
    %v1871 = vld [vmem:[#allocation5] sm:$0xff]
    %v1872 = vld [vmem:[#allocation5 + $0x8] sm:$0xff]
    %v1873 = vld [vmem:[#allocation5 + $0x10] sm:$0xff]
    %v1874 = vld [vmem:[#allocation5 + $0x18] sm:$0xff]
    %v1875 = vld [vmem:[#allocation5 + $0x20] sm:$0xff]
    %v1876 = vld [vmem:[#allocation5 + $0x28] sm:$0xff]
    %v1877 = vld [vmem:[#allocation5 + $0x30] sm:$0xff]
    %v1878 = vld [vmem:[#allocation5 + $0x38] sm:$0xff]
    %v1879 = vld [vmem:[#allocation5 + $0x40] sm:$0xff]
    %v1880 = vld [vmem:[#allocation5 + $0x48] sm:$0xff]
    %v1881 = vld [vmem:[#allocation5 + $0x50] sm:$0xff]
    %v1882 = vld [vmem:[#allocation5 + $0x58] sm:$0xff]
    %v1883 = vld [vmem:[#allocation5 + $0x60] sm:$0xff]
    %v1884 = vld [vmem:[#allocation5 + $0x68] sm:$0xff]
    %v1885 = vld [vmem:[#allocation5 + $0x70] sm:$0xff]
    %v1886 = vld [vmem:[#allocation5 + $0x78] sm:$0xff]
    %v1887 = vld [vmem:[#allocation5 + $0x80] sm:$0xff]
    %v1888 = vld [vmem:[#allocation5 + $0x88] sm:$0xff]
    %v1889 = vld [vmem:[#allocation5 + $0x90] sm:$0xff]
    %v1890 = vld [vmem:[#allocation5 + $0x98] sm:$0xff]
    %v1891 = vld [vmem:[#allocation5 + $0xa0] sm:$0xff]
    %v1892 = vld [vmem:[#allocation5 + $0xa8] sm:$0xff]
    %v1893 = vld [vmem:[#allocation5 + $0xb0] sm:$0xff]
    %v1894 = vld [vmem:[#allocation5 + $0xb8] sm:$0xff]
    %v1895 = vld [vmem:[#allocation5 + $0xc0] sm:$0xff]
    %v1896 = vld [vmem:[#allocation5 + $0xc8] sm:$0xff]
    %v1897 = vld [vmem:[#allocation5 + $0xd0] sm:$0xff]
    %v1898 = vld [vmem:[#allocation5 + $0xd8] sm:$0xff]
    %v1899 = vld [vmem:[#allocation5 + $0xe0] sm:$0xff]
    %v1900 = vld [vmem:[#allocation5 + $0xe8] sm:$0xff]
    %v1901 = vld [vmem:[#allocation5 + $0xf0] sm:$0xff]
    %v1902 = vld [vmem:[#allocation5 + $0xf8] sm:$0xff]
    %v1903 = vld [vmem:[#allocation5 + $0x100] sm:$0xff]
    %v1904 = vld [vmem:[#allocation5 + $0x108] sm:$0xff]
    %v1905 = vld [vmem:[#allocation5 + $0x110] sm:$0xff]
    %v1906 = vld [vmem:[#allocation5 + $0x118] sm:$0xff]
    %v1907 = vld [vmem:[#allocation5 + $0x120] sm:$0xff]
    %v1908 = vld [vmem:[#allocation5 + $0x128] sm:$0xff]
    %v1909 = vld [vmem:[#allocation5 + $0x130] sm:$0xff]
    %v1910 = vld [vmem:[#allocation5 + $0x138] sm:$0xff]
    %v1911 = vld [vmem:[#allocation5 + $0x140] sm:$0xff]
    %v1912 = vld [vmem:[#allocation5 + $0x148] sm:$0xff]
    %v1913 = vld [vmem:[#allocation5 + $0x150] sm:$0xff]
    %v1914 = vld [vmem:[#allocation5 + $0x158] sm:$0xff]
    %v1915 = vld [vmem:[#allocation5 + $0x160] sm:$0xff]
    %v1916 = vld [vmem:[#allocation5 + $0x168] sm:$0xff]
    %v1917 = vld [vmem:[#allocation5 + $0x170] sm:$0xff]
    %v1918 = vld [vmem:[#allocation5 + $0x178] sm:$0xff]
    %v1919 = vld [vmem:[#allocation5 + $0x180] sm:$0xff]
    %v1920 = vld [vmem:[#allocation5 + $0x188] sm:$0xff]
    %v1921 = vld [vmem:[#allocation5 + $0x190] sm:$0xff]
    %v1922 = vld [vmem:[#allocation5 + $0x198] sm:$0xff]
    %v1923 = vld [vmem:[#allocation5 + $0x1a0] sm:$0xff]
    %v1924 = vld [vmem:[#allocation5 + $0x1a8] sm:$0xff]
    %v1925 = vld [vmem:[#allocation5 + $0x1b0] sm:$0xff]
    %v1926 = vld [vmem:[#allocation5 + $0x1b8] sm:$0xff]
    %v1927 = vld [vmem:[#allocation5 + $0x1c0] sm:$0xff]
    %v1928 = vld [vmem:[#allocation5 + $0x1c8] sm:$0xff]
    %v1929 = vld [vmem:[#allocation5 + $0x1d0] sm:$0xff]
    %v1930 = vld [vmem:[#allocation5 + $0x1d8] sm:$0xff]
    %v1931 = vld [vmem:[#allocation5 + $0x1e0] sm:$0xff]
    %v1932 = vld [vmem:[#allocation5 + $0x1e8] sm:$0xff]
    %v1933 = vld [vmem:[#allocation5 + $0x1f0] sm:$0xff]
    %v1934 = vld [vmem:[#allocation5 + $0x1f8] sm:$0xff]
    %v1935 = vld [vmem:[#allocation5 + $0x200] sm:$0xff]
    %v1936 = vld [vmem:[#allocation5 + $0x208] sm:$0xff]
    %v1937 = vld [vmem:[#allocation5 + $0x210] sm:$0xff]
    %v1938 = vld [vmem:[#allocation5 + $0x218] sm:$0xff]
    %v1939 = vld [vmem:[#allocation5 + $0x220] sm:$0xff]
    %v1940 = vld [vmem:[#allocation5 + $0x228] sm:$0xff]
    %v1941 = vld [vmem:[#allocation5 + $0x230] sm:$0xff]
    %v1942 = vld [vmem:[#allocation5 + $0x238] sm:$0xff]
    %v1943 = vld [vmem:[#allocation5 + $0x240] sm:$0xff]
    %v1944 = vld [vmem:[#allocation5 + $0x248] sm:$0xff]
    %v1945 = vld [vmem:[#allocation5 + $0x250] sm:$0xff]
    %v1946 = vld [vmem:[#allocation5 + $0x258] sm:$0xff]
    %v1947 = vld [vmem:[#allocation5 + $0x260] sm:$0xff]
    %v1948 = vld [vmem:[#allocation5 + $0x268] sm:$0xff]
    %v1949 = vld [vmem:[#allocation5 + $0x270] sm:$0xff]
    %v1950 = vld [vmem:[#allocation5 + $0x278] sm:$0xff]
    %v1951 = vld [vmem:[#allocation5 + $0x280] sm:$0xff]
    %v1952 = vld [vmem:[#allocation5 + $0x288] sm:$0xff]
    %v1953 = vld [vmem:[#allocation5 + $0x290] sm:$0xff]
    %v1954 = vld [vmem:[#allocation5 + $0x298] sm:$0xff]
    %v1955 = vld [vmem:[#allocation5 + $0x2a0] sm:$0xff]
    %v1956 = vld [vmem:[#allocation5 + $0x2a8] sm:$0xff]
    %v1957 = vld [vmem:[#allocation5 + $0x2b0] sm:$0xff]
    %v1958 = vld [vmem:[#allocation5 + $0x2b8] sm:$0xff]
    %v1959 = vld [vmem:[#allocation5 + $0x2c0] sm:$0xff]
    %v1960 = vld [vmem:[#allocation5 + $0x2c8] sm:$0xff]
    %v1961 = vld [vmem:[#allocation5 + $0x2d0] sm:$0xff]
    %v1962 = vld [vmem:[#allocation5 + $0x2d8] sm:$0xff]
    %v1963 = vld [vmem:[#allocation5 + $0x2e0] sm:$0xff]
    %v1964 = vld [vmem:[#allocation5 + $0x2e8] sm:$0xff]
    %v1965 = vld [vmem:[#allocation5 + $0x2f0] sm:$0xff]
    %v1966 = vld [vmem:[#allocation5 + $0x2f8] sm:$0xff]
    %v1967 = vld [vmem:[#allocation5 + $0x300] sm:$0xff]
    %v1968 = vld [vmem:[#allocation5 + $0x308] sm:$0xff]
    %v1969 = vld [vmem:[#allocation5 + $0x310] sm:$0xff]
    %v1970 = vld [vmem:[#allocation5 + $0x318] sm:$0xff]
    %v1971 = vld [vmem:[#allocation5 + $0x320] sm:$0xff]
    %v1972 = vld [vmem:[#allocation5 + $0x328] sm:$0xff]
    %v1973 = vld [vmem:[#allocation5 + $0x330] sm:$0xff]
    %v1974 = vld [vmem:[#allocation5 + $0x338] sm:$0xff]
    %v1975 = vld [vmem:[#allocation5 + $0x340] sm:$0xff]
    %v1976 = vld [vmem:[#allocation5 + $0x348] sm:$0xff]
    %v1977 = vld [vmem:[#allocation5 + $0x350] sm:$0xff]
    %v1978 = vld [vmem:[#allocation5 + $0x358] sm:$0xff]
    %v1979 = vld [vmem:[#allocation5 + $0x360] sm:$0xff]
    %v1980 = vld [vmem:[#allocation5 + $0x368] sm:$0xff]
    %v1981 = vld [vmem:[#allocation5 + $0x370] sm:$0xff]
    %v1982 = vld [vmem:[#allocation5 + $0x378] sm:$0xff]
    %v1983 = vld [vmem:[#allocation5 + $0x380] sm:$0xff]
    %v1984 = vld [vmem:[#allocation5 + $0x388] sm:$0xff]
    %v1985 = vld [vmem:[#allocation5 + $0x390] sm:$0xff]
    %v1986 = vld [vmem:[#allocation5 + $0x398] sm:$0xff]
    %v1987 = vld [vmem:[#allocation5 + $0x3a0] sm:$0xff]
    %v1988 = vld [vmem:[#allocation5 + $0x3a8] sm:$0xff]
    %v1989 = vld [vmem:[#allocation5 + $0x3b0] sm:$0xff]
    %v1990 = vld [vmem:[#allocation5 + $0x3b8] sm:$0xff]
    %v1991 = vld [vmem:[#allocation5 + $0x3c0] sm:$0xff]
    %v1992 = vld [vmem:[#allocation5 + $0x3c8] sm:$0xff]
    %v1993 = vld [vmem:[#allocation5 + $0x3d0] sm:$0xff]
    %v1994 = vld [vmem:[#allocation5 + $0x3d8] sm:$0xff]
    %v1995 = vld [vmem:[#allocation5 + $0x3e0] sm:$0xff]
    %v1996 = vld [vmem:[#allocation5 + $0x3e8] sm:$0xff]
    %v1997 = vld [vmem:[#allocation5 + $0x3f0] sm:$0xff]
    %v1998 = vld [vmem:[#allocation5 + $0x3f8] sm:$0xff]
    %v1999 = vld [vmem:[#allocation5 + $0x400] sm:$0xff]
    %v2000 = vld [vmem:[#allocation5 + $0x408] sm:$0xff]
    %v2001 = vld [vmem:[#allocation5 + $0x410] sm:$0xff]
    %v2002 = vld [vmem:[#allocation5 + $0x418] sm:$0xff]
    %v2003 = vld [vmem:[#allocation5 + $0x420] sm:$0xff]
    %v2004 = vld [vmem:[#allocation5 + $0x428] sm:$0xff]
    %v2005 = vld [vmem:[#allocation5 + $0x430] sm:$0xff]
    %v2006 = vld [vmem:[#allocation5 + $0x438] sm:$0xff]
    %v2007 = vld [vmem:[#allocation5 + $0x440] sm:$0xff]
    %v2008 = vld [vmem:[#allocation5 + $0x448] sm:$0xff]
    %v2009 = vld [vmem:[#allocation5 + $0x450] sm:$0xff]
    %v2010 = vld [vmem:[#allocation5 + $0x458] sm:$0xff]
    %v2011 = vld [vmem:[#allocation5 + $0x460] sm:$0xff]
    %v2012 = vld [vmem:[#allocation5 + $0x468] sm:$0xff]
    %v2013 = vld [vmem:[#allocation5 + $0x470] sm:$0xff]
    %v2014 = vld [vmem:[#allocation5 + $0x478] sm:$0xff]
    %v2015 = vld [vmem:[#allocation5 + $0x480] sm:$0xff]
    %v2016 = vld [vmem:[#allocation5 + $0x488] sm:$0xff]
    %v2017 = vld [vmem:[#allocation5 + $0x490] sm:$0xff]
    %v2018 = vld [vmem:[#allocation5 + $0x498] sm:$0xff]
    %v2019 = vld [vmem:[#allocation5 + $0x4a0] sm:$0xff]
    %v2020 = vld [vmem:[#allocation5 + $0x4a8] sm:$0xff]
    %v2021 = vld [vmem:[#allocation5 + $0x4b0] sm:$0xff]
    %v2022 = vld [vmem:[#allocation5 + $0x4b8] sm:$0xff]
    %v2023 = vld [vmem:[#allocation5 + $0x4c0] sm:$0xff]
    %v2024 = vld [vmem:[#allocation5 + $0x4c8] sm:$0xff]
    %v2025 = vld [vmem:[#allocation5 + $0x4d0] sm:$0xff]
    %v2026 = vld [vmem:[#allocation5 + $0x4d8] sm:$0xff]
    %v2027 = vld [vmem:[#allocation5 + $0x4e0] sm:$0xff]
    %v2028 = vld [vmem:[#allocation5 + $0x4e8] sm:$0xff]
    %v2029 = vld [vmem:[#allocation5 + $0x4f0] sm:$0xff]
    %v2030 = vld [vmem:[#allocation5 + $0x4f8] sm:$0xff]
    %v2031 = vld [vmem:[#allocation5 + $0x500] sm:$0xff]
    %v2032 = vld [vmem:[#allocation5 + $0x508] sm:$0xff]
    %v2033 = vld [vmem:[#allocation5 + $0x510] sm:$0xff]
    %v2034 = vld [vmem:[#allocation5 + $0x518] sm:$0xff]
    %v2035 = vld [vmem:[#allocation5 + $0x520] sm:$0xff]
    %v2036 = vld [vmem:[#allocation5 + $0x528] sm:$0xff]
    %v2037 = vld [vmem:[#allocation5 + $0x530] sm:$0xff]
    %v2038 = vld [vmem:[#allocation5 + $0x538] sm:$0xff]
    %v2039 = vld [vmem:[#allocation5 + $0x540] sm:$0xff]
    %v2040 = vld [vmem:[#allocation5 + $0x548] sm:$0xff]
    %v2041 = vld [vmem:[#allocation5 + $0x550] sm:$0xff]
    %v2042 = vld [vmem:[#allocation5 + $0x558] sm:$0xff]
    %v2043 = vld [vmem:[#allocation5 + $0x560] sm:$0xff]
    %v2044 = vld [vmem:[#allocation5 + $0x568] sm:$0xff]
    %v2045 = vld [vmem:[#allocation5 + $0x570] sm:$0xff]
    %v2046 = vld [vmem:[#allocation5 + $0x578] sm:$0xff]
    %v2047 = vld [vmem:[#allocation5 + $0x580] sm:$0xff]
    %v2048 = vld [vmem:[#allocation5 + $0x588] sm:$0xff]
    %v2049 = vld [vmem:[#allocation5 + $0x590] sm:$0xff]
    %v2050 = vld [vmem:[#allocation5 + $0x598] sm:$0xff]
    %v2051 = vld [vmem:[#allocation5 + $0x5a0] sm:$0xff]
    %v2052 = vld [vmem:[#allocation5 + $0x5a8] sm:$0xff]
    %v2053 = vld [vmem:[#allocation5 + $0x5b0] sm:$0xff]
    %v2054 = vld [vmem:[#allocation5 + $0x5b8] sm:$0xff]
    %v2055 = vld [vmem:[#allocation5 + $0x5c0] sm:$0xff]
    %v2056 = vld [vmem:[#allocation5 + $0x5c8] sm:$0xff]
    %v2057 = vld [vmem:[#allocation5 + $0x5d0] sm:$0xff]
    %v2058 = vld [vmem:[#allocation5 + $0x5d8] sm:$0xff]
    %v2059 = vld [vmem:[#allocation5 + $0x5e0] sm:$0xff]
    %v2060 = vld [vmem:[#allocation5 + $0x5e8] sm:$0xff]
    %v2061 = vld [vmem:[#allocation5 + $0x5f0] sm:$0xff]
    %v2062 = vld [vmem:[#allocation5 + $0x5f8] sm:$0xff]
    %v2063 = vld [vmem:[#allocation5 + $0x600] sm:$0xff]
    %v2064 = vld [vmem:[#allocation5 + $0x608] sm:$0xff]
    %v2065 = vld [vmem:[#allocation5 + $0x610] sm:$0xff]
    %v2066 = vld [vmem:[#allocation5 + $0x618] sm:$0xff]
    %v2067 = vld [vmem:[#allocation5 + $0x620] sm:$0xff]
    %v2068 = vld [vmem:[#allocation5 + $0x628] sm:$0xff]
    %v2069 = vld [vmem:[#allocation5 + $0x630] sm:$0xff]
    %v2070 = vld [vmem:[#allocation5 + $0x638] sm:$0xff]
    %v2071 = vunpack.c.l.s8.bf16 %v1871
    %v2072 = vunpack.c.l.s8.bf16 %v1872
    %v2073 = vunpack.c.l.s8.bf16 %v1873
    %v2074 = vunpack.c.l.s8.bf16 %v1874
    %v2075 = vunpack.c.l.s8.bf16 %v1875
    %v2076 = vunpack.c.l.s8.bf16 %v1876
    %v2077 = vunpack.c.l.s8.bf16 %v1877
    %v2078 = vunpack.c.l.s8.bf16 %v1878
    %v2079 = vunpack.c.l.s8.bf16 %v1879
    %v2080 = vunpack.c.l.s8.bf16 %v1880
    %v2081 = vunpack.c.l.s8.bf16 %v1881
    %v2082 = vunpack.c.l.s8.bf16 %v1882
    %v2083 = vunpack.c.l.s8.bf16 %v1883
    %v2084 = vunpack.c.l.s8.bf16 %v1884
    %v2085 = vunpack.c.l.s8.bf16 %v1885
    %v2086 = vunpack.c.l.s8.bf16 %v1886
    %v2087 = vunpack.c.l.s8.bf16 %v1887
    %v2088 = vunpack.c.l.s8.bf16 %v1888
    %v2089 = vunpack.c.l.s8.bf16 %v1889
    %v2090 = vunpack.c.l.s8.bf16 %v1890
    %v2091 = vunpack.c.l.s8.bf16 %v1891
    %v2092 = vunpack.c.l.s8.bf16 %v1892
    %v2093 = vunpack.c.l.s8.bf16 %v1893
    %v2094 = vunpack.c.l.s8.bf16 %v1894
    %v2095 = vunpack.c.l.s8.bf16 %v1895
    %v2096 = vunpack.c.h.s8.bf16 %v1871
    %v2097 = vunpack.c.h.s8.bf16 %v1872
    %v2098 = vunpack.c.h.s8.bf16 %v1873
    %v2099 = vunpack.c.h.s8.bf16 %v1874
    %v2100 = vunpack.c.h.s8.bf16 %v1875
    %v2101 = vunpack.c.h.s8.bf16 %v1876
    %v2102 = vunpack.c.h.s8.bf16 %v1877
    %v2103 = vunpack.c.h.s8.bf16 %v1878
    %v2104 = vunpack.c.h.s8.bf16 %v1879
    %v2105 = vunpack.c.h.s8.bf16 %v1880
    %v2106 = vunpack.c.h.s8.bf16 %v1881
    %v2107 = vunpack.c.h.s8.bf16 %v1882
    %v2108 = vunpack.c.h.s8.bf16 %v1883
    %v2109 = vunpack.c.h.s8.bf16 %v1884
    %v2110 = vunpack.c.h.s8.bf16 %v1885
    %v2111 = vunpack.c.h.s8.bf16 %v1886
    %v2112 = vunpack.c.h.s8.bf16 %v1887
    %v2113 = vunpack.c.h.s8.bf16 %v1888
    %v2114 = vunpack.c.h.s8.bf16 %v1889
    %v2115 = vunpack.c.h.s8.bf16 %v1890
    %v2116 = vunpack.c.h.s8.bf16 %v1891
    %v2117 = vunpack.c.h.s8.bf16 %v1892
    %v2118 = vunpack.c.h.s8.bf16 %v1893
    %v2119 = vunpack.c.h.s8.bf16 %v1894
    %v2120 = vunpack.c.h.s8.bf16 %v1895
    %v2121 = vunpack.c.l.s8.bf16 %v1896
    %v2122 = vunpack.c.l.s8.bf16 %v1897
    %v2123 = vunpack.c.l.s8.bf16 %v1898
    %v2124 = vunpack.c.l.s8.bf16 %v1899
    %v2125 = vunpack.c.l.s8.bf16 %v1900
    %v2126 = vunpack.c.l.s8.bf16 %v1901
    %v2127 = vunpack.c.l.s8.bf16 %v1902
    %v2128 = vunpack.c.l.s8.bf16 %v1903
    %v2129 = vunpack.c.l.s8.bf16 %v1904
    %v2130 = vunpack.c.l.s8.bf16 %v1905
    %v2131 = vunpack.c.l.s8.bf16 %v1906
    %v2132 = vunpack.c.l.s8.bf16 %v1907
    %v2133 = vunpack.c.l.s8.bf16 %v1908
    %v2134 = vunpack.c.l.s8.bf16 %v1909
    %v2135 = vunpack.c.l.s8.bf16 %v1910
    %v2136 = vunpack.c.l.s8.bf16 %v1911
    %v2137 = vunpack.c.l.s8.bf16 %v1912
    %v2138 = vunpack.c.l.s8.bf16 %v1913
    %v2139 = vunpack.c.l.s8.bf16 %v1914
    %v2140 = vunpack.c.l.s8.bf16 %v1915
    %v2141 = vunpack.c.l.s8.bf16 %v1916
    %v2142 = vunpack.c.l.s8.bf16 %v1917
    %v2143 = vunpack.c.l.s8.bf16 %v1918
    %v2144 = vunpack.c.l.s8.bf16 %v1919
    %v2145 = vunpack.c.l.s8.bf16 %v1920
    %v2146 = vunpack.c.h.s8.bf16 %v1896
    %v2147 = vunpack.c.h.s8.bf16 %v1897
    %v2148 = vunpack.c.h.s8.bf16 %v1898
    %v2149 = vunpack.c.h.s8.bf16 %v1899
    %v2150 = vunpack.c.h.s8.bf16 %v1900
    %v2151 = vunpack.c.h.s8.bf16 %v1901
    %v2152 = vunpack.c.h.s8.bf16 %v1902
    %v2153 = vunpack.c.h.s8.bf16 %v1903
    %v2154 = vunpack.c.h.s8.bf16 %v1904
    %v2155 = vunpack.c.h.s8.bf16 %v1905
    %v2156 = vunpack.c.h.s8.bf16 %v1906
    %v2157 = vunpack.c.h.s8.bf16 %v1907
    %v2158 = vunpack.c.h.s8.bf16 %v1908
    %v2159 = vunpack.c.h.s8.bf16 %v1909
    %v2160 = vunpack.c.h.s8.bf16 %v1910
    %v2161 = vunpack.c.h.s8.bf16 %v1911
    %v2162 = vunpack.c.h.s8.bf16 %v1912
    %v2163 = vunpack.c.h.s8.bf16 %v1913
    %v2164 = vunpack.c.h.s8.bf16 %v1914
    %v2165 = vunpack.c.h.s8.bf16 %v1915
    %v2166 = vunpack.c.h.s8.bf16 %v1916
    %v2167 = vunpack.c.h.s8.bf16 %v1917
    %v2168 = vunpack.c.h.s8.bf16 %v1918
    %v2169 = vunpack.c.h.s8.bf16 %v1919
    %v2170 = vunpack.c.h.s8.bf16 %v1920
    %v2171 = vunpack.c.l.s8.bf16 %v1921
    %v2172 = vunpack.c.l.s8.bf16 %v1922
    %v2173 = vunpack.c.l.s8.bf16 %v1923
    %v2174 = vunpack.c.l.s8.bf16 %v1924
    %v2175 = vunpack.c.l.s8.bf16 %v1925
    %v2176 = vunpack.c.l.s8.bf16 %v1926
    %v2177 = vunpack.c.l.s8.bf16 %v1927
    %v2178 = vunpack.c.l.s8.bf16 %v1928
    %v2179 = vunpack.c.l.s8.bf16 %v1929
    %v2180 = vunpack.c.l.s8.bf16 %v1930
    %v2181 = vunpack.c.l.s8.bf16 %v1931
    %v2182 = vunpack.c.l.s8.bf16 %v1932
    %v2183 = vunpack.c.l.s8.bf16 %v1933
    %v2184 = vunpack.c.l.s8.bf16 %v1934
    %v2185 = vunpack.c.l.s8.bf16 %v1935
    %v2186 = vunpack.c.l.s8.bf16 %v1936
    %v2187 = vunpack.c.l.s8.bf16 %v1937
    %v2188 = vunpack.c.l.s8.bf16 %v1938
    %v2189 = vunpack.c.l.s8.bf16 %v1939
    %v2190 = vunpack.c.l.s8.bf16 %v1940
    %v2191 = vunpack.c.l.s8.bf16 %v1941
    %v2192 = vunpack.c.l.s8.bf16 %v1942
    %v2193 = vunpack.c.l.s8.bf16 %v1943
    %v2194 = vunpack.c.l.s8.bf16 %v1944
    %v2195 = vunpack.c.l.s8.bf16 %v1945
    %v2196 = vunpack.c.h.s8.bf16 %v1921
    %v2197 = vunpack.c.h.s8.bf16 %v1922
    %v2198 = vunpack.c.h.s8.bf16 %v1923
    %v2199 = vunpack.c.h.s8.bf16 %v1924
    %v2200 = vunpack.c.h.s8.bf16 %v1925
    %v2201 = vunpack.c.h.s8.bf16 %v1926
    %v2202 = vunpack.c.h.s8.bf16 %v1927
    %v2203 = vunpack.c.h.s8.bf16 %v1928
    %v2204 = vunpack.c.h.s8.bf16 %v1929
    %v2205 = vunpack.c.h.s8.bf16 %v1930
    %v2206 = vunpack.c.h.s8.bf16 %v1931
    %v2207 = vunpack.c.h.s8.bf16 %v1932
    %v2208 = vunpack.c.h.s8.bf16 %v1933
    %v2209 = vunpack.c.h.s8.bf16 %v1934
    %v2210 = vunpack.c.h.s8.bf16 %v1935
    %v2211 = vunpack.c.h.s8.bf16 %v1936
    %v2212 = vunpack.c.h.s8.bf16 %v1937
    %v2213 = vunpack.c.h.s8.bf16 %v1938
    %v2214 = vunpack.c.h.s8.bf16 %v1939
    %v2215 = vunpack.c.h.s8.bf16 %v1940
    %v2216 = vunpack.c.h.s8.bf16 %v1941
    %v2217 = vunpack.c.h.s8.bf16 %v1942
    %v2218 = vunpack.c.h.s8.bf16 %v1943
    %v2219 = vunpack.c.h.s8.bf16 %v1944
    %v2220 = vunpack.c.h.s8.bf16 %v1945
    %v2221 = vunpack.c.l.s8.bf16 %v1946
    %v2222 = vunpack.c.l.s8.bf16 %v1947
    %v2223 = vunpack.c.l.s8.bf16 %v1948
    %v2224 = vunpack.c.l.s8.bf16 %v1949
    %v2225 = vunpack.c.l.s8.bf16 %v1950
    %v2226 = vunpack.c.l.s8.bf16 %v1951
    %v2227 = vunpack.c.l.s8.bf16 %v1952
    %v2228 = vunpack.c.l.s8.bf16 %v1953
    %v2229 = vunpack.c.l.s8.bf16 %v1954
    %v2230 = vunpack.c.l.s8.bf16 %v1955
    %v2231 = vunpack.c.l.s8.bf16 %v1956
    %v2232 = vunpack.c.l.s8.bf16 %v1957
    %v2233 = vunpack.c.l.s8.bf16 %v1958
    %v2234 = vunpack.c.l.s8.bf16 %v1959
    %v2235 = vunpack.c.l.s8.bf16 %v1960
    %v2236 = vunpack.c.l.s8.bf16 %v1961
    %v2237 = vunpack.c.l.s8.bf16 %v1962
    %v2238 = vunpack.c.l.s8.bf16 %v1963
    %v2239 = vunpack.c.l.s8.bf16 %v1964
    %v2240 = vunpack.c.l.s8.bf16 %v1965
    %v2241 = vunpack.c.l.s8.bf16 %v1966
    %v2242 = vunpack.c.l.s8.bf16 %v1967
    %v2243 = vunpack.c.l.s8.bf16 %v1968
    %v2244 = vunpack.c.l.s8.bf16 %v1969
    %v2245 = vunpack.c.l.s8.bf16 %v1970
    %v2246 = vunpack.c.h.s8.bf16 %v1946
    %v2247 = vunpack.c.h.s8.bf16 %v1947
    %v2248 = vunpack.c.h.s8.bf16 %v1948
    %v2249 = vunpack.c.h.s8.bf16 %v1949
    %v2250 = vunpack.c.h.s8.bf16 %v1950
    %v2251 = vunpack.c.h.s8.bf16 %v1951
    %v2252 = vunpack.c.h.s8.bf16 %v1952
    %v2253 = vunpack.c.h.s8.bf16 %v1953
    %v2254 = vunpack.c.h.s8.bf16 %v1954
    %v2255 = vunpack.c.h.s8.bf16 %v1955
    %v2256 = vunpack.c.h.s8.bf16 %v1956
    %v2257 = vunpack.c.h.s8.bf16 %v1957
    %v2258 = vunpack.c.h.s8.bf16 %v1958
    %v2259 = vunpack.c.h.s8.bf16 %v1959
    %v2260 = vunpack.c.h.s8.bf16 %v1960
    %v2261 = vunpack.c.h.s8.bf16 %v1961
    %v2262 = vunpack.c.h.s8.bf16 %v1962
    %v2263 = vunpack.c.h.s8.bf16 %v1963
    %v2264 = vunpack.c.h.s8.bf16 %v1964
    %v2265 = vunpack.c.h.s8.bf16 %v1965
    %v2266 = vunpack.c.h.s8.bf16 %v1966
    %v2267 = vunpack.c.h.s8.bf16 %v1967
    %v2268 = vunpack.c.h.s8.bf16 %v1968
    %v2269 = vunpack.c.h.s8.bf16 %v1969
    %v2270 = vunpack.c.h.s8.bf16 %v1970
    %v2271 = vunpack.c.l.s8.bf16 %v1971
    %v2272 = vunpack.c.l.s8.bf16 %v1972
    %v2273 = vunpack.c.l.s8.bf16 %v1973
    %v2274 = vunpack.c.l.s8.bf16 %v1974
    %v2275 = vunpack.c.l.s8.bf16 %v1975
    %v2276 = vunpack.c.l.s8.bf16 %v1976
    %v2277 = vunpack.c.l.s8.bf16 %v1977
    %v2278 = vunpack.c.l.s8.bf16 %v1978
    %v2279 = vunpack.c.l.s8.bf16 %v1979
    %v2280 = vunpack.c.l.s8.bf16 %v1980
    %v2281 = vunpack.c.l.s8.bf16 %v1981
    %v2282 = vunpack.c.l.s8.bf16 %v1982
    %v2283 = vunpack.c.l.s8.bf16 %v1983
    %v2284 = vunpack.c.l.s8.bf16 %v1984
    %v2285 = vunpack.c.l.s8.bf16 %v1985
    %v2286 = vunpack.c.l.s8.bf16 %v1986
    %v2287 = vunpack.c.l.s8.bf16 %v1987
    %v2288 = vunpack.c.l.s8.bf16 %v1988
    %v2289 = vunpack.c.l.s8.bf16 %v1989
    %v2290 = vunpack.c.l.s8.bf16 %v1990
    %v2291 = vunpack.c.l.s8.bf16 %v1991
    %v2292 = vunpack.c.l.s8.bf16 %v1992
    %v2293 = vunpack.c.l.s8.bf16 %v1993
    %v2294 = vunpack.c.l.s8.bf16 %v1994
    %v2295 = vunpack.c.l.s8.bf16 %v1995
    %v2296 = vunpack.c.h.s8.bf16 %v1971
    %v2297 = vunpack.c.h.s8.bf16 %v1972
    %v2298 = vunpack.c.h.s8.bf16 %v1973
    %v2299 = vunpack.c.h.s8.bf16 %v1974
    %v2300 = vunpack.c.h.s8.bf16 %v1975
    %v2301 = vunpack.c.h.s8.bf16 %v1976
    %v2302 = vunpack.c.h.s8.bf16 %v1977
    %v2303 = vunpack.c.h.s8.bf16 %v1978
    %v2304 = vunpack.c.h.s8.bf16 %v1979
    %v2305 = vunpack.c.h.s8.bf16 %v1980
    %v2306 = vunpack.c.h.s8.bf16 %v1981
    %v2307 = vunpack.c.h.s8.bf16 %v1982
    %v2308 = vunpack.c.h.s8.bf16 %v1983
    %v2309 = vunpack.c.h.s8.bf16 %v1984
    %v2310 = vunpack.c.h.s8.bf16 %v1985
    %v2311 = vunpack.c.h.s8.bf16 %v1986
    %v2312 = vunpack.c.h.s8.bf16 %v1987
    %v2313 = vunpack.c.h.s8.bf16 %v1988
    %v2314 = vunpack.c.h.s8.bf16 %v1989
    %v2315 = vunpack.c.h.s8.bf16 %v1990
    %v2316 = vunpack.c.h.s8.bf16 %v1991
    %v2317 = vunpack.c.h.s8.bf16 %v1992
    %v2318 = vunpack.c.h.s8.bf16 %v1993
    %v2319 = vunpack.c.h.s8.bf16 %v1994
    %v2320 = vunpack.c.h.s8.bf16 %v1995
    %v2321 = vunpack.c.l.s8.bf16 %v1996
    %v2322 = vunpack.c.l.s8.bf16 %v1997
    %v2323 = vunpack.c.l.s8.bf16 %v1998
    %v2324 = vunpack.c.l.s8.bf16 %v1999
    %v2325 = vunpack.c.l.s8.bf16 %v2000
    %v2326 = vunpack.c.l.s8.bf16 %v2001
    %v2327 = vunpack.c.l.s8.bf16 %v2002
    %v2328 = vunpack.c.l.s8.bf16 %v2003
    %v2329 = vunpack.c.l.s8.bf16 %v2004
    %v2330 = vunpack.c.l.s8.bf16 %v2005
    %v2331 = vunpack.c.l.s8.bf16 %v2006
    %v2332 = vunpack.c.l.s8.bf16 %v2007
    %v2333 = vunpack.c.l.s8.bf16 %v2008
    %v2334 = vunpack.c.l.s8.bf16 %v2009
    %v2335 = vunpack.c.l.s8.bf16 %v2010
    %v2336 = vunpack.c.l.s8.bf16 %v2011
    %v2337 = vunpack.c.l.s8.bf16 %v2012
    %v2338 = vunpack.c.l.s8.bf16 %v2013
    %v2339 = vunpack.c.l.s8.bf16 %v2014
    %v2340 = vunpack.c.l.s8.bf16 %v2015
    %v2341 = vunpack.c.l.s8.bf16 %v2016
    %v2342 = vunpack.c.l.s8.bf16 %v2017
    %v2343 = vunpack.c.l.s8.bf16 %v2018
    %v2344 = vunpack.c.l.s8.bf16 %v2019
    %v2345 = vunpack.c.l.s8.bf16 %v2020
    %v2346 = vunpack.c.h.s8.bf16 %v1996
    %v2347 = vunpack.c.h.s8.bf16 %v1997
    %v2348 = vunpack.c.h.s8.bf16 %v1998
    %v2349 = vunpack.c.h.s8.bf16 %v1999
    %v2350 = vunpack.c.h.s8.bf16 %v2000
    %v2351 = vunpack.c.h.s8.bf16 %v2001
    %v2352 = vunpack.c.h.s8.bf16 %v2002
    %v2353 = vunpack.c.h.s8.bf16 %v2003
    %v2354 = vunpack.c.h.s8.bf16 %v2004
    %v2355 = vunpack.c.h.s8.bf16 %v2005
    %v2356 = vunpack.c.h.s8.bf16 %v2006
    %v2357 = vunpack.c.h.s8.bf16 %v2007
    %v2358 = vunpack.c.h.s8.bf16 %v2008
    %v2359 = vunpack.c.h.s8.bf16 %v2009
    %v2360 = vunpack.c.h.s8.bf16 %v2010
    %v2361 = vunpack.c.h.s8.bf16 %v2011
    %v2362 = vunpack.c.h.s8.bf16 %v2012
    %v2363 = vunpack.c.h.s8.bf16 %v2013
    %v2364 = vunpack.c.h.s8.bf16 %v2014
    %v2365 = vunpack.c.h.s8.bf16 %v2015
    %v2366 = vunpack.c.h.s8.bf16 %v2016
    %v2367 = vunpack.c.h.s8.bf16 %v2017
    %v2368 = vunpack.c.h.s8.bf16 %v2018
    %v2369 = vunpack.c.h.s8.bf16 %v2019
    %v2370 = vunpack.c.h.s8.bf16 %v2020
    %v2371 = vunpack.c.l.s8.bf16 %v2021
    %v2372 = vunpack.c.l.s8.bf16 %v2022
    %v2373 = vunpack.c.l.s8.bf16 %v2023
    %v2374 = vunpack.c.l.s8.bf16 %v2024
    %v2375 = vunpack.c.l.s8.bf16 %v2025
    %v2376 = vunpack.c.l.s8.bf16 %v2026
    %v2377 = vunpack.c.l.s8.bf16 %v2027
    %v2378 = vunpack.c.l.s8.bf16 %v2028
    %v2379 = vunpack.c.l.s8.bf16 %v2029
    %v2380 = vunpack.c.l.s8.bf16 %v2030
    %v2381 = vunpack.c.l.s8.bf16 %v2031
    %v2382 = vunpack.c.l.s8.bf16 %v2032
    %v2383 = vunpack.c.l.s8.bf16 %v2033
    %v2384 = vunpack.c.l.s8.bf16 %v2034
    %v2385 = vunpack.c.l.s8.bf16 %v2035
    %v2386 = vunpack.c.l.s8.bf16 %v2036
    %v2387 = vunpack.c.l.s8.bf16 %v2037
    %v2388 = vunpack.c.l.s8.bf16 %v2038
    %v2389 = vunpack.c.l.s8.bf16 %v2039
    %v2390 = vunpack.c.l.s8.bf16 %v2040
    %v2391 = vunpack.c.l.s8.bf16 %v2041
    %v2392 = vunpack.c.l.s8.bf16 %v2042
    %v2393 = vunpack.c.l.s8.bf16 %v2043
    %v2394 = vunpack.c.l.s8.bf16 %v2044
    %v2395 = vunpack.c.l.s8.bf16 %v2045
    %v2396 = vunpack.c.h.s8.bf16 %v2021
    %v2397 = vunpack.c.h.s8.bf16 %v2022
    %v2398 = vunpack.c.h.s8.bf16 %v2023
    %v2399 = vunpack.c.h.s8.bf16 %v2024
    %v2400 = vunpack.c.h.s8.bf16 %v2025
    %v2401 = vunpack.c.h.s8.bf16 %v2026
    %v2402 = vunpack.c.h.s8.bf16 %v2027
    %v2403 = vunpack.c.h.s8.bf16 %v2028
    %v2404 = vunpack.c.h.s8.bf16 %v2029
    %v2405 = vunpack.c.h.s8.bf16 %v2030
    %v2406 = vunpack.c.h.s8.bf16 %v2031
    %v2407 = vunpack.c.h.s8.bf16 %v2032
    %v2408 = vunpack.c.h.s8.bf16 %v2033
    %v2409 = vunpack.c.h.s8.bf16 %v2034
    %v2410 = vunpack.c.h.s8.bf16 %v2035
    %v2411 = vunpack.c.h.s8.bf16 %v2036
    %v2412 = vunpack.c.h.s8.bf16 %v2037
    %v2413 = vunpack.c.h.s8.bf16 %v2038
    %v2414 = vunpack.c.h.s8.bf16 %v2039
    %v2415 = vunpack.c.h.s8.bf16 %v2040
    %v2416 = vunpack.c.h.s8.bf16 %v2041
    %v2417 = vunpack.c.h.s8.bf16 %v2042
    %v2418 = vunpack.c.h.s8.bf16 %v2043
    %v2419 = vunpack.c.h.s8.bf16 %v2044
    %v2420 = vunpack.c.h.s8.bf16 %v2045
    %v2421 = vunpack.c.l.s8.bf16 %v2046
    %v2422 = vunpack.c.l.s8.bf16 %v2047
    %v2423 = vunpack.c.l.s8.bf16 %v2048
    %v2424 = vunpack.c.l.s8.bf16 %v2049
    %v2425 = vunpack.c.l.s8.bf16 %v2050
    %v2426 = vunpack.c.l.s8.bf16 %v2051
    %v2427 = vunpack.c.l.s8.bf16 %v2052
    %v2428 = vunpack.c.l.s8.bf16 %v2053
    %v2429 = vunpack.c.l.s8.bf16 %v2054
    %v2430 = vunpack.c.l.s8.bf16 %v2055
    %v2431 = vunpack.c.l.s8.bf16 %v2056
    %v2432 = vunpack.c.l.s8.bf16 %v2057
    %v2433 = vunpack.c.l.s8.bf16 %v2058
    %v2434 = vunpack.c.l.s8.bf16 %v2059
    %v2435 = vunpack.c.l.s8.bf16 %v2060
    %v2436 = vunpack.c.l.s8.bf16 %v2061
    %v2437 = vunpack.c.l.s8.bf16 %v2062
    %v2438 = vunpack.c.l.s8.bf16 %v2063
    %v2439 = vunpack.c.l.s8.bf16 %v2064
    %v2440 = vunpack.c.l.s8.bf16 %v2065
    %v2441 = vunpack.c.l.s8.bf16 %v2066
    %v2442 = vunpack.c.l.s8.bf16 %v2067
    %v2443 = vunpack.c.l.s8.bf16 %v2068
    %v2444 = vunpack.c.l.s8.bf16 %v2069
    %v2445 = vunpack.c.l.s8.bf16 %v2070
    %v2446 = vunpack.c.h.s8.bf16 %v2046
    %v2447 = vunpack.c.h.s8.bf16 %v2047
    %v2448 = vunpack.c.h.s8.bf16 %v2048
    %v2449 = vunpack.c.h.s8.bf16 %v2049
    %v2450 = vunpack.c.h.s8.bf16 %v2050
    %v2451 = vunpack.c.h.s8.bf16 %v2051
    %v2452 = vunpack.c.h.s8.bf16 %v2052
    %v2453 = vunpack.c.h.s8.bf16 %v2053
    %v2454 = vunpack.c.h.s8.bf16 %v2054
    %v2455 = vunpack.c.h.s8.bf16 %v2055
    %v2456 = vunpack.c.h.s8.bf16 %v2056
    %v2457 = vunpack.c.h.s8.bf16 %v2057
    %v2458 = vunpack.c.h.s8.bf16 %v2058
    %v2459 = vunpack.c.h.s8.bf16 %v2059
    %v2460 = vunpack.c.h.s8.bf16 %v2060
    %v2461 = vunpack.c.h.s8.bf16 %v2061
    %v2462 = vunpack.c.h.s8.bf16 %v2062
    %v2463 = vunpack.c.h.s8.bf16 %v2063
    %v2464 = vunpack.c.h.s8.bf16 %v2064
    %v2465 = vunpack.c.h.s8.bf16 %v2065
    %v2466 = vunpack.c.h.s8.bf16 %v2066
    %v2467 = vunpack.c.h.s8.bf16 %v2067
    %v2468 = vunpack.c.h.s8.bf16 %v2068
    %v2469 = vunpack.c.h.s8.bf16 %v2069
    %v2470 = vunpack.c.h.s8.bf16 %v2070
    %2471 = vmatprep.subr.bf16.mxu0 %v2247
    %2472 = vmatpush1.bf16.msra.mxu0 %v2246
    %2473 = vmatprep.subr.bf16.mxu0 %v2222
    %2474 = vmatpush1.bf16.msra.mxu0 %v2221
    %2475 = vmatprep.subr.bf16.mxu0 %v2197
    %2476 = vmatpush1.bf16.msra.mxu0 %v2196
    %2477 = vmatprep.subr.bf16.mxu0 %v2172
    %2478 = vmatpush1.bf16.msra.mxu0 %v2171
    %2479 = vmatprep.subr.bf16.mxu0 %v2147
    %2480 = vmatpush1.bf16.msra.mxu0 %v2146
    %2481 = vmatprep.subr.bf16.mxu0 %v2122
    %2482 = vmatpush1.bf16.msra.mxu0 %v2121
    %2483 = vmatprep.subr.bf16.mxu0 %v2097
    %2484 = vmatpush1.bf16.msra.mxu0 %v2096
    %2485 = vmatprep.subr.bf16.mxu0 %v2072
    %2486 = vmatpush1.bf16.msra.mxu0 %v2071
    %2487 = vmatprep.subr.bf16.mxu0 %v2447
    %2488 = vmatpush2.bf16.msra.mxu0 %v2446
    %2489 = vmatprep.subr.bf16.mxu0 %v2422
    %2490 = vmatpush2.bf16.msra.mxu0 %v2421
    %2491 = vmatprep.subr.bf16.mxu0 %v2397
    %2492 = vmatpush2.bf16.msra.mxu0 %v2396
    %2493 = vmatprep.subr.bf16.mxu0 %v2372
    %2494 = vmatpush2.bf16.msra.mxu0 %v2371
    %2495 = vmatprep.subr.bf16.mxu0 %v2347
    %2496 = vmatpush2.bf16.msra.mxu0 %v2346
    %2497 = vmatprep.subr.bf16.mxu0 %v2322
    %2498 = vmatpush2.bf16.msra.mxu0 %v2321
    %2499 = vmatprep.subr.bf16.mxu0 %v2297
    %2500 = vmatpush2.bf16.msra.mxu0 %v2296
    %2501 = vmatprep.subr.bf16.mxu0 %v2272
    %2502 = vmatpush2.bf16.msra.mxu0 %v2271
    %2503 = vmatprep.mubr.bf16.mxu0 %v1870
    %2504 = vmatmul.mubr.bf16.gmra.mxu0 %v1869
    %v2505 = vpop.f32.mrf.mxu0
    %v2506 = vadd.f32 0.0, %v2505
    %v2507 = vpop.f32.mrf.mxu0
    %v2508 = vadd.f32 0.0, %v2507
    %v2509 = vpop.f32.mrf.mxu0
    %v2510 = vpop.f32.mrf.mxu0
    %2511 = vdwg.mxu0
    %2512 = vmatprep.subr.bf16.mxu0 %v2249
    %2513 = vmatpush1.bf16.msra.mxu0 %v2248
    %2514 = vmatprep.subr.bf16.mxu0 %v2224
    %2515 = vmatpush1.bf16.msra.mxu0 %v2223
    %2516 = vmatprep.subr.bf16.mxu0 %v2199
    %2517 = vmatpush1.bf16.msra.mxu0 %v2198
    %2518 = vmatprep.subr.bf16.mxu0 %v2174
    %2519 = vmatpush1.bf16.msra.mxu0 %v2173
    %2520 = vmatprep.subr.bf16.mxu0 %v2149
    %2521 = vmatpush1.bf16.msra.mxu0 %v2148
    %2522 = vmatprep.subr.bf16.mxu0 %v2124
    %2523 = vmatpush1.bf16.msra.mxu0 %v2123
    %2524 = vmatprep.subr.bf16.mxu0 %v2099
    %2525 = vmatpush1.bf16.msra.mxu0 %v2098
    %2526 = vmatprep.subr.bf16.mxu0 %v2074
    %2527 = vmatpush1.bf16.msra.mxu0 %v2073
    %2528 = vmatprep.subr.bf16.mxu0 %v2449
    %2529 = vmatpush2.bf16.msra.mxu0 %v2448
    %2530 = vmatprep.subr.bf16.mxu0 %v2424
    %2531 = vmatpush2.bf16.msra.mxu0 %v2423
    %2532 = vmatprep.subr.bf16.mxu0 %v2399
    %2533 = vmatpush2.bf16.msra.mxu0 %v2398
    %2534 = vmatprep.subr.bf16.mxu0 %v2374
    %2535 = vmatpush2.bf16.msra.mxu0 %v2373
    %2536 = vmatprep.subr.bf16.mxu0 %v2349
    %2537 = vmatpush2.bf16.msra.mxu0 %v2348
    %2538 = vmatprep.subr.bf16.mxu0 %v2324
    %2539 = vmatpush2.bf16.msra.mxu0 %v2323
    %2540 = vmatprep.subr.bf16.mxu0 %v2299
    %2541 = vmatpush2.bf16.msra.mxu0 %v2298
    %2542 = vmatprep.subr.bf16.mxu0 %v2274
    %2543 = vmatpush2.bf16.msra.mxu0 %v2273
    %2544 = vmatprep.mubr.bf16.mxu0 %v1870
    %2545 = vmatmul.mubr.bf16.gmra.mxu0 %v1869
    %v2546 = vpop.f32.mrf.mxu0
    %v2547 = vadd.f32 0.0, %v2546
    %v2548 = vpop.f32.mrf.mxu0
    %v2549 = vadd.f32 0.0, %v2548
    %v2550 = vpop.f32.mrf.mxu0
    %v2551 = vpop.f32.mrf.mxu0
    %2552 = vdwg.mxu0
    %2553 = vmatprep.subr.bf16.mxu0 %v2251
    %2554 = vmatpush1.bf16.msra.mxu0 %v2250
    %2555 = vmatprep.subr.bf16.mxu0 %v2226
    %2556 = vmatpush1.bf16.msra.mxu0 %v2225
    %2557 = vmatprep.subr.bf16.mxu0 %v2201
    %2558 = vmatpush1.bf16.msra.mxu0 %v2200
    %2559 = vmatprep.subr.bf16.mxu0 %v2176
    %2560 = vmatpush1.bf16.msra.mxu0 %v2175
    %2561 = vmatprep.subr.bf16.mxu0 %v2151
    %2562 = vmatpush1.bf16.msra.mxu0 %v2150
    %2563 = vmatprep.subr.bf16.mxu0 %v2126
    %2564 = vmatpush1.bf16.msra.mxu0 %v2125
    %2565 = vmatprep.subr.bf16.mxu0 %v2101
    %2566 = vmatpush1.bf16.msra.mxu0 %v2100
    %2567 = vmatprep.subr.bf16.mxu0 %v2076
    %2568 = vmatpush1.bf16.msra.mxu0 %v2075
    %2569 = vmatprep.subr.bf16.mxu0 %v2451
    %2570 = vmatpush2.bf16.msra.mxu0 %v2450
    %2571 = vmatprep.subr.bf16.mxu0 %v2426
    %2572 = vmatpush2.bf16.msra.mxu0 %v2425
    %2573 = vmatprep.subr.bf16.mxu0 %v2401
    %2574 = vmatpush2.bf16.msra.mxu0 %v2400
    %2575 = vmatprep.subr.bf16.mxu0 %v2376
    %2576 = vmatpush2.bf16.msra.mxu0 %v2375
    %2577 = vmatprep.subr.bf16.mxu0 %v2351
    %2578 = vmatpush2.bf16.msra.mxu0 %v2350
    %2579 = vmatprep.subr.bf16.mxu0 %v2326
    %2580 = vmatpush2.bf16.msra.mxu0 %v2325
    %2581 = vmatprep.subr.bf16.mxu0 %v2301
    %2582 = vmatpush2.bf16.msra.mxu0 %v2300
    %2583 = vmatprep.subr.bf16.mxu0 %v2276
    %2584 = vmatpush2.bf16.msra.mxu0 %v2275
    %2585 = vmatprep.mubr.bf16.mxu0 %v1870
    %2586 = vmatmul.mubr.bf16.gmra.mxu0 %v1869
    %v2587 = vpop.f32.mrf.mxu0
    %v2588 = vadd.f32 0.0, %v2587
    %v2589 = vpop.f32.mrf.mxu0
    %v2590 = vadd.f32 0.0, %v2589
    %v2591 = vpop.f32.mrf.mxu0
    %v2592 = vpop.f32.mrf.mxu0
    %2593 = vdwg.mxu0
    %2594 = vmatprep.subr.bf16.mxu0 %v2253
    %2595 = vmatpush1.bf16.msra.mxu0 %v2252
    %2596 = vmatprep.subr.bf16.mxu0 %v2228
    %2597 = vmatpush1.bf16.msra.mxu0 %v2227
    %2598 = vmatprep.subr.bf16.mxu0 %v2203
    %2599 = vmatpush1.bf16.msra.mxu0 %v2202
    %2600 = vmatprep.subr.bf16.mxu0 %v2178
    %2601 = vmatpush1.bf16.msra.mxu0 %v2177
    %2602 = vmatprep.subr.bf16.mxu0 %v2153
    %2603 = vmatpush1.bf16.msra.mxu0 %v2152
    %2604 = vmatprep.subr.bf16.mxu0 %v2128
    %2605 = vmatpush1.bf16.msra.mxu0 %v2127
    %2606 = vmatprep.subr.bf16.mxu0 %v2103
    %2607 = vmatpush1.bf16.msra.mxu0 %v2102
    %2608 = vmatprep.subr.bf16.mxu0 %v2078
    %2609 = vmatpush1.bf16.msra.mxu0 %v2077
    %2610 = vmatprep.subr.bf16.mxu0 %v2453
    %2611 = vmatpush2.bf16.msra.mxu0 %v2452
    %2612 = vmatprep.subr.bf16.mxu0 %v2428
    %2613 = vmatpush2.bf16.msra.mxu0 %v2427
    %2614 = vmatprep.subr.bf16.mxu0 %v2403
    %2615 = vmatpush2.bf16.msra.mxu0 %v2402
    %2616 = vmatprep.subr.bf16.mxu0 %v2378
    %2617 = vmatpush2.bf16.msra.mxu0 %v2377
    %2618 = vmatprep.subr.bf16.mxu0 %v2353
    %2619 = vmatpush2.bf16.msra.mxu0 %v2352
    %2620 = vmatprep.subr.bf16.mxu0 %v2328
    %2621 = vmatpush2.bf16.msra.mxu0 %v2327
    %2622 = vmatprep.subr.bf16.mxu0 %v2303
    %2623 = vmatpush2.bf16.msra.mxu0 %v2302
    %2624 = vmatprep.subr.bf16.mxu0 %v2278
    %2625 = vmatpush2.bf16.msra.mxu0 %v2277
    %2626 = vmatprep.mubr.bf16.mxu0 %v1870
    %2627 = vmatmul.mubr.bf16.gmra.mxu0 %v1869
    %v2628 = vpop.f32.mrf.mxu0
    %v2629 = vadd.f32 0.0, %v2628
    %v2630 = vpop.f32.mrf.mxu0
    %v2631 = vadd.f32 0.0, %v2630
    %v2632 = vpop.f32.mrf.mxu0
    %v2633 = vpop.f32.mrf.mxu0
    %2634 = vdwg.mxu0
    %2635 = vmatprep.subr.bf16.mxu0 %v2255
    %2636 = vmatpush1.bf16.msra.mxu0 %v2254
    %2637 = vmatprep.subr.bf16.mxu0 %v2230
    %2638 = vmatpush1.bf16.msra.mxu0 %v2229
    %2639 = vmatprep.subr.bf16.mxu0 %v2205
    %2640 = vmatpush1.bf16.msra.mxu0 %v2204
    %2641 = vmatprep.subr.bf16.mxu0 %v2180
    %2642 = vmatpush1.bf16.msra.mxu0 %v2179
    %2643 = vmatprep.subr.bf16.mxu0 %v2155
    %2644 = vmatpush1.bf16.msra.mxu0 %v2154
    %2645 = vmatprep.subr.bf16.mxu0 %v2130
    %2646 = vmatpush1.bf16.msra.mxu0 %v2129
    %2647 = vmatprep.subr.bf16.mxu0 %v2105
    %2648 = vmatpush1.bf16.msra.mxu0 %v2104
    %2649 = vmatprep.subr.bf16.mxu0 %v2080
    %2650 = vmatpush1.bf16.msra.mxu0 %v2079
    %2651 = vmatprep.subr.bf16.mxu0 %v2455
    %2652 = vmatpush2.bf16.msra.mxu0 %v2454
    %2653 = vmatprep.subr.bf16.mxu0 %v2430
    %2654 = vmatpush2.bf16.msra.mxu0 %v2429
    %2655 = vmatprep.subr.bf16.mxu0 %v2405
    %2656 = vmatpush2.bf16.msra.mxu0 %v2404
    %2657 = vmatprep.subr.bf16.mxu0 %v2380
    %2658 = vmatpush2.bf16.msra.mxu0 %v2379
    %2659 = vmatprep.subr.bf16.mxu0 %v2355
    %2660 = vmatpush2.bf16.msra.mxu0 %v2354
    %2661 = vmatprep.subr.bf16.mxu0 %v2330
    %2662 = vmatpush2.bf16.msra.mxu0 %v2329
    %2663 = vmatprep.subr.bf16.mxu0 %v2305
    %2664 = vmatpush2.bf16.msra.mxu0 %v2304
    %2665 = vmatprep.subr.bf16.mxu0 %v2280
    %2666 = vmatpush2.bf16.msra.mxu0 %v2279
    %2667 = vmatprep.mubr.bf16.mxu0 %v1870
    %2668 = vmatmul.mubr.bf16.gmra.mxu0 %v1869
    %v2669 = vpop.f32.mrf.mxu0
    %v2670 = vadd.f32 0.0, %v2669
    %v2671 = vpop.f32.mrf.mxu0
    %v2672 = vadd.f32 0.0, %v2671
    %v2673 = vpop.f32.mrf.mxu0
    %v2674 = vpop.f32.mrf.mxu0
    %2675 = vdwg.mxu0
    %2676 = vmatprep.subr.bf16.mxu0 %v2257
    %2677 = vmatpush1.bf16.msra.mxu0 %v2256
    %2678 = vmatprep.subr.bf16.mxu0 %v2232
    %2679 = vmatpush1.bf16.msra.mxu0 %v2231
    %2680 = vmatprep.subr.bf16.mxu0 %v2207
    %2681 = vmatpush1.bf16.msra.mxu0 %v2206
    %2682 = vmatprep.subr.bf16.mxu0 %v2182
    %2683 = vmatpush1.bf16.msra.mxu0 %v2181
    %2684 = vmatprep.subr.bf16.mxu0 %v2157
    %2685 = vmatpush1.bf16.msra.mxu0 %v2156
    %2686 = vmatprep.subr.bf16.mxu0 %v2132
    %2687 = vmatpush1.bf16.msra.mxu0 %v2131
    %2688 = vmatprep.subr.bf16.mxu0 %v2107
    %2689 = vmatpush1.bf16.msra.mxu0 %v2106
    %2690 = vmatprep.subr.bf16.mxu0 %v2082
    %2691 = vmatpush1.bf16.msra.mxu0 %v2081
    %2692 = vmatprep.subr.bf16.mxu0 %v2457
    %2693 = vmatpush2.bf16.msra.mxu0 %v2456
    %2694 = vmatprep.subr.bf16.mxu0 %v2432
    %2695 = vmatpush2.bf16.msra.mxu0 %v2431
    %2696 = vmatprep.subr.bf16.mxu0 %v2407
    %2697 = vmatpush2.bf16.msra.mxu0 %v2406
    %2698 = vmatprep.subr.bf16.mxu0 %v2382
    %2699 = vmatpush2.bf16.msra.mxu0 %v2381
    %2700 = vmatprep.subr.bf16.mxu0 %v2357
    %2701 = vmatpush2.bf16.msra.mxu0 %v2356
    %2702 = vmatprep.subr.bf16.mxu0 %v2332
    %2703 = vmatpush2.bf16.msra.mxu0 %v2331
    %2704 = vmatprep.subr.bf16.mxu0 %v2307
    %2705 = vmatpush2.bf16.msra.mxu0 %v2306
    %2706 = vmatprep.subr.bf16.mxu0 %v2282
    %2707 = vmatpush2.bf16.msra.mxu0 %v2281
    %2708 = vmatprep.mubr.bf16.mxu0 %v1870
    %2709 = vmatmul.mubr.bf16.gmra.mxu0 %v1869
    %v2710 = vpop.f32.mrf.mxu0
    %v2711 = vadd.f32 0.0, %v2710
    %v2712 = vpop.f32.mrf.mxu0
    %v2713 = vadd.f32 0.0, %v2712
    %v2714 = vpop.f32.mrf.mxu0
    %v2715 = vpop.f32.mrf.mxu0
    %2716 = vdwg.mxu0
    %2717 = vmatprep.subr.bf16.mxu0 %v2259
    %2718 = vmatpush1.bf16.msra.mxu0 %v2258
    %2719 = vmatprep.subr.bf16.mxu0 %v2234
    %2720 = vmatpush1.bf16.msra.mxu0 %v2233
    %2721 = vmatprep.subr.bf16.mxu0 %v2209
    %2722 = vmatpush1.bf16.msra.mxu0 %v2208
    %2723 = vmatprep.subr.bf16.mxu0 %v2184
    %2724 = vmatpush1.bf16.msra.mxu0 %v2183
    %2725 = vmatprep.subr.bf16.mxu0 %v2159
    %2726 = vmatpush1.bf16.msra.mxu0 %v2158
    %2727 = vmatprep.subr.bf16.mxu0 %v2134
    %2728 = vmatpush1.bf16.msra.mxu0 %v2133
    %2729 = vmatprep.subr.bf16.mxu0 %v2109
    %2730 = vmatpush1.bf16.msra.mxu0 %v2108
    %2731 = vmatprep.subr.bf16.mxu0 %v2084
    %2732 = vmatpush1.bf16.msra.mxu0 %v2083
    %2733 = vmatprep.subr.bf16.mxu0 %v2459
    %2734 = vmatpush2.bf16.msra.mxu0 %v2458
    %2735 = vmatprep.subr.bf16.mxu0 %v2434
    %2736 = vmatpush2.bf16.msra.mxu0 %v2433
    %2737 = vmatprep.subr.bf16.mxu0 %v2409
    %2738 = vmatpush2.bf16.msra.mxu0 %v2408
    %2739 = vmatprep.subr.bf16.mxu0 %v2384
    %2740 = vmatpush2.bf16.msra.mxu0 %v2383
    %2741 = vmatprep.subr.bf16.mxu0 %v2359
    %2742 = vmatpush2.bf16.msra.mxu0 %v2358
    %2743 = vmatprep.subr.bf16.mxu0 %v2334
    %2744 = vmatpush2.bf16.msra.mxu0 %v2333
    %2745 = vmatprep.subr.bf16.mxu0 %v2309
    %2746 = vmatpush2.bf16.msra.mxu0 %v2308
    %2747 = vmatprep.subr.bf16.mxu0 %v2284
    %2748 = vmatpush2.bf16.msra.mxu0 %v2283
    %2749 = vmatprep.mubr.bf16.mxu0 %v1870
    %2750 = vmatmul.mubr.bf16.gmra.mxu0 %v1869
    %v2751 = vpop.f32.mrf.mxu0
    %v2752 = vadd.f32 0.0, %v2751
    %v2753 = vpop.f32.mrf.mxu0
    %v2754 = vadd.f32 0.0, %v2753
    %v2755 = vpop.f32.mrf.mxu0
    %v2756 = vpop.f32.mrf.mxu0
    %2757 = vdwg.mxu0
    %2758 = vmatprep.subr.bf16.mxu0 %v2261
    %2759 = vmatpush1.bf16.msra.mxu0 %v2260
    %2760 = vmatprep.subr.bf16.mxu0 %v2236
    %2761 = vmatpush1.bf16.msra.mxu0 %v2235
    %2762 = vmatprep.subr.bf16.mxu0 %v2211
    %2763 = vmatpush1.bf16.msra.mxu0 %v2210
    %2764 = vmatprep.subr.bf16.mxu0 %v2186
    %2765 = vmatpush1.bf16.msra.mxu0 %v2185
    %2766 = vmatprep.subr.bf16.mxu0 %v2161
    %2767 = vmatpush1.bf16.msra.mxu0 %v2160
    %2768 = vmatprep.subr.bf16.mxu0 %v2136
    %2769 = vmatpush1.bf16.msra.mxu0 %v2135
    %2770 = vmatprep.subr.bf16.mxu0 %v2111
    %2771 = vmatpush1.bf16.msra.mxu0 %v2110
    %2772 = vmatprep.subr.bf16.mxu0 %v2086
    %2773 = vmatpush1.bf16.msra.mxu0 %v2085
    %2774 = vmatprep.subr.bf16.mxu0 %v2461
    %2775 = vmatpush2.bf16.msra.mxu0 %v2460
    %2776 = vmatprep.subr.bf16.mxu0 %v2436
    %2777 = vmatpush2.bf16.msra.mxu0 %v2435
    %2778 = vmatprep.subr.bf16.mxu0 %v2411
    %2779 = vmatpush2.bf16.msra.mxu0 %v2410
    %2780 = vmatprep.subr.bf16.mxu0 %v2386
    %2781 = vmatpush2.bf16.msra.mxu0 %v2385
    %2782 = vmatprep.subr.bf16.mxu0 %v2361
    %2783 = vmatpush2.bf16.msra.mxu0 %v2360
    %2784 = vmatprep.subr.bf16.mxu0 %v2336
    %2785 = vmatpush2.bf16.msra.mxu0 %v2335
    %2786 = vmatprep.subr.bf16.mxu0 %v2311
    %2787 = vmatpush2.bf16.msra.mxu0 %v2310
    %2788 = vmatprep.subr.bf16.mxu0 %v2286
    %2789 = vmatpush2.bf16.msra.mxu0 %v2285
    %2790 = vmatprep.mubr.bf16.mxu0 %v1870
    %2791 = vmatmul.mubr.bf16.gmra.mxu0 %v1869
    %v2792 = vpop.f32.mrf.mxu0
    %v2793 = vadd.f32 0.0, %v2792
    %v2794 = vpop.f32.mrf.mxu0
    %v2795 = vadd.f32 0.0, %v2794
    %v2796 = vpop.f32.mrf.mxu0
    %v2797 = vpop.f32.mrf.mxu0
    %2798 = vdwg.mxu0
    %2799 = vmatprep.subr.bf16.mxu0 %v2263
    %2800 = vmatpush1.bf16.msra.mxu0 %v2262
    %2801 = vmatprep.subr.bf16.mxu0 %v2238
    %2802 = vmatpush1.bf16.msra.mxu0 %v2237
    %2803 = vmatprep.subr.bf16.mxu0 %v2213
    %2804 = vmatpush1.bf16.msra.mxu0 %v2212
    %2805 = vmatprep.subr.bf16.mxu0 %v2188
    %2806 = vmatpush1.bf16.msra.mxu0 %v2187
    %2807 = vmatprep.subr.bf16.mxu0 %v2163
    %2808 = vmatpush1.bf16.msra.mxu0 %v2162
    %2809 = vmatprep.subr.bf16.mxu0 %v2138
    %2810 = vmatpush1.bf16.msra.mxu0 %v2137
    %2811 = vmatprep.subr.bf16.mxu0 %v2113
    %2812 = vmatpush1.bf16.msra.mxu0 %v2112
    %2813 = vmatprep.subr.bf16.mxu0 %v2088
    %2814 = vmatpush1.bf16.msra.mxu0 %v2087
    %2815 = vmatprep.subr.bf16.mxu0 %v2463
    %2816 = vmatpush2.bf16.msra.mxu0 %v2462
    %2817 = vmatprep.subr.bf16.mxu0 %v2438
    %2818 = vmatpush2.bf16.msra.mxu0 %v2437
    %2819 = vmatprep.subr.bf16.mxu0 %v2413
    %2820 = vmatpush2.bf16.msra.mxu0 %v2412
    %2821 = vmatprep.subr.bf16.mxu0 %v2388
    %2822 = vmatpush2.bf16.msra.mxu0 %v2387
    %2823 = vmatprep.subr.bf16.mxu0 %v2363
    %2824 = vmatpush2.bf16.msra.mxu0 %v2362
    %2825 = vmatprep.subr.bf16.mxu0 %v2338
    %2826 = vmatpush2.bf16.msra.mxu0 %v2337
    %2827 = vmatprep.subr.bf16.mxu0 %v2313
    %2828 = vmatpush2.bf16.msra.mxu0 %v2312
    %2829 = vmatprep.subr.bf16.mxu0 %v2288
    %2830 = vmatpush2.bf16.msra.mxu0 %v2287
    %2831 = vmatprep.mubr.bf16.mxu0 %v1870
    %2832 = vmatmul.mubr.bf16.gmra.mxu0 %v1869
    %v2833 = vpop.f32.mrf.mxu0
    %v2834 = vadd.f32 0.0, %v2833
    %v2835 = vpop.f32.mrf.mxu0
    %v2836 = vadd.f32 0.0, %v2835
    %v2837 = vpop.f32.mrf.mxu0
    %v2838 = vpop.f32.mrf.mxu0
    %2839 = vdwg.mxu0
    %2840 = vmatprep.subr.bf16.mxu0 %v2265
    %2841 = vmatpush1.bf16.msra.mxu0 %v2264
    %2842 = vmatprep.subr.bf16.mxu0 %v2240
    %2843 = vmatpush1.bf16.msra.mxu0 %v2239
    %2844 = vmatprep.subr.bf16.mxu0 %v2215
    %2845 = vmatpush1.bf16.msra.mxu0 %v2214
    %2846 = vmatprep.subr.bf16.mxu0 %v2190
    %2847 = vmatpush1.bf16.msra.mxu0 %v2189
    %2848 = vmatprep.subr.bf16.mxu0 %v2165
    %2849 = vmatpush1.bf16.msra.mxu0 %v2164
    %2850 = vmatprep.subr.bf16.mxu0 %v2140
    %2851 = vmatpush1.bf16.msra.mxu0 %v2139
    %2852 = vmatprep.subr.bf16.mxu0 %v2115
    %2853 = vmatpush1.bf16.msra.mxu0 %v2114
    %2854 = vmatprep.subr.bf16.mxu0 %v2090
    %2855 = vmatpush1.bf16.msra.mxu0 %v2089
    %2856 = vmatprep.subr.bf16.mxu0 %v2465
    %2857 = vmatpush2.bf16.msra.mxu0 %v2464
    %2858 = vmatprep.subr.bf16.mxu0 %v2440
    %2859 = vmatpush2.bf16.msra.mxu0 %v2439
    %2860 = vmatprep.subr.bf16.mxu0 %v2415
    %2861 = vmatpush2.bf16.msra.mxu0 %v2414
    %2862 = vmatprep.subr.bf16.mxu0 %v2390
    %2863 = vmatpush2.bf16.msra.mxu0 %v2389
    %2864 = vmatprep.subr.bf16.mxu0 %v2365
    %2865 = vmatpush2.bf16.msra.mxu0 %v2364
    %2866 = vmatprep.subr.bf16.mxu0 %v2340
    %2867 = vmatpush2.bf16.msra.mxu0 %v2339
    %2868 = vmatprep.subr.bf16.mxu0 %v2315
    %2869 = vmatpush2.bf16.msra.mxu0 %v2314
    %2870 = vmatprep.subr.bf16.mxu0 %v2290
    %2871 = vmatpush2.bf16.msra.mxu0 %v2289
    %2872 = vmatprep.mubr.bf16.mxu0 %v1870
    %2873 = vmatmul.mubr.bf16.gmra.mxu0 %v1869
    %v2874 = vpop.f32.mrf.mxu0
    %v2875 = vadd.f32 0.0, %v2874
    %v2876 = vpop.f32.mrf.mxu0
    %v2877 = vadd.f32 0.0, %v2876
    %v2878 = vpop.f32.mrf.mxu0
    %v2879 = vpop.f32.mrf.mxu0
    %2880 = vdwg.mxu0
    %2881 = vmatprep.subr.bf16.mxu0 %v2267
    %2882 = vmatpush1.bf16.msra.mxu0 %v2266
    %2883 = vmatprep.subr.bf16.mxu0 %v2242
    %2884 = vmatpush1.bf16.msra.mxu0 %v2241
    %2885 = vmatprep.subr.bf16.mxu0 %v2217
    %2886 = vmatpush1.bf16.msra.mxu0 %v2216
    %2887 = vmatprep.subr.bf16.mxu0 %v2192
    %2888 = vmatpush1.bf16.msra.mxu0 %v2191
    %2889 = vmatprep.subr.bf16.mxu0 %v2167
    %2890 = vmatpush1.bf16.msra.mxu0 %v2166
    %2891 = vmatprep.subr.bf16.mxu0 %v2142
    %2892 = vmatpush1.bf16.msra.mxu0 %v2141
    %2893 = vmatprep.subr.bf16.mxu0 %v2117
    %2894 = vmatpush1.bf16.msra.mxu0 %v2116
    %2895 = vmatprep.subr.bf16.mxu0 %v2092
    %2896 = vmatpush1.bf16.msra.mxu0 %v2091
    %2897 = vmatprep.subr.bf16.mxu0 %v2467
    %2898 = vmatpush2.bf16.msra.mxu0 %v2466
    %2899 = vmatprep.subr.bf16.mxu0 %v2442
    %2900 = vmatpush2.bf16.msra.mxu0 %v2441
    %2901 = vmatprep.subr.bf16.mxu0 %v2417
    %2902 = vmatpush2.bf16.msra.mxu0 %v2416
    %2903 = vmatprep.subr.bf16.mxu0 %v2392
    %2904 = vmatpush2.bf16.msra.mxu0 %v2391
    %2905 = vmatprep.subr.bf16.mxu0 %v2367
    %2906 = vmatpush2.bf16.msra.mxu0 %v2366
    %2907 = vmatprep.subr.bf16.mxu0 %v2342
    %2908 = vmatpush2.bf16.msra.mxu0 %v2341
    %2909 = vmatprep.subr.bf16.mxu0 %v2317
    %2910 = vmatpush2.bf16.msra.mxu0 %v2316
    %2911 = vmatprep.subr.bf16.mxu0 %v2292
    %2912 = vmatpush2.bf16.msra.mxu0 %v2291
    %2913 = vmatprep.mubr.bf16.mxu0 %v1870
    %2914 = vmatmul.mubr.bf16.gmra.mxu0 %v1869
    %v2915 = vpop.f32.mrf.mxu0
    %v2916 = vadd.f32 0.0, %v2915
    %v2917 = vpop.f32.mrf.mxu0
    %v2918 = vadd.f32 0.0, %v2917
    %v2919 = vpop.f32.mrf.mxu0
    %v2920 = vpop.f32.mrf.mxu0
    %2921 = vdwg.mxu0
    %2922 = vmatprep.subr.bf16.mxu0 %v2269
    %2923 = vmatpush1.bf16.msra.mxu0 %v2268
    %2924 = vmatprep.subr.bf16.mxu0 %v2244
    %2925 = vmatpush1.bf16.msra.mxu0 %v2243
    %2926 = vmatprep.subr.bf16.mxu0 %v2219
    %2927 = vmatpush1.bf16.msra.mxu0 %v2218
    %2928 = vmatprep.subr.bf16.mxu0 %v2194
    %2929 = vmatpush1.bf16.msra.mxu0 %v2193
    %2930 = vmatprep.subr.bf16.mxu0 %v2169
    %2931 = vmatpush1.bf16.msra.mxu0 %v2168
    %2932 = vmatprep.subr.bf16.mxu0 %v2144
    %2933 = vmatpush1.bf16.msra.mxu0 %v2143
    %2934 = vmatprep.subr.bf16.mxu0 %v2119
    %2935 = vmatpush1.bf16.msra.mxu0 %v2118
    %2936 = vmatprep.subr.bf16.mxu0 %v2094
    %2937 = vmatpush1.bf16.msra.mxu0 %v2093
    %2938 = vmatprep.subr.bf16.mxu0 %v2469
    %2939 = vmatpush2.bf16.msra.mxu0 %v2468
    %2940 = vmatprep.subr.bf16.mxu0 %v2444
    %2941 = vmatpush2.bf16.msra.mxu0 %v2443
    %2942 = vmatprep.subr.bf16.mxu0 %v2419
    %2943 = vmatpush2.bf16.msra.mxu0 %v2418
    %2944 = vmatprep.subr.bf16.mxu0 %v2394
    %2945 = vmatpush2.bf16.msra.mxu0 %v2393
    %2946 = vmatprep.subr.bf16.mxu0 %v2369
    %2947 = vmatpush2.bf16.msra.mxu0 %v2368
    %2948 = vmatprep.subr.bf16.mxu0 %v2344
    %2949 = vmatpush2.bf16.msra.mxu0 %v2343
    %2950 = vmatprep.subr.bf16.mxu0 %v2319
    %2951 = vmatpush2.bf16.msra.mxu0 %v2318
    %2952 = vmatprep.subr.bf16.mxu0 %v2294
    %2953 = vmatpush2.bf16.msra.mxu0 %v2293
    %2954 = vmatprep.mubr.bf16.mxu0 %v1870
    %2955 = vmatmul.mubr.bf16.gmra.mxu0 %v1869
    %v2956 = vpop.f32.mrf.mxu0
    %v2957 = vadd.f32 0.0, %v2956
    %v2958 = vpop.f32.mrf.mxu0
    %v2959 = vadd.f32 0.0, %v2958
    %v2960 = vpop.f32.mrf.mxu0
    %v2961 = vpop.f32.mrf.mxu0
    %2962 = vdwg.mxu0
    %2963 = vmatprep.subr.bf16.mxu0 0
    %2964 = vmatpush1.bf16.msra.mxu0 %v2270
    %2965 = vmatprep.subr.bf16.mxu0 0
    %2966 = vmatpush1.bf16.msra.mxu0 %v2245
    %2967 = vmatprep.subr.bf16.mxu0 0
    %2968 = vmatpush1.bf16.msra.mxu0 %v2220
    %2969 = vmatprep.subr.bf16.mxu0 0
    %2970 = vmatpush1.bf16.msra.mxu0 %v2195
    %2971 = vmatprep.subr.bf16.mxu0 0
    %2972 = vmatpush1.bf16.msra.mxu0 %v2170
    %2973 = vmatprep.subr.bf16.mxu0 0
    %2974 = vmatpush1.bf16.msra.mxu0 %v2145
    %2975 = vmatprep.subr.bf16.mxu0 0
    %2976 = vmatpush1.bf16.msra.mxu0 %v2120
    %2977 = vmatprep.subr.bf16.mxu0 0
    %2978 = vmatpush1.bf16.msra.mxu0 %v2095
    %2979 = vmatprep.subr.bf16.mxu0 0
    %2980 = vmatpush2.bf16.msra.mxu0 %v2470
    %2981 = vmatprep.subr.bf16.mxu0 0
    %2982 = vmatpush2.bf16.msra.mxu0 %v2445
    %2983 = vmatprep.subr.bf16.mxu0 0
    %2984 = vmatpush2.bf16.msra.mxu0 %v2420
    %2985 = vmatprep.subr.bf16.mxu0 0
    %2986 = vmatpush2.bf16.msra.mxu0 %v2395
    %2987 = vmatprep.subr.bf16.mxu0 0
    %2988 = vmatpush2.bf16.msra.mxu0 %v2370
    %2989 = vmatprep.subr.bf16.mxu0 0
    %2990 = vmatpush2.bf16.msra.mxu0 %v2345
    %2991 = vmatprep.subr.bf16.mxu0 0
    %2992 = vmatpush2.bf16.msra.mxu0 %v2320
    %2993 = vmatprep.subr.bf16.mxu0 0
    %2994 = vmatpush2.bf16.msra.mxu0 %v2295
    %2995 = vmatprep.mubr.bf16.mxu0 %v1870
    %2996 = vmatmul.mubr.bf16.gmra.mxu0 %v1869
    %v2997 = vpop.f32.mrf.mxu0
    %v2998 = vadd.f32 0.0, %v2997
    %v2999 = vpop.f32.mrf.mxu0
    %v3000 = vpop.f32.mrf.mxu0
    %v3001 = vpop.f32.mrf.mxu0
    %3002 = vdwg.mxu0
    %v3003 = vld [vmem:[%s13] sm:$0xff]
    %v3004 = vld [vmem:[%s13 + $0x8] sm:$0xff]
    %v3005 = vld [vmem:[%s13 + $0x10] sm:$0xff]
    %v3006 = vld [vmem:[%s13 + $0x18] sm:$0x1]
    %v3011 = vlaneseq
    %v3012 = vshrl.u32 %v3011, 7
    %v3013 = vsub.s32 0, %v3012
    %v3014 = vrot.slane %v3003, %v3013
    %v3015 = vlaneseq
    %v3016 = vshrl.u32 %v3015, 7
    %v3017 = vsub.s32 1, %v3016
    %v3018 = vrot.slane %v3003, %v3017
    %v3019 = vlaneseq
    %v3020 = vshrl.u32 %v3019, 7
    %v3021 = vsub.s32 2, %v3020
    %v3022 = vrot.slane %v3003, %v3021
    %v3023 = vlaneseq
    %v3024 = vshrl.u32 %v3023, 7
    %v3025 = vsub.s32 3, %v3024
    %v3026 = vrot.slane %v3003, %v3025
    %v3027 = vlaneseq
    %v3028 = vshrl.u32 %v3027, 7
    %v3029 = vsub.s32 4, %v3028
    %v3030 = vrot.slane %v3003, %v3029
    %v3031 = vlaneseq
    %v3032 = vshrl.u32 %v3031, 7
    %v3033 = vsub.s32 5, %v3032
    %v3034 = vrot.slane %v3003, %v3033
    %v3035 = vlaneseq
    %v3036 = vshrl.u32 %v3035, 7
    %v3037 = vsub.s32 6, %v3036
    %v3038 = vrot.slane %v3003, %v3037
    %v3039 = vlaneseq
    %v3040 = vshrl.u32 %v3039, 7
    %v3041 = vsub.s32 7, %v3040
    %v3042 = vrot.slane %v3003, %v3041
    %v3043 = vlaneseq
    %v3044 = vshrl.u32 %v3043, 7
    %v3045 = vsub.s32 0, %v3044
    %v3046 = vrot.slane %v3004, %v3045
    %v3047 = vlaneseq
    %v3048 = vshrl.u32 %v3047, 7
    %v3049 = vsub.s32 1, %v3048
    %v3050 = vrot.slane %v3004, %v3049
    %v3051 = vlaneseq
    %v3052 = vshrl.u32 %v3051, 7
    %v3053 = vsub.s32 2, %v3052
    %v3054 = vrot.slane %v3004, %v3053
    %v3055 = vlaneseq
    %v3056 = vshrl.u32 %v3055, 7
    %v3057 = vsub.s32 3, %v3056
    %v3058 = vrot.slane %v3004, %v3057
    %v3059 = vlaneseq
    %v3060 = vshrl.u32 %v3059, 7
    %v3061 = vsub.s32 4, %v3060
    %v3062 = vrot.slane %v3004, %v3061
    %v3063 = vlaneseq
    %v3064 = vshrl.u32 %v3063, 7
    %v3065 = vsub.s32 5, %v3064
    %v3066 = vrot.slane %v3004, %v3065
    %v3067 = vlaneseq
    %v3068 = vshrl.u32 %v3067, 7
    %v3069 = vsub.s32 6, %v3068
    %v3070 = vrot.slane %v3004, %v3069
    %v3071 = vlaneseq
    %v3072 = vshrl.u32 %v3071, 7
    %v3073 = vsub.s32 7, %v3072
    %v3074 = vrot.slane %v3004, %v3073
    %v3075 = vlaneseq
    %v3076 = vshrl.u32 %v3075, 7
    %v3077 = vsub.s32 0, %v3076
    %v3078 = vrot.slane %v3005, %v3077
    %v3079 = vlaneseq
    %v3080 = vshrl.u32 %v3079, 7
    %v3081 = vsub.s32 1, %v3080
    %v3082 = vrot.slane %v3005, %v3081
    %v3083 = vlaneseq
    %v3084 = vshrl.u32 %v3083, 7
    %v3085 = vsub.s32 2, %v3084
    %v3086 = vrot.slane %v3005, %v3085
    %v3087 = vlaneseq
    %v3088 = vshrl.u32 %v3087, 7
    %v3089 = vsub.s32 3, %v3088
    %v3090 = vrot.slane %v3005, %v3089
    %v3091 = vlaneseq
    %v3092 = vshrl.u32 %v3091, 7
    %v3093 = vsub.s32 4, %v3092
    %v3094 = vrot.slane %v3005, %v3093
    %v3095 = vlaneseq
    %v3096 = vshrl.u32 %v3095, 7
    %v3097 = vsub.s32 5, %v3096
    %v3098 = vrot.slane %v3005, %v3097
    %v3099 = vlaneseq
    %v3100 = vshrl.u32 %v3099, 7
    %v3101 = vsub.s32 6, %v3100
    %v3102 = vrot.slane %v3005, %v3101
    %v3103 = vlaneseq
    %v3104 = vshrl.u32 %v3103, 7
    %v3105 = vsub.s32 7, %v3104
    %v3106 = vrot.slane %v3005, %v3105
    %v3107 = vlaneseq
    %v3108 = vshrl.u32 %v3107, 7
    %v3109 = vsub.s32 0, %v3108
    %v3110 = vrot.slane %v3006, %v3109
    %v3136 = vmul.f32 %v2506, %v3014
    %v3137 = vmul.f32 %v2508, %v3018
    %v3138 = vmul.f32 %v2547, %v3022
    %v3139 = vmul.f32 %v2549, %v3026
    %v3140 = vmul.f32 %v2588, %v3030
    %v3141 = vmul.f32 %v2590, %v3034
    %v3142 = vmul.f32 %v2629, %v3038
    %v3143 = vmul.f32 %v2631, %v3042
    %v3144 = vmul.f32 %v2670, %v3046
    %v3145 = vmul.f32 %v2672, %v3050
    %v3146 = vmul.f32 %v2711, %v3054
    %v3147 = vmul.f32 %v2713, %v3058
    %v3148 = vmul.f32 %v2752, %v3062
    %v3149 = vmul.f32 %v2754, %v3066
    %v3150 = vmul.f32 %v2793, %v3070
    %v3151 = vmul.f32 %v2795, %v3074
    %v3152 = vmul.f32 %v2834, %v3078
    %v3153 = vmul.f32 %v2836, %v3082
    %v3154 = vmul.f32 %v2875, %v3086
    %v3155 = vmul.f32 %v2877, %v3090
    %v3156 = vmul.f32 %v2916, %v3094
    %v3157 = vmul.f32 %v2918, %v3098
    %v3158 = vmul.f32 %v2957, %v3102
    %v3159 = vmul.f32 %v2959, %v3106
    %v3160 = vmul.f32 %v2998, %v3110
    %v3161 = vld [vmem:[%s14] sm:$0xff]
    %v3162 = vld [vmem:[%s14 + $0x8] sm:$0xff]
    %v3163 = vld [vmem:[%s14 + $0x10] sm:$0xff]
    %v3164 = vld [vmem:[%s14 + $0x18] sm:$0x1]
    %v3169 = vlaneseq
    %v3170 = vshrl.u32 %v3169, 7
    %v3171 = vsub.s32 0, %v3170
    %v3172 = vrot.slane %v3161, %v3171
    %v3173 = vlaneseq
    %v3174 = vshrl.u32 %v3173, 7
    %v3175 = vsub.s32 1, %v3174
    %v3176 = vrot.slane %v3161, %v3175
    %v3177 = vlaneseq
    %v3178 = vshrl.u32 %v3177, 7
    %v3179 = vsub.s32 2, %v3178
    %v3180 = vrot.slane %v3161, %v3179
    %v3181 = vlaneseq
    %v3182 = vshrl.u32 %v3181, 7
    %v3183 = vsub.s32 3, %v3182
    %v3184 = vrot.slane %v3161, %v3183
    %v3185 = vlaneseq
    %v3186 = vshrl.u32 %v3185, 7
    %v3187 = vsub.s32 4, %v3186
    %v3188 = vrot.slane %v3161, %v3187
    %v3189 = vlaneseq
    %v3190 = vshrl.u32 %v3189, 7
    %v3191 = vsub.s32 5, %v3190
    %v3192 = vrot.slane %v3161, %v3191
    %v3193 = vlaneseq
    %v3194 = vshrl.u32 %v3193, 7
    %v3195 = vsub.s32 6, %v3194
    %v3196 = vrot.slane %v3161, %v3195
    %v3197 = vlaneseq
    %v3198 = vshrl.u32 %v3197, 7
    %v3199 = vsub.s32 7, %v3198
    %v3200 = vrot.slane %v3161, %v3199
    %v3201 = vlaneseq
    %v3202 = vshrl.u32 %v3201, 7
    %v3203 = vsub.s32 0, %v3202
    %v3204 = vrot.slane %v3162, %v3203
    %v3205 = vlaneseq
    %v3206 = vshrl.u32 %v3205, 7
    %v3207 = vsub.s32 1, %v3206
    %v3208 = vrot.slane %v3162, %v3207
    %v3209 = vlaneseq
    %v3210 = vshrl.u32 %v3209, 7
    %v3211 = vsub.s32 2, %v3210
    %v3212 = vrot.slane %v3162, %v3211
    %v3213 = vlaneseq
    %v3214 = vshrl.u32 %v3213, 7
    %v3215 = vsub.s32 3, %v3214
    %v3216 = vrot.slane %v3162, %v3215
    %v3217 = vlaneseq
    %v3218 = vshrl.u32 %v3217, 7
    %v3219 = vsub.s32 4, %v3218
    %v3220 = vrot.slane %v3162, %v3219
    %v3221 = vlaneseq
    %v3222 = vshrl.u32 %v3221, 7
    %v3223 = vsub.s32 5, %v3222
    %v3224 = vrot.slane %v3162, %v3223
    %v3225 = vlaneseq
    %v3226 = vshrl.u32 %v3225, 7
    %v3227 = vsub.s32 6, %v3226
    %v3228 = vrot.slane %v3162, %v3227
    %v3229 = vlaneseq
    %v3230 = vshrl.u32 %v3229, 7
    %v3231 = vsub.s32 7, %v3230
    %v3232 = vrot.slane %v3162, %v3231
    %v3233 = vlaneseq
    %v3234 = vshrl.u32 %v3233, 7
    %v3235 = vsub.s32 0, %v3234
    %v3236 = vrot.slane %v3163, %v3235
    %v3237 = vlaneseq
    %v3238 = vshrl.u32 %v3237, 7
    %v3239 = vsub.s32 1, %v3238
    %v3240 = vrot.slane %v3163, %v3239
    %v3241 = vlaneseq
    %v3242 = vshrl.u32 %v3241, 7
    %v3243 = vsub.s32 2, %v3242
    %v3244 = vrot.slane %v3163, %v3243
    %v3245 = vlaneseq
    %v3246 = vshrl.u32 %v3245, 7
    %v3247 = vsub.s32 3, %v3246
    %v3248 = vrot.slane %v3163, %v3247
    %v3249 = vlaneseq
    %v3250 = vshrl.u32 %v3249, 7
    %v3251 = vsub.s32 4, %v3250
    %v3252 = vrot.slane %v3163, %v3251
    %v3253 = vlaneseq
    %v3254 = vshrl.u32 %v3253, 7
    %v3255 = vsub.s32 5, %v3254
    %v3256 = vrot.slane %v3163, %v3255
    %v3257 = vlaneseq
    %v3258 = vshrl.u32 %v3257, 7
    %v3259 = vsub.s32 6, %v3258
    %v3260 = vrot.slane %v3163, %v3259
    %v3261 = vlaneseq
    %v3262 = vshrl.u32 %v3261, 7
    %v3263 = vsub.s32 7, %v3262
    %v3264 = vrot.slane %v3163, %v3263
    %v3265 = vlaneseq
    %v3266 = vshrl.u32 %v3265, 7
    %v3267 = vsub.s32 0, %v3266
    %v3268 = vrot.slane %v3164, %v3267
    %v3294 = vadd.f32 %v3136, %v3172
    %v3295 = vadd.f32 %v3137, %v3176
    %v3296 = vadd.f32 %v3138, %v3180
    %v3297 = vadd.f32 %v3139, %v3184
    %v3298 = vadd.f32 %v3140, %v3188
    %v3299 = vadd.f32 %v3141, %v3192
    %v3300 = vadd.f32 %v3142, %v3196
    %v3301 = vadd.f32 %v3143, %v3200
    %v3302 = vadd.f32 %v3144, %v3204
    %v3303 = vadd.f32 %v3145, %v3208
    %v3304 = vadd.f32 %v3146, %v3212
    %v3305 = vadd.f32 %v3147, %v3216
    %v3306 = vadd.f32 %v3148, %v3220
    %v3307 = vadd.f32 %v3149, %v3224
    %v3308 = vadd.f32 %v3150, %v3228
    %v3309 = vadd.f32 %v3151, %v3232
    %v3310 = vadd.f32 %v3152, %v3236
    %v3311 = vadd.f32 %v3153, %v3240
    %v3312 = vadd.f32 %v3154, %v3244
    %v3313 = vadd.f32 %v3155, %v3248
    %v3314 = vadd.f32 %v3156, %v3252
    %v3315 = vadd.f32 %v3157, %v3256
    %v3316 = vadd.f32 %v3158, %v3260
    %v3317 = vadd.f32 %v3159, %v3264
    %v3318 = vadd.f32 %v3160, %v3268
    %v3319 = vxor.u32 %v3294, 2147483648
    %v3320 = vxor.u32 %v3295, 2147483648
    %v3321 = vxor.u32 %v3296, 2147483648
    %v3322 = vxor.u32 %v3297, 2147483648
    %v3323 = vxor.u32 %v3298, 2147483648
    %v3324 = vxor.u32 %v3299, 2147483648
    %v3325 = vxor.u32 %v3300, 2147483648
    %v3326 = vxor.u32 %v3301, 2147483648
    %v3327 = vxor.u32 %v3302, 2147483648
    %v3328 = vxor.u32 %v3303, 2147483648
    %v3329 = vxor.u32 %v3304, 2147483648
    %v3330 = vxor.u32 %v3305, 2147483648
    %v3331 = vxor.u32 %v3306, 2147483648
    %v3332 = vxor.u32 %v3307, 2147483648
    %v3333 = vxor.u32 %v3308, 2147483648
    %v3334 = vxor.u32 %v3309, 2147483648
    %v3335 = vxor.u32 %v3310, 2147483648
    %v3336 = vxor.u32 %v3311, 2147483648
    %v3337 = vxor.u32 %v3312, 2147483648
    %v3338 = vxor.u32 %v3313, 2147483648
    %v3339 = vxor.u32 %v3314, 2147483648
    %v3340 = vxor.u32 %v3315, 2147483648
    %v3341 = vxor.u32 %v3316, 2147483648
    %v3342 = vxor.u32 %v3317, 2147483648
    %v3343 = vxor.u32 %v3318, 2147483648
    %v3344 = vmul.f32 %v3319, 1.442695
    %v3345 = vpow.pop %v3344
    %v3346 = vmul.f32 %v3320, 1.442695
    %v3347 = vpow.pop %v3346
    %v3348 = vmul.f32 %v3321, 1.442695
    %v3349 = vpow.pop %v3348
    %v3350 = vmul.f32 %v3322, 1.442695
    %v3351 = vpow.pop %v3350
    %v3352 = vmul.f32 %v3323, 1.442695
    %v3353 = vpow.pop %v3352
    %v3354 = vmul.f32 %v3324, 1.442695
    %v3355 = vpow.pop %v3354
    %v3356 = vmul.f32 %v3325, 1.442695
    %v3357 = vpow.pop %v3356
    %v3358 = vmul.f32 %v3326, 1.442695
    %v3359 = vpow.pop %v3358
    %v3360 = vmul.f32 %v3327, 1.442695
    %v3361 = vpow.pop %v3360
    %v3362 = vmul.f32 %v3328, 1.442695
    %v3363 = vpow.pop %v3362
    %v3364 = vmul.f32 %v3329, 1.442695
    %v3365 = vpow.pop %v3364
    %v3366 = vmul.f32 %v3330, 1.442695
    %v3367 = vpow.pop %v3366
    %v3368 = vmul.f32 %v3331, 1.442695
    %v3369 = vpow.pop %v3368
    %v3370 = vmul.f32 %v3332, 1.442695
    %v3371 = vpow.pop %v3370
    %v3372 = vmul.f32 %v3333, 1.442695
    %v3373 = vpow.pop %v3372
    %v3374 = vmul.f32 %v3334, 1.442695
    %v3375 = vpow.pop %v3374
    %v3376 = vmul.f32 %v3335, 1.442695
    %v3377 = vpow.pop %v3376
    %v3378 = vmul.f32 %v3336, 1.442695
    %v3379 = vpow.pop %v3378
    %v3380 = vmul.f32 %v3337, 1.442695
    %v3381 = vpow.pop %v3380
    %v3382 = vmul.f32 %v3338, 1.442695
    %v3383 = vpow.pop %v3382
    %v3384 = vmul.f32 %v3339, 1.442695
    %v3385 = vpow.pop %v3384
    %v3386 = vmul.f32 %v3340, 1.442695
    %v3387 = vpow.pop %v3386
    %v3388 = vmul.f32 %v3341, 1.442695
    %v3389 = vpow.pop %v3388
    %v3390 = vmul.f32 %v3342, 1.442695
    %v3391 = vpow.pop %v3390
    %v3392 = vmul.f32 %v3343, 1.442695
    %v3393 = vpow.pop %v3392
    %v3394 = vadd.f32 %v3345, 1.0
    %v3395 = vadd.f32 %v3347, 1.0
    %v3396 = vadd.f32 %v3349, 1.0
    %v3397 = vadd.f32 %v3351, 1.0
    %v3398 = vadd.f32 %v3353, 1.0
    %v3399 = vadd.f32 %v3355, 1.0
    %v3400 = vadd.f32 %v3357, 1.0
    %v3401 = vadd.f32 %v3359, 1.0
    %v3402 = vadd.f32 %v3361, 1.0
    %v3403 = vadd.f32 %v3363, 1.0
    %v3404 = vadd.f32 %v3365, 1.0
    %v3405 = vadd.f32 %v3367, 1.0
    %v3406 = vadd.f32 %v3369, 1.0
    %v3407 = vadd.f32 %v3371, 1.0
    %v3408 = vadd.f32 %v3373, 1.0
    %v3409 = vadd.f32 %v3375, 1.0
    %v3410 = vadd.f32 %v3377, 1.0
    %v3411 = vadd.f32 %v3379, 1.0
    %v3412 = vadd.f32 %v3381, 1.0
    %v3413 = vadd.f32 %v3383, 1.0
    %v3414 = vadd.f32 %v3385, 1.0
    %v3415 = vadd.f32 %v3387, 1.0
    %v3416 = vadd.f32 %v3389, 1.0
    %v3417 = vadd.f32 %v3391, 1.0
    %v3418 = vadd.f32 %v3393, 1.0
    %v3419 = vrcp.pop %v3394
    %v3420 = vmul.f32 1.0, %v3419
    %v3421 = vrcp.pop %v3395
    %v3422 = vmul.f32 1.0, %v3421
    %v3423 = vrcp.pop %v3396
    %v3424 = vmul.f32 1.0, %v3423
    %v3425 = vrcp.pop %v3397
    %v3426 = vmul.f32 1.0, %v3425
    %v3427 = vrcp.pop %v3398
    %v3428 = vmul.f32 1.0, %v3427
    %v3429 = vrcp.pop %v3399
    %v3430 = vmul.f32 1.0, %v3429
    %v3431 = vrcp.pop %v3400
    %v3432 = vmul.f32 1.0, %v3431
    %v3433 = vrcp.pop %v3401
    %v3434 = vmul.f32 1.0, %v3433
    %v3435 = vrcp.pop %v3402
    %v3436 = vmul.f32 1.0, %v3435
    %v3437 = vrcp.pop %v3403
    %v3438 = vmul.f32 1.0, %v3437
    %v3439 = vrcp.pop %v3404
    %v3440 = vmul.f32 1.0, %v3439
    %v3441 = vrcp.pop %v3405
    %v3442 = vmul.f32 1.0, %v3441
    %v3443 = vrcp.pop %v3406
    %v3444 = vmul.f32 1.0, %v3443
    %v3445 = vrcp.pop %v3407
    %v3446 = vmul.f32 1.0, %v3445
    %v3447 = vrcp.pop %v3408
    %v3448 = vmul.f32 1.0, %v3447
    %v3449 = vrcp.pop %v3409
    %v3450 = vmul.f32 1.0, %v3449
    %v3451 = vrcp.pop %v3410
    %v3452 = vmul.f32 1.0, %v3451
    %v3453 = vrcp.pop %v3411
    %v3454 = vmul.f32 1.0, %v3453
    %v3455 = vrcp.pop %v3412
    %v3456 = vmul.f32 1.0, %v3455
    %v3457 = vrcp.pop %v3413
    %v3458 = vmul.f32 1.0, %v3457
    %v3459 = vrcp.pop %v3414
    %v3460 = vmul.f32 1.0, %v3459
    %v3461 = vrcp.pop %v3415
    %v3462 = vmul.f32 1.0, %v3461
    %v3463 = vrcp.pop %v3416
    %v3464 = vmul.f32 1.0, %v3463
    %v3465 = vrcp.pop %v3417
    %v3466 = vmul.f32 1.0, %v3465
    %v3467 = vrcp.pop %v3418
    %v3468 = vmul.f32 1.0, %v3467
    %v3469 = vpack.c.bf16 %v3420, %v3420
    %v3470 = vpack.c.bf16 %v3422, %v3422
    %v3471 = vpack.c.bf16 %v3424, %v3424
    %v3472 = vpack.c.bf16 %v3426, %v3426
    %v3473 = vpack.c.bf16 %v3428, %v3428
    %v3474 = vpack.c.bf16 %v3430, %v3430
    %v3475 = vpack.c.bf16 %v3432, %v3432
    %v3476 = vpack.c.bf16 %v3434, %v3434
    %v3477 = vpack.c.bf16 %v3436, %v3436
    %v3478 = vpack.c.bf16 %v3438, %v3438
    %v3479 = vpack.c.bf16 %v3440, %v3440
    %v3480 = vpack.c.bf16 %v3442, %v3442
    %v3481 = vpack.c.bf16 %v3444, %v3444
    %v3482 = vpack.c.bf16 %v3446, %v3446
    %v3483 = vpack.c.bf16 %v3448, %v3448
    %v3484 = vpack.c.bf16 %v3450, %v3450
    %v3485 = vpack.c.bf16 %v3452, %v3452
    %v3486 = vpack.c.bf16 %v3454, %v3454
    %v3487 = vpack.c.bf16 %v3456, %v3456
    %v3488 = vpack.c.bf16 %v3458, %v3458
    %v3489 = vpack.c.bf16 %v3460, %v3460
    %v3490 = vpack.c.bf16 %v3462, %v3462
    %v3491 = vpack.c.bf16 %v3464, %v3464
    %v3492 = vpack.c.bf16 %v3466, %v3466
    %v3493 = vpack.c.bf16 %v3468, %v3468
    %v3519 = vcombine.low %v3469, %v3470
    %v3520 = vcombine.low %v3471, %v3472
    %v3521 = vcombine.low %v3473, %v3474
    %v3522 = vcombine.low %v3475, %v3476
    %v3524 = vunpack.c.l.s4 1966171168
    %v3525 = vunpack.c.0.s8 %v3524
    %v3526 = vlaneseq
    %v3527 = vshrl.u32 %v3526, 7
    %v3528 = vsub.s32 %v3525, %v3527
    %v3529 = vrot.slane %v3519, %v3528
    %v3531 = vunpack.c.l.s4 1966171168
    %v3532 = vunpack.c.0.s8 %v3531
    %v3533 = vlaneseq
    %v3534 = vshrl.u32 %v3533, 7
    %v3535 = vsub.s32 %v3532, %v3534
    %v3536 = vrot.slane %v3520, %v3535
    %v3538 = vunpack.c.l.s4 1966171168
    %v3539 = vunpack.c.0.s8 %v3538
    %v3540 = vlaneseq
    %v3541 = vshrl.u32 %v3540, 7
    %v3542 = vsub.s32 %v3539, %v3541
    %v3543 = vrot.slane %v3521, %v3542
    %v3545 = vunpack.c.l.s4 1966171168
    %v3546 = vunpack.c.0.s8 %v3545
    %v3547 = vlaneseq
    %v3548 = vshrl.u32 %v3547, 7
    %v3549 = vsub.s32 %v3546, %v3548
    %v3550 = vrot.slane %v3522, %v3549
    %v3551 = vcombine.low %v3529, %v3536
    %v3552 = vcombine.low %v3543, %v3550
    %v3554 = vunpack.c.l.s4 1966171168
    %v3555 = vunpack.c.0.s8 %v3554
    %v3556 = vlaneseq
    %v3557 = vshrl.u32 %v3556, 7
    %v3558 = vsub.s32 %v3555, %v3557
    %v3559 = vrot.slane %v3551, %v3558
    %v3561 = vunpack.c.l.s4 1966171168
    %v3562 = vunpack.c.0.s8 %v3561
    %v3563 = vlaneseq
    %v3564 = vshrl.u32 %v3563, 7
    %v3565 = vsub.s32 %v3562, %v3564
    %v3566 = vrot.slane %v3552, %v3565
    %v3567 = vcombine.low %v3559, %v3566
    %v3568 = vcombine.low %v3477, %v3478
    %v3569 = vcombine.low %v3479, %v3480
    %v3570 = vcombine.low %v3481, %v3482
    %v3571 = vcombine.low %v3483, %v3484
    %v3573 = vunpack.c.l.s4 1966171168
    %v3574 = vunpack.c.0.s8 %v3573
    %v3575 = vlaneseq
    %v3576 = vshrl.u32 %v3575, 7
    %v3577 = vsub.s32 %v3574, %v3576
    %v3578 = vrot.slane %v3568, %v3577
    %v3580 = vunpack.c.l.s4 1966171168
    %v3581 = vunpack.c.0.s8 %v3580
    %v3582 = vlaneseq
    %v3583 = vshrl.u32 %v3582, 7
    %v3584 = vsub.s32 %v3581, %v3583
    %v3585 = vrot.slane %v3569, %v3584
    %v3587 = vunpack.c.l.s4 1966171168
    %v3588 = vunpack.c.0.s8 %v3587
    %v3589 = vlaneseq
    %v3590 = vshrl.u32 %v3589, 7
    %v3591 = vsub.s32 %v3588, %v3590
    %v3592 = vrot.slane %v3570, %v3591
    %v3594 = vunpack.c.l.s4 1966171168
    %v3595 = vunpack.c.0.s8 %v3594
    %v3596 = vlaneseq
    %v3597 = vshrl.u32 %v3596, 7
    %v3598 = vsub.s32 %v3595, %v3597
    %v3599 = vrot.slane %v3571, %v3598
    %v3600 = vcombine.low %v3578, %v3585
    %v3601 = vcombine.low %v3592, %v3599
    %v3603 = vunpack.c.l.s4 1966171168
    %v3604 = vunpack.c.0.s8 %v3603
    %v3605 = vlaneseq
    %v3606 = vshrl.u32 %v3605, 7
    %v3607 = vsub.s32 %v3604, %v3606
    %v3608 = vrot.slane %v3600, %v3607
    %v3610 = vunpack.c.l.s4 1966171168
    %v3611 = vunpack.c.0.s8 %v3610
    %v3612 = vlaneseq
    %v3613 = vshrl.u32 %v3612, 7
    %v3614 = vsub.s32 %v3611, %v3613
    %v3615 = vrot.slane %v3601, %v3614
    %v3616 = vcombine.low %v3608, %v3615
    %v3617 = vcombine.low %v3485, %v3486
    %v3618 = vcombine.low %v3487, %v3488
    %v3619 = vcombine.low %v3489, %v3490
    %v3620 = vcombine.low %v3491, %v3492
    %v3622 = vunpack.c.l.s4 1966171168
    %v3623 = vunpack.c.0.s8 %v3622
    %v3624 = vlaneseq
    %v3625 = vshrl.u32 %v3624, 7
    %v3626 = vsub.s32 %v3623, %v3625
    %v3627 = vrot.slane %v3617, %v3626
    %v3629 = vunpack.c.l.s4 1966171168
    %v3630 = vunpack.c.0.s8 %v3629
    %v3631 = vlaneseq
    %v3632 = vshrl.u32 %v3631, 7
    %v3633 = vsub.s32 %v3630, %v3632
    %v3634 = vrot.slane %v3618, %v3633
    %v3636 = vunpack.c.l.s4 1966171168
    %v3637 = vunpack.c.0.s8 %v3636
    %v3638 = vlaneseq
    %v3639 = vshrl.u32 %v3638, 7
    %v3640 = vsub.s32 %v3637, %v3639
    %v3641 = vrot.slane %v3619, %v3640
    %v3643 = vunpack.c.l.s4 1966171168
    %v3644 = vunpack.c.0.s8 %v3643
    %v3645 = vlaneseq
    %v3646 = vshrl.u32 %v3645, 7
    %v3647 = vsub.s32 %v3644, %v3646
    %v3648 = vrot.slane %v3620, %v3647
    %v3649 = vcombine.low %v3627, %v3634
    %v3650 = vcombine.low %v3641, %v3648
    %v3652 = vunpack.c.l.s4 1966171168
    %v3653 = vunpack.c.0.s8 %v3652
    %v3654 = vlaneseq
    %v3655 = vshrl.u32 %v3654, 7
    %v3656 = vsub.s32 %v3653, %v3655
    %v3657 = vrot.slane %v3649, %v3656
    %v3659 = vunpack.c.l.s4 1966171168
    %v3660 = vunpack.c.0.s8 %v3659
    %v3661 = vlaneseq
    %v3662 = vshrl.u32 %v3661, 7
    %v3663 = vsub.s32 %v3660, %v3662
    %v3664 = vrot.slane %v3650, %v3663
    %v3665 = vcombine.low %v3657, %v3664
    %v3667 = vunpack.c.l.s4 1966171168
    %v3668 = vunpack.c.0.s8 %v3667
    %v3669 = vlaneseq
    %v3670 = vshrl.u32 %v3669, 7
    %v3671 = vsub.s32 %v3668, %v3670
    %v3672 = vrot.slane %v3493, %v3671
    %v3674 = vunpack.c.l.s4 1966171168
    %v3675 = vunpack.c.0.s8 %v3674
    %v3676 = vlaneseq
    %v3677 = vshrl.u32 %v3676, 7
    %v3678 = vsub.s32 %v3675, %v3677
    %v3679 = vrot.slane %v3672, %v3678
    %3684 = vst [vmem:[#allocation7] sm:$0xff] %v3567
    %3685 = vst [vmem:[#allocation7 + $0x8] sm:$0xff] %v3616
    %3686 = vst [vmem:[#allocation7 + $0x10] sm:$0xff] %v3665
    %3687 = vst [vmem:[#allocation7 + $0x18] sm:$0x1] %v3679
    // Predicated region
    $region70: #{tpu_custom_call.1} parent=1 // pred_check
      _
    $region71: #{tpu_custom_call.1} parent=1 // pred_check_branch
      %3689 = sbr.rel (0) target = $region73
    $region72: #{tpu_custom_call.1} parent=1 // pred_region
      %s3691 = ssub.s32 400, 400
      %3692 = vsyncadd [#allocation4], %s3691
      %s3694 = sshll.u32 [#allocation7], 4
      %s3695 = int_to_ptr.vmem [resolvable:$true] %s3694
      %3697 = dma.vmem_to_hbm [thread:$0]  %s3695, 400, %s15, [#allocation4]
    $region73: #{tpu_custom_call.1} parent=1 // pred_fallthru
      _
    // Predicated region
    $region74: #{tpu_custom_call.1} parent=1 // pred_check
      _
    $region75: #{tpu_custom_call.1} parent=1 // pred_check_branch
      %3699 = sbr.rel (0) target = $region77
    $region76: #{tpu_custom_call.1} parent=1 // pred_region
      %3700 = dma.done [#allocation4], 400
    $region77: #{tpu_custom_call.1} parent=1 // pred_fallthru
      _
    %3701 = vsyncpa [#allocation3], 1
    %3702 = vsyncpa [#allocation6], 1
    %3703 = vsyncpa [#allocation4], 1

</llo_original>
